<compile_context>
chip_gen: v5e
topology: v5e:2x2
jax: 0.10.0
libtpu: 0.0.40
codegen_flags: <defaults>
</compile_context>

<pallas_src>
import functools

import numpy as np
import jax
import jax.numpy as jnp
from jax.experimental import pallas as pl
from jax.experimental.pallas import tpu as pltpu

VPAD, HPAD = 1, 2   # zero padding (rows, cols) baked into every stage buffer


# ------------------------------------------------------------------ parameters
def bn_fold(key, c, eps=1e-5):
    """Deterministic eval-mode BatchNorm -> per-channel (scale, shift)."""
    k1, k2, k3, k4 = jax.random.split(key, 4)
    gamma = jax.random.uniform(k1, (c,), minval=0.5, maxval=1.5)
    beta = 0.1 * jax.random.normal(k2, (c,))
    mean = 0.1 * jax.random.normal(k3, (c,))
    var = jax.random.uniform(k4, (c,), minval=0.5, maxval=1.5)
    scale = gamma / jnp.sqrt(var + eps)
    shift = beta - mean * scale
    return scale, shift


def make_stage_params(key, cin, cout, kh, kw):
    """One Block, RepVGG-folded host-side (exact linear algebra):
       Wst (kh*kw, cout, cin)      reparameterized 'same' conv (bf16 if cin>1)
       Bst (cout, 1)               its bias
       Wa  (9, cout, 1), Ba (cout, 1)  depthwise 3x3 act-conv (+ folded BN)."""
    ks = jax.random.split(key, 12)
    ph, pw = kh // 2, kw // 2
    # rbr_dense (conv kh x kw, no bias) + BN
    wd = 0.1 * jax.random.normal(ks[0], (cout, cin, kh, kw))
    sd, bd = bn_fold(ks[1], cout)
    Wsum = wd * sd[:, None, None, None]
    Bsum = bd
    # rbr_1x1 (+ rbr_identity when cin == cout), padded into the centre tap
    w1 = 0.1 * jax.random.normal(ks[2], (cout, cin))
    s1, b1 = bn_fold(ks[3], cout)
    W1 = w1 * s1[:, None]
    B1 = b1
    if cin == cout:
        si, bi = bn_fold(ks[4], cin)
        W1 = W1 + jnp.diag(si)
        B1 = B1 + bi
    Wsum = Wsum.at[:, :, ph, pw].add(W1)
    Bsum = Bsum + B1
    # compose with sub_1x1:  W2 = Ws @ Wsum (per tap),  B2 = Ws @ Bsum + bs
    ws = 0.1 * jax.random.normal(ks[5], (cout, cout))
    ss, bs = bn_fold(ks[6], cout)
    Ws = ws * ss[:, None]
    W2 = jnp.einsum('oi,icjk->ocjk', Ws, Wsum)
    B2 = Ws @ Bsum + bs
    # add cross_1x1 (+ cross_identity) into the centre tap
    wc = 0.1 * jax.random.normal(ks[7], (cout, cin))
    sc, bc = bn_fold(ks[8], cout)
    Wc = wc * sc[:, None]
    Bc = bc
    if cin == cout:
        sci, bci = bn_fold(ks[9], cin)
        Wc = Wc + jnp.diag(sci)
        Bc = Bc + bci
    Wfin = W2.at[:, :, ph, pw].add(Wc)
    Bfin = B2 + Bc
    # activation: ReLU -> depthwise 3x3 conv (groups=cout) -> BN (folded)
    wa = 0.2 * jax.random.normal(ks[10], (cout, 1, 3, 3))
    sa, ba = bn_fold(ks[11], cout)
    Wa = wa[:, 0] * sa[:, None, None]                        # (cout, 3, 3)

    Wst = jnp.transpose(Wfin, (2, 3, 0, 1)).reshape(kh * kw, cout, cin)
    if cin > 1:
        Wst = Wst.astype(jnp.bfloat16)      # one-time host-side cast (MXU path)
    Wak = jnp.transpose(Wa, (1, 2, 0)).reshape(9, cout, 1)
    return Wst, Bfin.reshape(cout, 1), Wak, ba.reshape(cout, 1)


def make_head_params(key, c_last, nc):
    """cls1 (AvgPool -> Dropout(0) -> Conv1x1 -> BN) + cls2 (Conv1x1) folded
       into a single (nc, c_last) matvec + bias."""
    hk = jax.random.split(key, 5)
    Wc1 = 0.1 * jax.random.normal(hk[0], (nc, c_last))
    bc1 = 0.1 * jax.random.normal(hk[1], (nc,))
    s_bn, t_bn = bn_fold(hk[2], nc)
    Wc2 = 0.1 * jax.random.normal(hk[3], (nc, nc))
    bc2 = 0.1 * jax.random.normal(hk[4], (nc,))
    Whead = Wc2 @ (Wc1 * s_bn[:, None])          # (nc, c_last)
    bhead = Wc2 @ (bc1 * s_bn + t_bn) + bc2      # (nc,)
    return Whead, bhead.reshape(nc, 1)


# -------------------------------------------------------------------- geometry
def stage_geometry(H, W0, cin0, dims, kernel_sizes):
    Hp = H + 2 * VPAD
    geo = []
    W, cin = W0, cin0
    for cout, (kh, kw) in zip(dims, kernel_sizes):
        ph, pw = kh // 2, kw // 2
        # static guard-margin invariants (review correctness concern #2)
        assert ph <= VPAD and pw <= HPAD, "kernel size exceeds static padding"
        Wp = W + 2 * HPAD
        L = Hp * Wp
        M = Wp + HPAD                      # guard margin on each buffer end
        assert M >= ph * Wp + pw and M >= Wp + 1, "guard margin too small"
        geo.append(dict(W=W, Wp=Wp, L=L, M=M, cin=cin, cout=cout, kh=kh, kw=kw))
        W, cin = W // 2, cout
    return Hp, geo


def make_mask(H, W, Wp, L):
    """(1, L) f32: 1 at interior positions of the padded grid, 0 on the ring."""
    m = np.zeros((1, L), np.float32)
    for h in range(H):
        b = (VPAD + h) * Wp + HPAD
        m[0, b:b + W] = 1.0
    return jnp.asarray(m)


def make_pool_matrix(H, g_in, g_out):
    """0/1 matrix: (pairwise-max buffer of stage i) -> zero-padded flattened
       input buffer of stage i+1 (stride-2 select + scatter + re-pad in one dot)."""
    Wo = g_in['W'] // 2
    Lb_out = g_out['L'] + 2 * g_out['M']
    S = np.zeros((g_in['L'] - 1, Lb_out), np.float32)
    for h in range(H):
        for w in range(Wo):
            j = (VPAD + h) * g_in['Wp'] + HPAD + 2 * w
            d = g_out['M'] + (VPAD + h) * g_out['Wp'] + HPAD + w
            S[j, d] = 1.0
    return jnp.asarray(S)


def make_avgpool_vector(H, g_in):
    """Last stage: stride-2 maxpool selection fused with the global avg pool."""
    Wo = g_in['W'] // 2
    S = np.zeros((g_in['L'] - 1, 1), np.float32)
    for h in range(H):
        for w in range(Wo):
            j = (VPAD + h) * g_in['Wp'] + HPAD + 2 * w
            S[j, 0] = 1.0 / (H * Wo)
    return jnp.asarray(S)


def prep_input(x_nchw, Wp0, M0):
    """(N, C, H, W) -> (N, C, Lbuf0): zero-padded grid, flattened, guard margins."""
    N, C, H, W = x_nchw.shape
    xp = jnp.pad(x_nchw.astype(jnp.float32),
                 ((0, 0), (0, 0), (VPAD, VPAD), (HPAD, HPAD)))
    flat = xp.reshape(N, C, (H + 2 * VPAD) * Wp0)
    return jnp.pad(flat, ((0, 0), (0, 0), (M0, M0)))


# ---------------------------------------------------------------------- kernel
def _nrlk_kernel(*refs, stages):
    ns = len(stages)
    k = 0
    x0_ref = refs[k]; k += 1
    st = [refs[k + 6 * i: k + 6 * (i + 1)] for i in range(ns)]; k += 6 * ns
    whead_ref, bhead_ref = refs[k], refs[k + 1]; k += 2
    out_ref = refs[k]; k += 1
    scr = refs[k:]
    in_scr = list(scr[:ns - 1])      # stage-input buffers for stages 1..ns-1
    relu_scr = list(scr[ns - 1:])    # per-stage masked-ReLU buffers (guarded)

    for i, (Wp, L, M, cin, cout, kh, kw) in enumerate(stages):
        wst_ref, bst_ref, wa_ref, ba_ref, mask_ref, s_ref = st[i]
        ph, pw = kh // 2, kw // 2

        # (1) reparameterized kh x kw 'same' conv.  Channels on sublanes,
        #     flattened padded spatial on lanes.  The stage input is loaded /
        #     cast to bf16 exactly once; each tap is one (cout,cin)@(cin,L)
        #     bf16 MXU dot (cin>1) or one f32 VPU broadcast-FMA (cin==1).
        if i == 0:
            xv = x0_ref[0]                          # (1, Lbuf) f32
        else:
            xv = in_scr[i - 1][...]                 # (cin, Lbuf) f32
        if cin > 1:
            xv = xv.astype(jnp.bfloat16)
        acc = jnp.zeros((cout, L), jnp.float32)
        for dy in range(kh):
            for dx in range(kw):
                off = M + (dy - ph) * Wp + (dx - pw)
                tap = xv[:, off:off + L]
                w_t = wst_ref[dy * kw + dx]
                if cin == 1:
                    acc = acc + w_t * tap
                else:
                    acc = acc + jnp.dot(w_t, tap,
                                        preferred_element_type=jnp.float32)

        # (2) bias + ReLU, zero the padding ring (tiny (1,L) host mask), store
        #     once into the guarded ReLU buffer; only the guard strips are
        #     explicitly zeroed (interior is fully overwritten).
        y = jnp.maximum(acc + bst_ref[...], 0.0) * mask_ref[...]
        rs = relu_scr[i]
        rs[:, 0:M] = jnp.zeros((cout, M), jnp.float32)
        rs[:, M + L:M + L + M] = jnp.zeros((cout, M), jnp.float32)
        rs[:, M:M + L] = y

        # (3) depthwise 3x3 conv (+ folded BN): 9 lane-shifted whole-buffer
        #     VPU FMAs (weights are per-channel columns).
        dw = jnp.zeros((cout, L), jnp.float32)
        for dy in range(3):
            for dx in range(3):
                off = M + (dy - 1) * Wp + (dx - 1)
                dw = dw + wa_ref[dy * 3 + dx] * rs[:, off:off + L]
        z = dw + ba_ref[...]

        # (4) MaxPool2d((1,2),(1,2)): one bulk pairwise max, then one f32 dot
        #     with a constant selection matrix that picks the even interior
        #     columns and writes the next stage's zero-padded input buffer in a
        #     single full-buffer store (the last stage's matrix also performs
        #     the global average pool).
        pooled = jnp.maximum(z[:, :L - 1], z[:, 1:])         # (cout, L-1)
        sel = jnp.dot(pooled, s_ref[...], preferred_element_type=jnp.float32)
        if i + 1 < ns:
            in_scr[i][...] = sel                             # (cout, Lbuf_next)
        else:
            # head: folded (conv1x1 + BN + conv1x1) on the pooled feature vector
            logits = (jnp.dot(whead_ref[...], sel,
                              preferred_element_type=jnp.float32)
                      + bhead_ref[...])                      # (nc, 1)
            out_ref[0] = logits


# ---------------------------------------------------------------------- driver
def nrlknet_forward(x_nchw, stage_params, head_params, dims, kernel_sizes,
                    num_classes):
    N, cin0, H, W0 = x_nchw.shape
    _, geo = stage_geometry(H, W0, cin0, dims, kernel_sizes)
    ns = len(geo)

    # host-side constants / inputs
    x0 = prep_input(x_nchw, geo[0]['Wp'], geo[0]['M'])
    inputs = [x0]
    for i, g in enumerate(geo):
        Wst, Bst, Wa, Ba = stage_params[i]
        mask = make_mask(H, g['W'], g['Wp'], g['L'])
        S = make_pool_matrix(H, g, geo[i + 1]) if i + 1 < ns \
            else make_avgpool_vector(H, g)
        inputs += [Wst, Bst, Wa, Ba, mask, S]
    Whead, bhead = head_params
    inputs += [Whead, bhead]

    # specs: the image is blocked over batch (megacore-parallel grid axis),
    # everything else is a small resident VMEM constant.
    def const_spec(a):
        return pl.BlockSpec(a.shape, lambda n, _r=a.ndim: (0,) * _r)
    in_specs = [pl.BlockSpec((1, cin0, x0.shape[-1]), lambda n: (n, 0, 0))]
    in_specs += [const_spec(a) for a in inputs[1:]]
    out_specs = pl.BlockSpec((1, num_classes, 1), lambda n: (n, 0, 0))

    # VMEM scratch: every inter-stage activation stays on-chip (per grid step).
    scratch = []
    for i in range(1, ns):
        scratch.append(pltpu.VMEM(
            (geo[i]['cin'], geo[i]['L'] + 2 * geo[i]['M']), jnp.float32))
    for i in range(ns):
        scratch.append(pltpu.VMEM(
            (geo[i]['cout'], geo[i]['L'] + 2 * geo[i]['M']), jnp.float32))

    # static VMEM budget check (review: v7x has 64 MiB / 32 MiB scoped default)
    scratch_bytes = (
        sum(4 * geo[i]['cin'] * (geo[i]['L'] + 2 * geo[i]['M'])
            for i in range(1, ns))
        + sum(4 * geo[i]['cout'] * (geo[i]['L'] + 2 * geo[i]['M'])
              for i in range(ns)))
    input_bytes = sum(int(a.size) * a.dtype.itemsize for a in inputs)
    assert input_bytes + scratch_bytes < 24 * 1024 * 1024, (
        "VMEM working set too large; tile the batch via the grid instead")

    stages = tuple((g['Wp'], g['L'], g['M'], g['cin'], g['cout'],
                    g['kh'], g['kw']) for g in geo)
    kernel = functools.partial(_nrlk_kernel, stages=stages)
    out = pl.pallas_call(
        kernel,
        grid=(N,),
        out_shape=jax.ShapeDtypeStruct((N, num_classes, 1), jnp.float32),
        in_specs=in_specs,
        out_specs=out_specs,
        scratch_shapes=scratch,
        compiler_params=pltpu.CompilerParams(
            dimension_semantics=("parallel",)),
    )(*inputs)
    return out.reshape(N, num_classes)


if __name__ == "__main__":
    key = jax.random.PRNGKey(0)
    # NRLKNet(num_classes, in_channels, dims, kernel_sizes) -- small config.
    num_classes = 4
    in_channels = 1
    dims = [8, 8, 8, 16]
    kernel_sizes = [(3, 5), (1, 5), (1, 5), (1, 5)]
    N, H, W = 2, 4, 32               # PyTorch input: (N, 1, 4, 32) NCHW

    kx, kp, khd = jax.random.split(key, 3)
    x = jax.random.normal(kx, (N, in_channels, H, W), jnp.float32)

    stage_keys = jax.random.split(kp, len(dims))
    stage_params, cin = [], in_channels
    for i, (cout, (skh, skw)) in enumerate(zip(dims, kernel_sizes)):
        stage_params.append(make_stage_params(stage_keys[i], cin, cout, skh, skw))
        cin = cout
    head_params = make_head_params(khd, dims[-1], num_classes)

    out = nrlknet_forward(x, stage_params, head_params, dims, kernel_sizes,
                          num_classes)
    out = jax.block_until_ready(out)
    assert out.shape == (N, num_classes), out.shape
    print("KERNEL_OK")
</pallas_src>

<mosaic_0001>
module attributes {stable_mosaic.version = 11 : i64} {
  func.func @_nrlk_kernel(%arg0: i32, %arg1: memref<1x1x292xf32, #tpu.memory_space<vmem>>, %arg2: memref<15x8x1xf32, #tpu.memory_space<vmem>>, %arg3: memref<8x1xf32, #tpu.memory_space<vmem>>, %arg4: memref<9x8x1xf32, #tpu.memory_space<vmem>>, %arg5: memref<8x1xf32, #tpu.memory_space<vmem>>, %arg6: memref<1x216xf32, #tpu.memory_space<vmem>>, %arg7: memref<215x164xf32, #tpu.memory_space<vmem>>, %arg8: memref<5x8x8xbf16, #tpu.memory_space<vmem>>, %arg9: memref<8x1xf32, #tpu.memory_space<vmem>>, %arg10: memref<9x8x1xf32, #tpu.memory_space<vmem>>, %arg11: memref<8x1xf32, #tpu.memory_space<vmem>>, %arg12: memref<1x120xf32, #tpu.memory_space<vmem>>, %arg13: memref<119x100xf32, #tpu.memory_space<vmem>>, %arg14: memref<5x8x8xbf16, #tpu.memory_space<vmem>>, %arg15: memref<8x1xf32, #tpu.memory_space<vmem>>, %arg16: memref<9x8x1xf32, #tpu.memory_space<vmem>>, %arg17: memref<8x1xf32, #tpu.memory_space<vmem>>, %arg18: memref<1x72xf32, #tpu.memory_space<vmem>>, %arg19: memref<71x68xf32, #tpu.memory_space<vmem>>, %arg20: memref<5x16x8xbf16, #tpu.memory_space<vmem>>, %arg21: memref<16x1xf32, #tpu.memory_space<vmem>>, %arg22: memref<9x16x1xf32, #tpu.memory_space<vmem>>, %arg23: memref<16x1xf32, #tpu.memory_space<vmem>>, %arg24: memref<1x48xf32, #tpu.memory_space<vmem>>, %arg25: memref<47x1xf32, #tpu.memory_space<vmem>>, %arg26: memref<4x16xf32, #tpu.memory_space<vmem>>, %arg27: memref<4x1xf32, #tpu.memory_space<vmem>>, %arg28: memref<1x4x1xf32, #tpu.memory_space<vmem>>, %arg29: memref<8x164xf32, #tpu.memory_space<vmem>>, %arg30: memref<8x100xf32, #tpu.memory_space<vmem>>, %arg31: memref<8x68xf32, #tpu.memory_space<vmem>>, %arg32: memref<8x292xf32, #tpu.memory_space<vmem>>, %arg33: memref<8x164xf32, #tpu.memory_space<vmem>>, %arg34: memref<8x100xf32, #tpu.memory_space<vmem>>, %arg35: memref<16x68xf32, #tpu.memory_space<vmem>>) attributes {dimension_semantics = [#tpu.dimension_semantics<parallel>], iteration_bounds = array<i64: 2>, scalar_prefetch = 0 : i64, scratch_operands = 7 : i64, tpu.core_type = #tpu.core_type<tc>, window_params = [{transform_indices = @transform_0, window_bounds = array<i64: 1, 1, 292>}, {pipeline_mode = #tpu.pipeline_mode<synchronous>, transform_indices = @transform_1, window_bounds = array<i64: 15, 8, 1>}, {pipeline_mode = #tpu.pipeline_mode<synchronous>, transform_indices = @transform_2, window_bounds = array<i64: 8, 1>}, {pipeline_mode = #tpu.pipeline_mode<synchronous>, transform_indices = @transform_3, window_bounds = array<i64: 9, 8, 1>}, {pipeline_mode = #tpu.pipeline_mode<synchronous>, transform_indices = @transform_4, window_bounds = array<i64: 8, 1>}, {pipeline_mode = #tpu.pipeline_mode<synchronous>, transform_indices = @transform_5, window_bounds = array<i64: 1, 216>}, {pipeline_mode = #tpu.pipeline_mode<synchronous>, transform_indices = @transform_6, window_bounds = array<i64: 215, 164>}, {pipeline_mode = #tpu.pipeline_mode<synchronous>, transform_indices = @transform_7, window_bounds = array<i64: 5, 8, 8>}, {pipeline_mode = #tpu.pipeline_mode<synchronous>, transform_indices = @transform_8, window_bounds = array<i64: 8, 1>}, {pipeline_mode = #tpu.pipeline_mode<synchronous>, transform_indices = @transform_9, window_bounds = array<i64: 9, 8, 1>}, {pipeline_mode = #tpu.pipeline_mode<synchronous>, transform_indices = @transform_10, window_bounds = array<i64: 8, 1>}, {pipeline_mode = #tpu.pipeline_mode<synchronous>, transform_indices = @transform_11, window_bounds = array<i64: 1, 120>}, {pipeline_mode = #tpu.pipeline_mode<synchronous>, transform_indices = @transform_12, window_bounds = array<i64: 119, 100>}, {pipeline_mode = #tpu.pipeline_mode<synchronous>, transform_indices = @transform_13, window_bounds = array<i64: 5, 8, 8>}, {pipeline_mode = #tpu.pipeline_mode<synchronous>, transform_indices = @transform_14, window_bounds = array<i64: 8, 1>}, {pipeline_mode = #tpu.pipeline_mode<synchronous>, transform_indices = @transform_15, window_bounds = array<i64: 9, 8, 1>}, {pipeline_mode = #tpu.pipeline_mode<synchronous>, transform_indices = @transform_16, window_bounds = array<i64: 8, 1>}, {pipeline_mode = #tpu.pipeline_mode<synchronous>, transform_indices = @transform_17, window_bounds = array<i64: 1, 72>}, {pipeline_mode = #tpu.pipeline_mode<synchronous>, transform_indices = @transform_18, window_bounds = array<i64: 71, 68>}, {pipeline_mode = #tpu.pipeline_mode<synchronous>, transform_indices = @transform_19, window_bounds = array<i64: 5, 16, 8>}, {pipeline_mode = #tpu.pipeline_mode<synchronous>, transform_indices = @transform_20, window_bounds = array<i64: 16, 1>}, {pipeline_mode = #tpu.pipeline_mode<synchronous>, transform_indices = @transform_21, window_bounds = array<i64: 9, 16, 1>}, {pipeline_mode = #tpu.pipeline_mode<synchronous>, transform_indices = @transform_22, window_bounds = array<i64: 16, 1>}, {pipeline_mode = #tpu.pipeline_mode<synchronous>, transform_indices = @transform_23, window_bounds = array<i64: 1, 48>}, {pipeline_mode = #tpu.pipeline_mode<synchronous>, transform_indices = @transform_24, window_bounds = array<i64: 47, 1>}, {pipeline_mode = #tpu.pipeline_mode<synchronous>, transform_indices = @transform_25, window_bounds = array<i64: 4, 16>}, {pipeline_mode = #tpu.pipeline_mode<synchronous>, transform_indices = @transform_26, window_bounds = array<i64: 4, 1>}, {transform_indices = @transform_27, window_bounds = array<i64: 1, 4, 1>}]} {
    %c0 = arith.constant 0 : index
    %c0_0 = arith.constant 0 : index
    %c0_1 = arith.constant 0 : index
    %0 = vector.load %arg1[%c0, %c0_0, %c0_1] : memref<1x1x292xf32, #tpu.memory_space<vmem>>, vector<1x1x292xf32>
    %1 = vector.shape_cast %0 : vector<1x1x292xf32> to vector<1x292xf32>
    %cst = arith.constant 0.000000e+00 : f32
    %2 = vector.broadcast %cst : f32 to vector<8x216xf32>
    %3 = vector.extract_strided_slice %1 {offsets = [0, 0], sizes = [1, 216], strides = [1, 1]} : vector<1x292xf32> to vector<1x216xf32>
    %c0_2 = arith.constant 0 : index
    %c0_3 = arith.constant 0 : index
    %c0_4 = arith.constant 0 : index
    %4 = vector.load %arg2[%c0_2, %c0_3, %c0_4] : memref<15x8x1xf32, #tpu.memory_space<vmem>>, vector<1x8x1xf32>
    %5 = vector.shape_cast %4 : vector<1x8x1xf32> to vector<8x1xf32>
    %6 = vector.broadcast %5 : vector<8x1xf32> to vector<8x216xf32>
    %7 = vector.broadcast %3 : vector<1x216xf32> to vector<8x216xf32>
    %8 = arith.mulf %6, %7 : vector<8x216xf32>
    %9 = arith.addf %2, %8 : vector<8x216xf32>
    %10 = vector.extract_strided_slice %1 {offsets = [0, 1], sizes = [1, 216], strides = [1, 1]} : vector<1x292xf32> to vector<1x216xf32>
    %c1 = arith.constant 1 : index
    %c0_5 = arith.constant 0 : index
    %c0_6 = arith.constant 0 : index
    %11 = vector.load %arg2[%c1, %c0_5, %c0_6] : memref<15x8x1xf32, #tpu.memory_space<vmem>>, vector<1x8x1xf32>
    %12 = vector.shape_cast %11 : vector<1x8x1xf32> to vector<8x1xf32>
    %13 = vector.broadcast %12 : vector<8x1xf32> to vector<8x216xf32>
    %14 = vector.broadcast %10 : vector<1x216xf32> to vector<8x216xf32>
    %15 = arith.mulf %13, %14 : vector<8x216xf32>
    %16 = arith.addf %9, %15 : vector<8x216xf32>
    %17 = vector.extract_strided_slice %1 {offsets = [0, 2], sizes = [1, 216], strides = [1, 1]} : vector<1x292xf32> to vector<1x216xf32>
    %c2 = arith.constant 2 : index
    %c0_7 = arith.constant 0 : index
    %c0_8 = arith.constant 0 : index
    %18 = vector.load %arg2[%c2, %c0_7, %c0_8] : memref<15x8x1xf32, #tpu.memory_space<vmem>>, vector<1x8x1xf32>
    %19 = vector.shape_cast %18 : vector<1x8x1xf32> to vector<8x1xf32>
    %20 = vector.broadcast %19 : vector<8x1xf32> to vector<8x216xf32>
    %21 = vector.broadcast %17 : vector<1x216xf32> to vector<8x216xf32>
    %22 = arith.mulf %20, %21 : vector<8x216xf32>
    %23 = arith.addf %16, %22 : vector<8x216xf32>
    %24 = vector.extract_strided_slice %1 {offsets = [0, 3], sizes = [1, 216], strides = [1, 1]} : vector<1x292xf32> to vector<1x216xf32>
    %c3 = arith.constant 3 : index
    %c0_9 = arith.constant 0 : index
    %c0_10 = arith.constant 0 : index
    %25 = vector.load %arg2[%c3, %c0_9, %c0_10] : memref<15x8x1xf32, #tpu.memory_space<vmem>>, vector<1x8x1xf32>
    %26 = vector.shape_cast %25 : vector<1x8x1xf32> to vector<8x1xf32>
    %27 = vector.broadcast %26 : vector<8x1xf32> to vector<8x216xf32>
    %28 = vector.broadcast %24 : vector<1x216xf32> to vector<8x216xf32>
    %29 = arith.mulf %27, %28 : vector<8x216xf32>
    %30 = arith.addf %23, %29 : vector<8x216xf32>
    %31 = vector.extract_strided_slice %1 {offsets = [0, 4], sizes = [1, 216], strides = [1, 1]} : vector<1x292xf32> to vector<1x216xf32>
    %c4 = arith.constant 4 : index
    %c0_11 = arith.constant 0 : index
    %c0_12 = arith.constant 0 : index
    %32 = vector.load %arg2[%c4, %c0_11, %c0_12] : memref<15x8x1xf32, #tpu.memory_space<vmem>>, vector<1x8x1xf32>
    %33 = vector.shape_cast %32 : vector<1x8x1xf32> to vector<8x1xf32>
    %34 = vector.broadcast %33 : vector<8x1xf32> to vector<8x216xf32>
    %35 = vector.broadcast %31 : vector<1x216xf32> to vector<8x216xf32>
    %36 = arith.mulf %34, %35 : vector<8x216xf32>
    %37 = arith.addf %30, %36 : vector<8x216xf32>
    %38 = vector.extract_strided_slice %1 {offsets = [0, 36], sizes = [1, 216], strides = [1, 1]} : vector<1x292xf32> to vector<1x216xf32>
    %c5 = arith.constant 5 : index
    %c0_13 = arith.constant 0 : index
    %c0_14 = arith.constant 0 : index
    %39 = vector.load %arg2[%c5, %c0_13, %c0_14] : memref<15x8x1xf32, #tpu.memory_space<vmem>>, vector<1x8x1xf32>
    %40 = vector.shape_cast %39 : vector<1x8x1xf32> to vector<8x1xf32>
    %41 = vector.broadcast %40 : vector<8x1xf32> to vector<8x216xf32>
    %42 = vector.broadcast %38 : vector<1x216xf32> to vector<8x216xf32>
    %43 = arith.mulf %41, %42 : vector<8x216xf32>
    %44 = arith.addf %37, %43 : vector<8x216xf32>
    %45 = vector.extract_strided_slice %1 {offsets = [0, 37], sizes = [1, 216], strides = [1, 1]} : vector<1x292xf32> to vector<1x216xf32>
    %c6 = arith.constant 6 : index
    %c0_15 = arith.constant 0 : index
    %c0_16 = arith.constant 0 : index
    %46 = vector.load %arg2[%c6, %c0_15, %c0_16] : memref<15x8x1xf32, #tpu.memory_space<vmem>>, vector<1x8x1xf32>
    %47 = vector.shape_cast %46 : vector<1x8x1xf32> to vector<8x1xf32>
    %48 = vector.broadcast %47 : vector<8x1xf32> to vector<8x216xf32>
    %49 = vector.broadcast %45 : vector<1x216xf32> to vector<8x216xf32>
    %50 = arith.mulf %48, %49 : vector<8x216xf32>
    %51 = arith.addf %44, %50 : vector<8x216xf32>
    %52 = vector.extract_strided_slice %1 {offsets = [0, 38], sizes = [1, 216], strides = [1, 1]} : vector<1x292xf32> to vector<1x216xf32>
    %c7 = arith.constant 7 : index
    %c0_17 = arith.constant 0 : index
    %c0_18 = arith.constant 0 : index
    %53 = vector.load %arg2[%c7, %c0_17, %c0_18] : memref<15x8x1xf32, #tpu.memory_space<vmem>>, vector<1x8x1xf32>
    %54 = vector.shape_cast %53 : vector<1x8x1xf32> to vector<8x1xf32>
    %55 = vector.broadcast %54 : vector<8x1xf32> to vector<8x216xf32>
    %56 = vector.broadcast %52 : vector<1x216xf32> to vector<8x216xf32>
    %57 = arith.mulf %55, %56 : vector<8x216xf32>
    %58 = arith.addf %51, %57 : vector<8x216xf32>
    %59 = vector.extract_strided_slice %1 {offsets = [0, 39], sizes = [1, 216], strides = [1, 1]} : vector<1x292xf32> to vector<1x216xf32>
    %c8 = arith.constant 8 : index
    %c0_19 = arith.constant 0 : index
    %c0_20 = arith.constant 0 : index
    %60 = vector.load %arg2[%c8, %c0_19, %c0_20] : memref<15x8x1xf32, #tpu.memory_space<vmem>>, vector<1x8x1xf32>
    %61 = vector.shape_cast %60 : vector<1x8x1xf32> to vector<8x1xf32>
    %62 = vector.broadcast %61 : vector<8x1xf32> to vector<8x216xf32>
    %63 = vector.broadcast %59 : vector<1x216xf32> to vector<8x216xf32>
    %64 = arith.mulf %62, %63 : vector<8x216xf32>
    %65 = arith.addf %58, %64 : vector<8x216xf32>
    %66 = vector.extract_strided_slice %1 {offsets = [0, 40], sizes = [1, 216], strides = [1, 1]} : vector<1x292xf32> to vector<1x216xf32>
    %c9 = arith.constant 9 : index
    %c0_21 = arith.constant 0 : index
    %c0_22 = arith.constant 0 : index
    %67 = vector.load %arg2[%c9, %c0_21, %c0_22] : memref<15x8x1xf32, #tpu.memory_space<vmem>>, vector<1x8x1xf32>
    %68 = vector.shape_cast %67 : vector<1x8x1xf32> to vector<8x1xf32>
    %69 = vector.broadcast %68 : vector<8x1xf32> to vector<8x216xf32>
    %70 = vector.broadcast %66 : vector<1x216xf32> to vector<8x216xf32>
    %71 = arith.mulf %69, %70 : vector<8x216xf32>
    %72 = arith.addf %65, %71 : vector<8x216xf32>
    %73 = vector.extract_strided_slice %1 {offsets = [0, 72], sizes = [1, 216], strides = [1, 1]} : vector<1x292xf32> to vector<1x216xf32>
    %c10 = arith.constant 10 : index
    %c0_23 = arith.constant 0 : index
    %c0_24 = arith.constant 0 : index
    %74 = vector.load %arg2[%c10, %c0_23, %c0_24] : memref<15x8x1xf32, #tpu.memory_space<vmem>>, vector<1x8x1xf32>
    %75 = vector.shape_cast %74 : vector<1x8x1xf32> to vector<8x1xf32>
    %76 = vector.broadcast %75 : vector<8x1xf32> to vector<8x216xf32>
    %77 = vector.broadcast %73 : vector<1x216xf32> to vector<8x216xf32>
    %78 = arith.mulf %76, %77 : vector<8x216xf32>
    %79 = arith.addf %72, %78 : vector<8x216xf32>
    %80 = vector.extract_strided_slice %1 {offsets = [0, 73], sizes = [1, 216], strides = [1, 1]} : vector<1x292xf32> to vector<1x216xf32>
    %c11 = arith.constant 11 : index
    %c0_25 = arith.constant 0 : index
    %c0_26 = arith.constant 0 : index
    %81 = vector.load %arg2[%c11, %c0_25, %c0_26] : memref<15x8x1xf32, #tpu.memory_space<vmem>>, vector<1x8x1xf32>
    %82 = vector.shape_cast %81 : vector<1x8x1xf32> to vector<8x1xf32>
    %83 = vector.broadcast %82 : vector<8x1xf32> to vector<8x216xf32>
    %84 = vector.broadcast %80 : vector<1x216xf32> to vector<8x216xf32>
    %85 = arith.mulf %83, %84 : vector<8x216xf32>
    %86 = arith.addf %79, %85 : vector<8x216xf32>
    %87 = vector.extract_strided_slice %1 {offsets = [0, 74], sizes = [1, 216], strides = [1, 1]} : vector<1x292xf32> to vector<1x216xf32>
    %c12 = arith.constant 12 : index
    %c0_27 = arith.constant 0 : index
    %c0_28 = arith.constant 0 : index
    %88 = vector.load %arg2[%c12, %c0_27, %c0_28] : memref<15x8x1xf32, #tpu.memory_space<vmem>>, vector<1x8x1xf32>
    %89 = vector.shape_cast %88 : vector<1x8x1xf32> to vector<8x1xf32>
    %90 = vector.broadcast %89 : vector<8x1xf32> to vector<8x216xf32>
    %91 = vector.broadcast %87 : vector<1x216xf32> to vector<8x216xf32>
    %92 = arith.mulf %90, %91 : vector<8x216xf32>
    %93 = arith.addf %86, %92 : vector<8x216xf32>
    %94 = vector.extract_strided_slice %1 {offsets = [0, 75], sizes = [1, 216], strides = [1, 1]} : vector<1x292xf32> to vector<1x216xf32>
    %c13 = arith.constant 13 : index
    %c0_29 = arith.constant 0 : index
    %c0_30 = arith.constant 0 : index
    %95 = vector.load %arg2[%c13, %c0_29, %c0_30] : memref<15x8x1xf32, #tpu.memory_space<vmem>>, vector<1x8x1xf32>
    %96 = vector.shape_cast %95 : vector<1x8x1xf32> to vector<8x1xf32>
    %97 = vector.broadcast %96 : vector<8x1xf32> to vector<8x216xf32>
    %98 = vector.broadcast %94 : vector<1x216xf32> to vector<8x216xf32>
    %99 = arith.mulf %97, %98 : vector<8x216xf32>
    %100 = arith.addf %93, %99 : vector<8x216xf32>
    %101 = vector.extract_strided_slice %1 {offsets = [0, 76], sizes = [1, 216], strides = [1, 1]} : vector<1x292xf32> to vector<1x216xf32>
    %c14 = arith.constant 14 : index
    %c0_31 = arith.constant 0 : index
    %c0_32 = arith.constant 0 : index
    %102 = vector.load %arg2[%c14, %c0_31, %c0_32] : memref<15x8x1xf32, #tpu.memory_space<vmem>>, vector<1x8x1xf32>
    %103 = vector.shape_cast %102 : vector<1x8x1xf32> to vector<8x1xf32>
    %104 = vector.broadcast %103 : vector<8x1xf32> to vector<8x216xf32>
    %105 = vector.broadcast %101 : vector<1x216xf32> to vector<8x216xf32>
    %106 = arith.mulf %104, %105 : vector<8x216xf32>
    %107 = arith.addf %100, %106 : vector<8x216xf32>
    %c0_33 = arith.constant 0 : index
    %c0_34 = arith.constant 0 : index
    %108 = vector.load %arg3[%c0_33, %c0_34] : memref<8x1xf32, #tpu.memory_space<vmem>>, vector<8x1xf32>
    %109 = vector.broadcast %108 : vector<8x1xf32> to vector<8x216xf32>
    %110 = arith.addf %107, %109 : vector<8x216xf32>
    %cst_35 = arith.constant 0.000000e+00 : f32
    %111 = vector.broadcast %cst_35 : f32 to vector<8x216xf32>
    %112 = arith.maximumf %110, %111 : vector<8x216xf32>
    %c0_36 = arith.constant 0 : index
    %c0_37 = arith.constant 0 : index
    %113 = vector.load %arg6[%c0_36, %c0_37] : memref<1x216xf32, #tpu.memory_space<vmem>>, vector<1x216xf32>
    %114 = vector.broadcast %113 : vector<1x216xf32> to vector<8x216xf32>
    %115 = arith.mulf %112, %114 : vector<8x216xf32>
    %cst_38 = arith.constant 0.000000e+00 : f32
    %116 = vector.broadcast %cst_38 : f32 to vector<8x38xf32>
    %c0_39 = arith.constant 0 : index
    %c0_40 = arith.constant 0 : index
    %117 = vector.load %arg32[%c0_39, %c0_40] : memref<8x292xf32, #tpu.memory_space<vmem>>, vector<8x38xf32>
    tpu.vector_store %arg32[%c0_39, %c0_40], %116 {strides = array<i32>} : memref<8x292xf32, #tpu.memory_space<vmem>>, vector<8x38xf32>,
    %cst_41 = arith.constant 0.000000e+00 : f32
    %118 = vector.broadcast %cst_41 : f32 to vector<8x38xf32>
    %c0_42 = arith.constant 0 : index
    %c254 = arith.constant 254 : index
    %119 = vector.load %arg32[%c0_42, %c254] : memref<8x292xf32, #tpu.memory_space<vmem>>, vector<8x38xf32>
    tpu.vector_store %arg32[%c0_42, %c254], %118 {strides = array<i32>} : memref<8x292xf32, #tpu.memory_space<vmem>>, vector<8x38xf32>,
    %c0_43 = arith.constant 0 : index
    %c38 = arith.constant 38 : index
    %120 = vector.load %arg32[%c0_43, %c38] : memref<8x292xf32, #tpu.memory_space<vmem>>, vector<8x216xf32>
    tpu.vector_store %arg32[%c0_43, %c38], %115 {strides = array<i32>} : memref<8x292xf32, #tpu.memory_space<vmem>>, vector<8x216xf32>,
    %cst_44 = arith.constant 0.000000e+00 : f32
    %121 = vector.broadcast %cst_44 : f32 to vector<8x216xf32>
    %c0_45 = arith.constant 0 : index
    %c0_46 = arith.constant 0 : index
    %c0_47 = arith.constant 0 : index
    %122 = vector.load %arg4[%c0_45, %c0_46, %c0_47] : memref<9x8x1xf32, #tpu.memory_space<vmem>>, vector<1x8x1xf32>
    %123 = vector.shape_cast %122 : vector<1x8x1xf32> to vector<8x1xf32>
    %c0_48 = arith.constant 0 : index
    %c1_49 = arith.constant 1 : index
    %124 = vector.load %arg32[%c0_48, %c1_49] : memref<8x292xf32, #tpu.memory_space<vmem>>, vector<8x216xf32>
    %125 = vector.broadcast %123 : vector<8x1xf32> to vector<8x216xf32>
    %126 = arith.mulf %125, %124 : vector<8x216xf32>
    %127 = arith.addf %121, %126 : vector<8x216xf32>
    %c1_50 = arith.constant 1 : index
    %c0_51 = arith.constant 0 : index
    %c0_52 = arith.constant 0 : index
    %128 = vector.load %arg4[%c1_50, %c0_51, %c0_52] : memref<9x8x1xf32, #tpu.memory_space<vmem>>, vector<1x8x1xf32>
    %129 = vector.shape_cast %128 : vector<1x8x1xf32> to vector<8x1xf32>
    %c0_53 = arith.constant 0 : index
    %c2_54 = arith.constant 2 : index
    %130 = vector.load %arg32[%c0_53, %c2_54] : memref<8x292xf32, #tpu.memory_space<vmem>>, vector<8x216xf32>
    %131 = vector.broadcast %129 : vector<8x1xf32> to vector<8x216xf32>
    %132 = arith.mulf %131, %130 : vector<8x216xf32>
    %133 = arith.addf %127, %132 : vector<8x216xf32>
    %c2_55 = arith.constant 2 : index
    %c0_56 = arith.constant 0 : index
    %c0_57 = arith.constant 0 : index
    %134 = vector.load %arg4[%c2_55, %c0_56, %c0_57] : memref<9x8x1xf32, #tpu.memory_space<vmem>>, vector<1x8x1xf32>
    %135 = vector.shape_cast %134 : vector<1x8x1xf32> to vector<8x1xf32>
    %c0_58 = arith.constant 0 : index
    %c3_59 = arith.constant 3 : index
    %136 = vector.load %arg32[%c0_58, %c3_59] : memref<8x292xf32, #tpu.memory_space<vmem>>, vector<8x216xf32>
    %137 = vector.broadcast %135 : vector<8x1xf32> to vector<8x216xf32>
    %138 = arith.mulf %137, %136 : vector<8x216xf32>
    %139 = arith.addf %133, %138 : vector<8x216xf32>
    %c3_60 = arith.constant 3 : index
    %c0_61 = arith.constant 0 : index
    %c0_62 = arith.constant 0 : index
    %140 = vector.load %arg4[%c3_60, %c0_61, %c0_62] : memref<9x8x1xf32, #tpu.memory_space<vmem>>, vector<1x8x1xf32>
    %141 = vector.shape_cast %140 : vector<1x8x1xf32> to vector<8x1xf32>
    %c0_63 = arith.constant 0 : index
    %c37 = arith.constant 37 : index
    %142 = vector.load %arg32[%c0_63, %c37] : memref<8x292xf32, #tpu.memory_space<vmem>>, vector<8x216xf32>
    %143 = vector.broadcast %141 : vector<8x1xf32> to vector<8x216xf32>
    %144 = arith.mulf %143, %142 : vector<8x216xf32>
    %145 = arith.addf %139, %144 : vector<8x216xf32>
    %c4_64 = arith.constant 4 : index
    %c0_65 = arith.constant 0 : index
    %c0_66 = arith.constant 0 : index
    %146 = vector.load %arg4[%c4_64, %c0_65, %c0_66] : memref<9x8x1xf32, #tpu.memory_space<vmem>>, vector<1x8x1xf32>
    %147 = vector.shape_cast %146 : vector<1x8x1xf32> to vector<8x1xf32>
    %c0_67 = arith.constant 0 : index
    %c38_68 = arith.constant 38 : index
    %148 = vector.load %arg32[%c0_67, %c38_68] : memref<8x292xf32, #tpu.memory_space<vmem>>, vector<8x216xf32>
    %149 = vector.broadcast %147 : vector<8x1xf32> to vector<8x216xf32>
    %150 = arith.mulf %149, %148 : vector<8x216xf32>
    %151 = arith.addf %145, %150 : vector<8x216xf32>
    %c5_69 = arith.constant 5 : index
    %c0_70 = arith.constant 0 : index
    %c0_71 = arith.constant 0 : index
    %152 = vector.load %arg4[%c5_69, %c0_70, %c0_71] : memref<9x8x1xf32, #tpu.memory_space<vmem>>, vector<1x8x1xf32>
    %153 = vector.shape_cast %152 : vector<1x8x1xf32> to vector<8x1xf32>
    %c0_72 = arith.constant 0 : index
    %c39 = arith.constant 39 : index
    %154 = vector.load %arg32[%c0_72, %c39] : memref<8x292xf32, #tpu.memory_space<vmem>>, vector<8x216xf32>
    %155 = vector.broadcast %153 : vector<8x1xf32> to vector<8x216xf32>
    %156 = arith.mulf %155, %154 : vector<8x216xf32>
    %157 = arith.addf %151, %156 : vector<8x216xf32>
    %c6_73 = arith.constant 6 : index
    %c0_74 = arith.constant 0 : index
    %c0_75 = arith.constant 0 : index
    %158 = vector.load %arg4[%c6_73, %c0_74, %c0_75] : memref<9x8x1xf32, #tpu.memory_space<vmem>>, vector<1x8x1xf32>
    %159 = vector.shape_cast %158 : vector<1x8x1xf32> to vector<8x1xf32>
    %c0_76 = arith.constant 0 : index
    %c73 = arith.constant 73 : index
    %160 = vector.load %arg32[%c0_76, %c73] : memref<8x292xf32, #tpu.memory_space<vmem>>, vector<8x216xf32>
    %161 = vector.broadcast %159 : vector<8x1xf32> to vector<8x216xf32>
    %162 = arith.mulf %161, %160 : vector<8x216xf32>
    %163 = arith.addf %157, %162 : vector<8x216xf32>
    %c7_77 = arith.constant 7 : index
    %c0_78 = arith.constant 0 : index
    %c0_79 = arith.constant 0 : index
    %164 = vector.load %arg4[%c7_77, %c0_78, %c0_79] : memref<9x8x1xf32, #tpu.memory_space<vmem>>, vector<1x8x1xf32>
    %165 = vector.shape_cast %164 : vector<1x8x1xf32> to vector<8x1xf32>
    %c0_80 = arith.constant 0 : index
    %c74 = arith.constant 74 : index
    %166 = vector.load %arg32[%c0_80, %c74] : memref<8x292xf32, #tpu.memory_space<vmem>>, vector<8x216xf32>
    %167 = vector.broadcast %165 : vector<8x1xf32> to vector<8x216xf32>
    %168 = arith.mulf %167, %166 : vector<8x216xf32>
    %169 = arith.addf %163, %168 : vector<8x216xf32>
    %c8_81 = arith.constant 8 : index
    %c0_82 = arith.constant 0 : index
    %c0_83 = arith.constant 0 : index
    %170 = vector.load %arg4[%c8_81, %c0_82, %c0_83] : memref<9x8x1xf32, #tpu.memory_space<vmem>>, vector<1x8x1xf32>
    %171 = vector.shape_cast %170 : vector<1x8x1xf32> to vector<8x1xf32>
    %c0_84 = arith.constant 0 : index
    %c75 = arith.constant 75 : index
    %172 = vector.load %arg32[%c0_84, %c75] : memref<8x292xf32, #tpu.memory_space<vmem>>, vector<8x216xf32>
    %173 = vector.broadcast %171 : vector<8x1xf32> to vector<8x216xf32>
    %174 = arith.mulf %173, %172 : vector<8x216xf32>
    %175 = arith.addf %169, %174 : vector<8x216xf32>
    %c0_85 = arith.constant 0 : index
    %c0_86 = arith.constant 0 : index
    %176 = vector.load %arg5[%c0_85, %c0_86] : memref<8x1xf32, #tpu.memory_space<vmem>>, vector<8x1xf32>
    %177 = vector.broadcast %176 : vector<8x1xf32> to vector<8x216xf32>
    %178 = arith.addf %175, %177 : vector<8x216xf32>
    %179 = vector.extract_strided_slice %178 {offsets = [0, 0], sizes = [8, 215], strides = [1, 1]} : vector<8x216xf32> to vector<8x215xf32>
    %180 = vector.extract_strided_slice %178 {offsets = [0, 1], sizes = [8, 215], strides = [1, 1]} : vector<8x216xf32> to vector<8x215xf32>
    %181 = arith.maximumf %179, %180 : vector<8x215xf32>
    %c0_87 = arith.constant 0 : index
    %c0_88 = arith.constant 0 : index
    %182 = vector.load %arg7[%c0_87, %c0_88] : memref<215x164xf32, #tpu.memory_space<vmem>>, vector<215x164xf32>
    %cst_89 = arith.constant dense<0.000000e+00> : vector<8x164xf32>
    %183 = tpu.matmul %181, %182, %cst_89 {dimension_numbers = #tpu.dot_dimension_numbers<[1], [0], [0], [1], [0, 0, 1, 1], [], []>} : vector<8x215xf32>, vector<215x164xf32>, vector<8x164xf32> -> vector<8x164xf32>
    %c0_90 = arith.constant 0 : index
    %c0_91 = arith.constant 0 : index
    %184 = vector.load %arg29[%c0_90, %c0_91] : memref<8x164xf32, #tpu.memory_space<vmem>>, vector<8x164xf32>
    tpu.vector_store %arg29[%c0_90, %c0_91], %183 {strides = array<i32>} : memref<8x164xf32, #tpu.memory_space<vmem>>, vector<8x164xf32>,
    %c0_92 = arith.constant 0 : index
    %c0_93 = arith.constant 0 : index
    %185 = vector.load %arg29[%c0_92, %c0_93] : memref<8x164xf32, #tpu.memory_space<vmem>>, vector<8x164xf32>
    %186 = arith.truncf %185 : vector<8x164xf32> to vector<8x164xbf16>
    %cst_94 = arith.constant 0.000000e+00 : f32
    %187 = vector.broadcast %cst_94 : f32 to vector<8x120xf32>
    %188 = vector.extract_strided_slice %186 {offsets = [0, 20], sizes = [8, 120], strides = [1, 1]} : vector<8x164xbf16> to vector<8x120xbf16>
    %c0_95 = arith.constant 0 : index
    %c0_96 = arith.constant 0 : index
    %c0_97 = arith.constant 0 : index
    %189 = vector.load %arg8[%c0_95, %c0_96, %c0_97] : memref<5x8x8xbf16, #tpu.memory_space<vmem>>, vector<1x8x8xbf16>
    %190 = vector.shape_cast %189 : vector<1x8x8xbf16> to vector<8x8xbf16>
    %cst_98 = arith.constant dense<0.000000e+00> : vector<8x120xf32>
    %191 = tpu.matmul %190, %188, %cst_98 {dimension_numbers = #tpu.dot_dimension_numbers<[1], [0], [0], [1], [0, 0, 1, 1], [], []>} : vector<8x8xbf16>, vector<8x120xbf16>, vector<8x120xf32> -> vector<8x120xf32>
    %192 = arith.addf %187, %191 : vector<8x120xf32>
    %193 = vector.extract_strided_slice %186 {offsets = [0, 21], sizes = [8, 120], strides = [1, 1]} : vector<8x164xbf16> to vector<8x120xbf16>
    %c1_99 = arith.constant 1 : index
    %c0_100 = arith.constant 0 : index
    %c0_101 = arith.constant 0 : index
    %194 = vector.load %arg8[%c1_99, %c0_100, %c0_101] : memref<5x8x8xbf16, #tpu.memory_space<vmem>>, vector<1x8x8xbf16>
    %195 = vector.shape_cast %194 : vector<1x8x8xbf16> to vector<8x8xbf16>
    %cst_102 = arith.constant dense<0.000000e+00> : vector<8x120xf32>
    %196 = tpu.matmul %195, %193, %cst_102 {dimension_numbers = #tpu.dot_dimension_numbers<[1], [0], [0], [1], [0, 0, 1, 1], [], []>} : vector<8x8xbf16>, vector<8x120xbf16>, vector<8x120xf32> -> vector<8x120xf32>
    %197 = arith.addf %192, %196 : vector<8x120xf32>
    %198 = vector.extract_strided_slice %186 {offsets = [0, 22], sizes = [8, 120], strides = [1, 1]} : vector<8x164xbf16> to vector<8x120xbf16>
    %c2_103 = arith.constant 2 : index
    %c0_104 = arith.constant 0 : index
    %c0_105 = arith.constant 0 : index
    %199 = vector.load %arg8[%c2_103, %c0_104, %c0_105] : memref<5x8x8xbf16, #tpu.memory_space<vmem>>, vector<1x8x8xbf16>
    %200 = vector.shape_cast %199 : vector<1x8x8xbf16> to vector<8x8xbf16>
    %cst_106 = arith.constant dense<0.000000e+00> : vector<8x120xf32>
    %201 = tpu.matmul %200, %198, %cst_106 {dimension_numbers = #tpu.dot_dimension_numbers<[1], [0], [0], [1], [0, 0, 1, 1], [], []>} : vector<8x8xbf16>, vector<8x120xbf16>, vector<8x120xf32> -> vector<8x120xf32>
    %202 = arith.addf %197, %201 : vector<8x120xf32>
    %203 = vector.extract_strided_slice %186 {offsets = [0, 23], sizes = [8, 120], strides = [1, 1]} : vector<8x164xbf16> to vector<8x120xbf16>
    %c3_107 = arith.constant 3 : index
    %c0_108 = arith.constant 0 : index
    %c0_109 = arith.constant 0 : index
    %204 = vector.load %arg8[%c3_107, %c0_108, %c0_109] : memref<5x8x8xbf16, #tpu.memory_space<vmem>>, vector<1x8x8xbf16>
    %205 = vector.shape_cast %204 : vector<1x8x8xbf16> to vector<8x8xbf16>
    %cst_110 = arith.constant dense<0.000000e+00> : vector<8x120xf32>
    %206 = tpu.matmul %205, %203, %cst_110 {dimension_numbers = #tpu.dot_dimension_numbers<[1], [0], [0], [1], [0, 0, 1, 1], [], []>} : vector<8x8xbf16>, vector<8x120xbf16>, vector<8x120xf32> -> vector<8x120xf32>
    %207 = arith.addf %202, %206 : vector<8x120xf32>
    %208 = vector.extract_strided_slice %186 {offsets = [0, 24], sizes = [8, 120], strides = [1, 1]} : vector<8x164xbf16> to vector<8x120xbf16>
    %c4_111 = arith.constant 4 : index
    %c0_112 = arith.constant 0 : index
    %c0_113 = arith.constant 0 : index
    %209 = vector.load %arg8[%c4_111, %c0_112, %c0_113] : memref<5x8x8xbf16, #tpu.memory_space<vmem>>, vector<1x8x8xbf16>
    %210 = vector.shape_cast %209 : vector<1x8x8xbf16> to vector<8x8xbf16>
    %cst_114 = arith.constant dense<0.000000e+00> : vector<8x120xf32>
    %211 = tpu.matmul %210, %208, %cst_114 {dimension_numbers = #tpu.dot_dimension_numbers<[1], [0], [0], [1], [0, 0, 1, 1], [], []>} : vector<8x8xbf16>, vector<8x120xbf16>, vector<8x120xf32> -> vector<8x120xf32>
    %212 = arith.addf %207, %211 : vector<8x120xf32>
    %c0_115 = arith.constant 0 : index
    %c0_116 = arith.constant 0 : index
    %213 = vector.load %arg9[%c0_115, %c0_116] : memref<8x1xf32, #tpu.memory_space<vmem>>, vector<8x1xf32>
    %214 = vector.broadcast %213 : vector<8x1xf32> to vector<8x120xf32>
    %215 = arith.addf %212, %214 : vector<8x120xf32>
    %cst_117 = arith.constant 0.000000e+00 : f32
    %216 = vector.broadcast %cst_117 : f32 to vector<8x120xf32>
    %217 = arith.maximumf %215, %216 : vector<8x120xf32>
    %c0_118 = arith.constant 0 : index
    %c0_119 = arith.constant 0 : index
    %218 = vector.load %arg12[%c0_118, %c0_119] : memref<1x120xf32, #tpu.memory_space<vmem>>, vector<1x120xf32>
    %219 = vector.broadcast %218 : vector<1x120xf32> to vector<8x120xf32>
    %220 = arith.mulf %217, %219 : vector<8x120xf32>
    %cst_120 = arith.constant 0.000000e+00 : f32
    %221 = vector.broadcast %cst_120 : f32 to vector<8x22xf32>
    %c0_121 = arith.constant 0 : index
    %c0_122 = arith.constant 0 : index
    %222 = vector.load %arg33[%c0_121, %c0_122] : memref<8x164xf32, #tpu.memory_space<vmem>>, vector<8x22xf32>
    tpu.vector_store %arg33[%c0_121, %c0_122], %221 {strides = array<i32>} : memref<8x164xf32, #tpu.memory_space<vmem>>, vector<8x22xf32>,
    %cst_123 = arith.constant 0.000000e+00 : f32
    %223 = vector.broadcast %cst_123 : f32 to vector<8x22xf32>
    %c0_124 = arith.constant 0 : index
    %c142 = arith.constant 142 : index
    %224 = vector.load %arg33[%c0_124, %c142] : memref<8x164xf32, #tpu.memory_space<vmem>>, vector<8x22xf32>
    tpu.vector_store %arg33[%c0_124, %c142], %223 {strides = array<i32>} : memref<8x164xf32, #tpu.memory_space<vmem>>, vector<8x22xf32>,
    %c0_125 = arith.constant 0 : index
    %c22 = arith.constant 22 : index
    %225 = vector.load %arg33[%c0_125, %c22] : memref<8x164xf32, #tpu.memory_space<vmem>>, vector<8x120xf32>
    tpu.vector_store %arg33[%c0_125, %c22], %220 {strides = array<i32>} : memref<8x164xf32, #tpu.memory_space<vmem>>, vector<8x120xf32>,
    %cst_126 = arith.constant 0.000000e+00 : f32
    %226 = vector.broadcast %cst_126 : f32 to vector<8x120xf32>
    %c0_127 = arith.constant 0 : index
    %c0_128 = arith.constant 0 : index
    %c0_129 = arith.constant 0 : index
    %227 = vector.load %arg10[%c0_127, %c0_128, %c0_129] : memref<9x8x1xf32, #tpu.memory_space<vmem>>, vector<1x8x1xf32>
    %228 = vector.shape_cast %227 : vector<1x8x1xf32> to vector<8x1xf32>
    %c0_130 = arith.constant 0 : index
    %c1_131 = arith.constant 1 : index
    %229 = vector.load %arg33[%c0_130, %c1_131] : memref<8x164xf32, #tpu.memory_space<vmem>>, vector<8x120xf32>
    %230 = vector.broadcast %228 : vector<8x1xf32> to vector<8x120xf32>
    %231 = arith.mulf %230, %229 : vector<8x120xf32>
    %232 = arith.addf %226, %231 : vector<8x120xf32>
    %c1_132 = arith.constant 1 : index
    %c0_133 = arith.constant 0 : index
    %c0_134 = arith.constant 0 : index
    %233 = vector.load %arg10[%c1_132, %c0_133, %c0_134] : memref<9x8x1xf32, #tpu.memory_space<vmem>>, vector<1x8x1xf32>
    %234 = vector.shape_cast %233 : vector<1x8x1xf32> to vector<8x1xf32>
    %c0_135 = arith.constant 0 : index
    %c2_136 = arith.constant 2 : index
    %235 = vector.load %arg33[%c0_135, %c2_136] : memref<8x164xf32, #tpu.memory_space<vmem>>, vector<8x120xf32>
    %236 = vector.broadcast %234 : vector<8x1xf32> to vector<8x120xf32>
    %237 = arith.mulf %236, %235 : vector<8x120xf32>
    %238 = arith.addf %232, %237 : vector<8x120xf32>
    %c2_137 = arith.constant 2 : index
    %c0_138 = arith.constant 0 : index
    %c0_139 = arith.constant 0 : index
    %239 = vector.load %arg10[%c2_137, %c0_138, %c0_139] : memref<9x8x1xf32, #tpu.memory_space<vmem>>, vector<1x8x1xf32>
    %240 = vector.shape_cast %239 : vector<1x8x1xf32> to vector<8x1xf32>
    %c0_140 = arith.constant 0 : index
    %c3_141 = arith.constant 3 : index
    %241 = vector.load %arg33[%c0_140, %c3_141] : memref<8x164xf32, #tpu.memory_space<vmem>>, vector<8x120xf32>
    %242 = vector.broadcast %240 : vector<8x1xf32> to vector<8x120xf32>
    %243 = arith.mulf %242, %241 : vector<8x120xf32>
    %244 = arith.addf %238, %243 : vector<8x120xf32>
    %c3_142 = arith.constant 3 : index
    %c0_143 = arith.constant 0 : index
    %c0_144 = arith.constant 0 : index
    %245 = vector.load %arg10[%c3_142, %c0_143, %c0_144] : memref<9x8x1xf32, #tpu.memory_space<vmem>>, vector<1x8x1xf32>
    %246 = vector.shape_cast %245 : vector<1x8x1xf32> to vector<8x1xf32>
    %c0_145 = arith.constant 0 : index
    %c21 = arith.constant 21 : index
    %247 = vector.load %arg33[%c0_145, %c21] : memref<8x164xf32, #tpu.memory_space<vmem>>, vector<8x120xf32>
    %248 = vector.broadcast %246 : vector<8x1xf32> to vector<8x120xf32>
    %249 = arith.mulf %248, %247 : vector<8x120xf32>
    %250 = arith.addf %244, %249 : vector<8x120xf32>
    %c4_146 = arith.constant 4 : index
    %c0_147 = arith.constant 0 : index
    %c0_148 = arith.constant 0 : index
    %251 = vector.load %arg10[%c4_146, %c0_147, %c0_148] : memref<9x8x1xf32, #tpu.memory_space<vmem>>, vector<1x8x1xf32>
    %252 = vector.shape_cast %251 : vector<1x8x1xf32> to vector<8x1xf32>
    %c0_149 = arith.constant 0 : index
    %c22_150 = arith.constant 22 : index
    %253 = vector.load %arg33[%c0_149, %c22_150] : memref<8x164xf32, #tpu.memory_space<vmem>>, vector<8x120xf32>
    %254 = vector.broadcast %252 : vector<8x1xf32> to vector<8x120xf32>
    %255 = arith.mulf %254, %253 : vector<8x120xf32>
    %256 = arith.addf %250, %255 : vector<8x120xf32>
    %c5_151 = arith.constant 5 : index
    %c0_152 = arith.constant 0 : index
    %c0_153 = arith.constant 0 : index
    %257 = vector.load %arg10[%c5_151, %c0_152, %c0_153] : memref<9x8x1xf32, #tpu.memory_space<vmem>>, vector<1x8x1xf32>
    %258 = vector.shape_cast %257 : vector<1x8x1xf32> to vector<8x1xf32>
    %c0_154 = arith.constant 0 : index
    %c23 = arith.constant 23 : index
    %259 = vector.load %arg33[%c0_154, %c23] : memref<8x164xf32, #tpu.memory_space<vmem>>, vector<8x120xf32>
    %260 = vector.broadcast %258 : vector<8x1xf32> to vector<8x120xf32>
    %261 = arith.mulf %260, %259 : vector<8x120xf32>
    %262 = arith.addf %256, %261 : vector<8x120xf32>
    %c6_155 = arith.constant 6 : index
    %c0_156 = arith.constant 0 : index
    %c0_157 = arith.constant 0 : index
    %263 = vector.load %arg10[%c6_155, %c0_156, %c0_157] : memref<9x8x1xf32, #tpu.memory_space<vmem>>, vector<1x8x1xf32>
    %264 = vector.shape_cast %263 : vector<1x8x1xf32> to vector<8x1xf32>
    %c0_158 = arith.constant 0 : index
    %c41 = arith.constant 41 : index
    %265 = vector.load %arg33[%c0_158, %c41] : memref<8x164xf32, #tpu.memory_space<vmem>>, vector<8x120xf32>
    %266 = vector.broadcast %264 : vector<8x1xf32> to vector<8x120xf32>
    %267 = arith.mulf %266, %265 : vector<8x120xf32>
    %268 = arith.addf %262, %267 : vector<8x120xf32>
    %c7_159 = arith.constant 7 : index
    %c0_160 = arith.constant 0 : index
    %c0_161 = arith.constant 0 : index
    %269 = vector.load %arg10[%c7_159, %c0_160, %c0_161] : memref<9x8x1xf32, #tpu.memory_space<vmem>>, vector<1x8x1xf32>
    %270 = vector.shape_cast %269 : vector<1x8x1xf32> to vector<8x1xf32>
    %c0_162 = arith.constant 0 : index
    %c42 = arith.constant 42 : index
    %271 = vector.load %arg33[%c0_162, %c42] : memref<8x164xf32, #tpu.memory_space<vmem>>, vector<8x120xf32>
    %272 = vector.broadcast %270 : vector<8x1xf32> to vector<8x120xf32>
    %273 = arith.mulf %272, %271 : vector<8x120xf32>
    %274 = arith.addf %268, %273 : vector<8x120xf32>
    %c8_163 = arith.constant 8 : index
    %c0_164 = arith.constant 0 : index
    %c0_165 = arith.constant 0 : index
    %275 = vector.load %arg10[%c8_163, %c0_164, %c0_165] : memref<9x8x1xf32, #tpu.memory_space<vmem>>, vector<1x8x1xf32>
    %276 = vector.shape_cast %275 : vector<1x8x1xf32> to vector<8x1xf32>
    %c0_166 = arith.constant 0 : index
    %c43 = arith.constant 43 : index
    %277 = vector.load %arg33[%c0_166, %c43] : memref<8x164xf32, #tpu.memory_space<vmem>>, vector<8x120xf32>
    %278 = vector.broadcast %276 : vector<8x1xf32> to vector<8x120xf32>
    %279 = arith.mulf %278, %277 : vector<8x120xf32>
    %280 = arith.addf %274, %279 : vector<8x120xf32>
    %c0_167 = arith.constant 0 : index
    %c0_168 = arith.constant 0 : index
    %281 = vector.load %arg11[%c0_167, %c0_168] : memref<8x1xf32, #tpu.memory_space<vmem>>, vector<8x1xf32>
    %282 = vector.broadcast %281 : vector<8x1xf32> to vector<8x120xf32>
    %283 = arith.addf %280, %282 : vector<8x120xf32>
    %284 = vector.extract_strided_slice %283 {offsets = [0, 0], sizes = [8, 119], strides = [1, 1]} : vector<8x120xf32> to vector<8x119xf32>
    %285 = vector.extract_strided_slice %283 {offsets = [0, 1], sizes = [8, 119], strides = [1, 1]} : vector<8x120xf32> to vector<8x119xf32>
    %286 = arith.maximumf %284, %285 : vector<8x119xf32>
    %c0_169 = arith.constant 0 : index
    %c0_170 = arith.constant 0 : index
    %287 = vector.load %arg13[%c0_169, %c0_170] : memref<119x100xf32, #tpu.memory_space<vmem>>, vector<119x100xf32>
    %cst_171 = arith.constant dense<0.000000e+00> : vector<8x100xf32>
    %288 = tpu.matmul %286, %287, %cst_171 {dimension_numbers = #tpu.dot_dimension_numbers<[1], [0], [0], [1], [0, 0, 1, 1], [], []>} : vector<8x119xf32>, vector<119x100xf32>, vector<8x100xf32> -> vector<8x100xf32>
    %c0_172 = arith.constant 0 : index
    %c0_173 = arith.constant 0 : index
    %289 = vector.load %arg30[%c0_172, %c0_173] : memref<8x100xf32, #tpu.memory_space<vmem>>, vector<8x100xf32>
    tpu.vector_store %arg30[%c0_172, %c0_173], %288 {strides = array<i32>} : memref<8x100xf32, #tpu.memory_space<vmem>>, vector<8x100xf32>,
    %c0_174 = arith.constant 0 : index
    %c0_175 = arith.constant 0 : index
    %290 = vector.load %arg30[%c0_174, %c0_175] : memref<8x100xf32, #tpu.memory_space<vmem>>, vector<8x100xf32>
    %291 = arith.truncf %290 : vector<8x100xf32> to vector<8x100xbf16>
    %cst_176 = arith.constant 0.000000e+00 : f32
    %292 = vector.broadcast %cst_176 : f32 to vector<8x72xf32>
    %293 = vector.extract_strided_slice %291 {offsets = [0, 12], sizes = [8, 72], strides = [1, 1]} : vector<8x100xbf16> to vector<8x72xbf16>
    %c0_177 = arith.constant 0 : index
    %c0_178 = arith.constant 0 : index
    %c0_179 = arith.constant 0 : index
    %294 = vector.load %arg14[%c0_177, %c0_178, %c0_179] : memref<5x8x8xbf16, #tpu.memory_space<vmem>>, vector<1x8x8xbf16>
    %295 = vector.shape_cast %294 : vector<1x8x8xbf16> to vector<8x8xbf16>
    %cst_180 = arith.constant dense<0.000000e+00> : vector<8x72xf32>
    %296 = tpu.matmul %295, %293, %cst_180 {dimension_numbers = #tpu.dot_dimension_numbers<[1], [0], [0], [1], [0, 0, 1, 1], [], []>} : vector<8x8xbf16>, vector<8x72xbf16>, vector<8x72xf32> -> vector<8x72xf32>
    %297 = arith.addf %292, %296 : vector<8x72xf32>
    %298 = vector.extract_strided_slice %291 {offsets = [0, 13], sizes = [8, 72], strides = [1, 1]} : vector<8x100xbf16> to vector<8x72xbf16>
    %c1_181 = arith.constant 1 : index
    %c0_182 = arith.constant 0 : index
    %c0_183 = arith.constant 0 : index
    %299 = vector.load %arg14[%c1_181, %c0_182, %c0_183] : memref<5x8x8xbf16, #tpu.memory_space<vmem>>, vector<1x8x8xbf16>
    %300 = vector.shape_cast %299 : vector<1x8x8xbf16> to vector<8x8xbf16>
    %cst_184 = arith.constant dense<0.000000e+00> : vector<8x72xf32>
    %301 = tpu.matmul %300, %298, %cst_184 {dimension_numbers = #tpu.dot_dimension_numbers<[1], [0], [0], [1], [0, 0, 1, 1], [], []>} : vector<8x8xbf16>, vector<8x72xbf16>, vector<8x72xf32> -> vector<8x72xf32>
    %302 = arith.addf %297, %301 : vector<8x72xf32>
    %303 = vector.extract_strided_slice %291 {offsets = [0, 14], sizes = [8, 72], strides = [1, 1]} : vector<8x100xbf16> to vector<8x72xbf16>
    %c2_185 = arith.constant 2 : index
    %c0_186 = arith.constant 0 : index
    %c0_187 = arith.constant 0 : index
    %304 = vector.load %arg14[%c2_185, %c0_186, %c0_187] : memref<5x8x8xbf16, #tpu.memory_space<vmem>>, vector<1x8x8xbf16>
    %305 = vector.shape_cast %304 : vector<1x8x8xbf16> to vector<8x8xbf16>
    %cst_188 = arith.constant dense<0.000000e+00> : vector<8x72xf32>
    %306 = tpu.matmul %305, %303, %cst_188 {dimension_numbers = #tpu.dot_dimension_numbers<[1], [0], [0], [1], [0, 0, 1, 1], [], []>} : vector<8x8xbf16>, vector<8x72xbf16>, vector<8x72xf32> -> vector<8x72xf32>
    %307 = arith.addf %302, %306 : vector<8x72xf32>
    %308 = vector.extract_strided_slice %291 {offsets = [0, 15], sizes = [8, 72], strides = [1, 1]} : vector<8x100xbf16> to vector<8x72xbf16>
    %c3_189 = arith.constant 3 : index
    %c0_190 = arith.constant 0 : index
    %c0_191 = arith.constant 0 : index
    %309 = vector.load %arg14[%c3_189, %c0_190, %c0_191] : memref<5x8x8xbf16, #tpu.memory_space<vmem>>, vector<1x8x8xbf16>
    %310 = vector.shape_cast %309 : vector<1x8x8xbf16> to vector<8x8xbf16>
    %cst_192 = arith.constant dense<0.000000e+00> : vector<8x72xf32>
    %311 = tpu.matmul %310, %308, %cst_192 {dimension_numbers = #tpu.dot_dimension_numbers<[1], [0], [0], [1], [0, 0, 1, 1], [], []>} : vector<8x8xbf16>, vector<8x72xbf16>, vector<8x72xf32> -> vector<8x72xf32>
    %312 = arith.addf %307, %311 : vector<8x72xf32>
    %313 = vector.extract_strided_slice %291 {offsets = [0, 16], sizes = [8, 72], strides = [1, 1]} : vector<8x100xbf16> to vector<8x72xbf16>
    %c4_193 = arith.constant 4 : index
    %c0_194 = arith.constant 0 : index
    %c0_195 = arith.constant 0 : index
    %314 = vector.load %arg14[%c4_193, %c0_194, %c0_195] : memref<5x8x8xbf16, #tpu.memory_space<vmem>>, vector<1x8x8xbf16>
    %315 = vector.shape_cast %314 : vector<1x8x8xbf16> to vector<8x8xbf16>
    %cst_196 = arith.constant dense<0.000000e+00> : vector<8x72xf32>
    %316 = tpu.matmul %315, %313, %cst_196 {dimension_numbers = #tpu.dot_dimension_numbers<[1], [0], [0], [1], [0, 0, 1, 1], [], []>} : vector<8x8xbf16>, vector<8x72xbf16>, vector<8x72xf32> -> vector<8x72xf32>
    %317 = arith.addf %312, %316 : vector<8x72xf32>
    %c0_197 = arith.constant 0 : index
    %c0_198 = arith.constant 0 : index
    %318 = vector.load %arg15[%c0_197, %c0_198] : memref<8x1xf32, #tpu.memory_space<vmem>>, vector<8x1xf32>
    %319 = vector.broadcast %318 : vector<8x1xf32> to vector<8x72xf32>
    %320 = arith.addf %317, %319 : vector<8x72xf32>
    %cst_199 = arith.constant 0.000000e+00 : f32
    %321 = vector.broadcast %cst_199 : f32 to vector<8x72xf32>
    %322 = arith.maximumf %320, %321 : vector<8x72xf32>
    %c0_200 = arith.constant 0 : index
    %c0_201 = arith.constant 0 : index
    %323 = vector.load %arg18[%c0_200, %c0_201] : memref<1x72xf32, #tpu.memory_space<vmem>>, vector<1x72xf32>
    %324 = vector.broadcast %323 : vector<1x72xf32> to vector<8x72xf32>
    %325 = arith.mulf %322, %324 : vector<8x72xf32>
    %cst_202 = arith.constant 0.000000e+00 : f32
    %326 = vector.broadcast %cst_202 : f32 to vector<8x14xf32>
    %c0_203 = arith.constant 0 : index
    %c0_204 = arith.constant 0 : index
    %327 = vector.load %arg34[%c0_203, %c0_204] : memref<8x100xf32, #tpu.memory_space<vmem>>, vector<8x14xf32>
    tpu.vector_store %arg34[%c0_203, %c0_204], %326 {strides = array<i32>} : memref<8x100xf32, #tpu.memory_space<vmem>>, vector<8x14xf32>,
    %cst_205 = arith.constant 0.000000e+00 : f32
    %328 = vector.broadcast %cst_205 : f32 to vector<8x14xf32>
    %c0_206 = arith.constant 0 : index
    %c86 = arith.constant 86 : index
    %329 = vector.load %arg34[%c0_206, %c86] : memref<8x100xf32, #tpu.memory_space<vmem>>, vector<8x14xf32>
    tpu.vector_store %arg34[%c0_206, %c86], %328 {strides = array<i32>} : memref<8x100xf32, #tpu.memory_space<vmem>>, vector<8x14xf32>,
    %c0_207 = arith.constant 0 : index
    %c14_208 = arith.constant 14 : index
    %330 = vector.load %arg34[%c0_207, %c14_208] : memref<8x100xf32, #tpu.memory_space<vmem>>, vector<8x72xf32>
    tpu.vector_store %arg34[%c0_207, %c14_208], %325 {strides = array<i32>} : memref<8x100xf32, #tpu.memory_space<vmem>>, vector<8x72xf32>,
    %cst_209 = arith.constant 0.000000e+00 : f32
    %331 = vector.broadcast %cst_209 : f32 to vector<8x72xf32>
    %c0_210 = arith.constant 0 : index
    %c0_211 = arith.constant 0 : index
    %c0_212 = arith.constant 0 : index
    %332 = vector.load %arg16[%c0_210, %c0_211, %c0_212] : memref<9x8x1xf32, #tpu.memory_space<vmem>>, vector<1x8x1xf32>
    %333 = vector.shape_cast %332 : vector<1x8x1xf32> to vector<8x1xf32>
    %c0_213 = arith.constant 0 : index
    %c1_214 = arith.constant 1 : index
    %334 = vector.load %arg34[%c0_213, %c1_214] : memref<8x100xf32, #tpu.memory_space<vmem>>, vector<8x72xf32>
    %335 = vector.broadcast %333 : vector<8x1xf32> to vector<8x72xf32>
    %336 = arith.mulf %335, %334 : vector<8x72xf32>
    %337 = arith.addf %331, %336 : vector<8x72xf32>
    %c1_215 = arith.constant 1 : index
    %c0_216 = arith.constant 0 : index
    %c0_217 = arith.constant 0 : index
    %338 = vector.load %arg16[%c1_215, %c0_216, %c0_217] : memref<9x8x1xf32, #tpu.memory_space<vmem>>, vector<1x8x1xf32>
    %339 = vector.shape_cast %338 : vector<1x8x1xf32> to vector<8x1xf32>
    %c0_218 = arith.constant 0 : index
    %c2_219 = arith.constant 2 : index
    %340 = vector.load %arg34[%c0_218, %c2_219] : memref<8x100xf32, #tpu.memory_space<vmem>>, vector<8x72xf32>
    %341 = vector.broadcast %339 : vector<8x1xf32> to vector<8x72xf32>
    %342 = arith.mulf %341, %340 : vector<8x72xf32>
    %343 = arith.addf %337, %342 : vector<8x72xf32>
    %c2_220 = arith.constant 2 : index
    %c0_221 = arith.constant 0 : index
    %c0_222 = arith.constant 0 : index
    %344 = vector.load %arg16[%c2_220, %c0_221, %c0_222] : memref<9x8x1xf32, #tpu.memory_space<vmem>>, vector<1x8x1xf32>
    %345 = vector.shape_cast %344 : vector<1x8x1xf32> to vector<8x1xf32>
    %c0_223 = arith.constant 0 : index
    %c3_224 = arith.constant 3 : index
    %346 = vector.load %arg34[%c0_223, %c3_224] : memref<8x100xf32, #tpu.memory_space<vmem>>, vector<8x72xf32>
    %347 = vector.broadcast %345 : vector<8x1xf32> to vector<8x72xf32>
    %348 = arith.mulf %347, %346 : vector<8x72xf32>
    %349 = arith.addf %343, %348 : vector<8x72xf32>
    %c3_225 = arith.constant 3 : index
    %c0_226 = arith.constant 0 : index
    %c0_227 = arith.constant 0 : index
    %350 = vector.load %arg16[%c3_225, %c0_226, %c0_227] : memref<9x8x1xf32, #tpu.memory_space<vmem>>, vector<1x8x1xf32>
    %351 = vector.shape_cast %350 : vector<1x8x1xf32> to vector<8x1xf32>
    %c0_228 = arith.constant 0 : index
    %c13_229 = arith.constant 13 : index
    %352 = vector.load %arg34[%c0_228, %c13_229] : memref<8x100xf32, #tpu.memory_space<vmem>>, vector<8x72xf32>
    %353 = vector.broadcast %351 : vector<8x1xf32> to vector<8x72xf32>
    %354 = arith.mulf %353, %352 : vector<8x72xf32>
    %355 = arith.addf %349, %354 : vector<8x72xf32>
    %c4_230 = arith.constant 4 : index
    %c0_231 = arith.constant 0 : index
    %c0_232 = arith.constant 0 : index
    %356 = vector.load %arg16[%c4_230, %c0_231, %c0_232] : memref<9x8x1xf32, #tpu.memory_space<vmem>>, vector<1x8x1xf32>
    %357 = vector.shape_cast %356 : vector<1x8x1xf32> to vector<8x1xf32>
    %c0_233 = arith.constant 0 : index
    %c14_234 = arith.constant 14 : index
    %358 = vector.load %arg34[%c0_233, %c14_234] : memref<8x100xf32, #tpu.memory_space<vmem>>, vector<8x72xf32>
    %359 = vector.broadcast %357 : vector<8x1xf32> to vector<8x72xf32>
    %360 = arith.mulf %359, %358 : vector<8x72xf32>
    %361 = arith.addf %355, %360 : vector<8x72xf32>
    %c5_235 = arith.constant 5 : index
    %c0_236 = arith.constant 0 : index
    %c0_237 = arith.constant 0 : index
    %362 = vector.load %arg16[%c5_235, %c0_236, %c0_237] : memref<9x8x1xf32, #tpu.memory_space<vmem>>, vector<1x8x1xf32>
    %363 = vector.shape_cast %362 : vector<1x8x1xf32> to vector<8x1xf32>
    %c0_238 = arith.constant 0 : index
    %c15 = arith.constant 15 : index
    %364 = vector.load %arg34[%c0_238, %c15] : memref<8x100xf32, #tpu.memory_space<vmem>>, vector<8x72xf32>
    %365 = vector.broadcast %363 : vector<8x1xf32> to vector<8x72xf32>
    %366 = arith.mulf %365, %364 : vector<8x72xf32>
    %367 = arith.addf %361, %366 : vector<8x72xf32>
    %c6_239 = arith.constant 6 : index
    %c0_240 = arith.constant 0 : index
    %c0_241 = arith.constant 0 : index
    %368 = vector.load %arg16[%c6_239, %c0_240, %c0_241] : memref<9x8x1xf32, #tpu.memory_space<vmem>>, vector<1x8x1xf32>
    %369 = vector.shape_cast %368 : vector<1x8x1xf32> to vector<8x1xf32>
    %c0_242 = arith.constant 0 : index
    %c25 = arith.constant 25 : index
    %370 = vector.load %arg34[%c0_242, %c25] : memref<8x100xf32, #tpu.memory_space<vmem>>, vector<8x72xf32>
    %371 = vector.broadcast %369 : vector<8x1xf32> to vector<8x72xf32>
    %372 = arith.mulf %371, %370 : vector<8x72xf32>
    %373 = arith.addf %367, %372 : vector<8x72xf32>
    %c7_243 = arith.constant 7 : index
    %c0_244 = arith.constant 0 : index
    %c0_245 = arith.constant 0 : index
    %374 = vector.load %arg16[%c7_243, %c0_244, %c0_245] : memref<9x8x1xf32, #tpu.memory_space<vmem>>, vector<1x8x1xf32>
    %375 = vector.shape_cast %374 : vector<1x8x1xf32> to vector<8x1xf32>
    %c0_246 = arith.constant 0 : index
    %c26 = arith.constant 26 : index
    %376 = vector.load %arg34[%c0_246, %c26] : memref<8x100xf32, #tpu.memory_space<vmem>>, vector<8x72xf32>
    %377 = vector.broadcast %375 : vector<8x1xf32> to vector<8x72xf32>
    %378 = arith.mulf %377, %376 : vector<8x72xf32>
    %379 = arith.addf %373, %378 : vector<8x72xf32>
    %c8_247 = arith.constant 8 : index
    %c0_248 = arith.constant 0 : index
    %c0_249 = arith.constant 0 : index
    %380 = vector.load %arg16[%c8_247, %c0_248, %c0_249] : memref<9x8x1xf32, #tpu.memory_space<vmem>>, vector<1x8x1xf32>
    %381 = vector.shape_cast %380 : vector<1x8x1xf32> to vector<8x1xf32>
    %c0_250 = arith.constant 0 : index
    %c27 = arith.constant 27 : index
    %382 = vector.load %arg34[%c0_250, %c27] : memref<8x100xf32, #tpu.memory_space<vmem>>, vector<8x72xf32>
    %383 = vector.broadcast %381 : vector<8x1xf32> to vector<8x72xf32>
    %384 = arith.mulf %383, %382 : vector<8x72xf32>
    %385 = arith.addf %379, %384 : vector<8x72xf32>
    %c0_251 = arith.constant 0 : index
    %c0_252 = arith.constant 0 : index
    %386 = vector.load %arg17[%c0_251, %c0_252] : memref<8x1xf32, #tpu.memory_space<vmem>>, vector<8x1xf32>
    %387 = vector.broadcast %386 : vector<8x1xf32> to vector<8x72xf32>
    %388 = arith.addf %385, %387 : vector<8x72xf32>
    %389 = vector.extract_strided_slice %388 {offsets = [0, 0], sizes = [8, 71], strides = [1, 1]} : vector<8x72xf32> to vector<8x71xf32>
    %390 = vector.extract_strided_slice %388 {offsets = [0, 1], sizes = [8, 71], strides = [1, 1]} : vector<8x72xf32> to vector<8x71xf32>
    %391 = arith.maximumf %389, %390 : vector<8x71xf32>
    %c0_253 = arith.constant 0 : index
    %c0_254 = arith.constant 0 : index
    %392 = vector.load %arg19[%c0_253, %c0_254] : memref<71x68xf32, #tpu.memory_space<vmem>>, vector<71x68xf32>
    %cst_255 = arith.constant dense<0.000000e+00> : vector<8x68xf32>
    %393 = tpu.matmul %391, %392, %cst_255 {dimension_numbers = #tpu.dot_dimension_numbers<[1], [0], [0], [1], [0, 0, 1, 1], [], []>} : vector<8x71xf32>, vector<71x68xf32>, vector<8x68xf32> -> vector<8x68xf32>
    %c0_256 = arith.constant 0 : index
    %c0_257 = arith.constant 0 : index
    %394 = vector.load %arg31[%c0_256, %c0_257] : memref<8x68xf32, #tpu.memory_space<vmem>>, vector<8x68xf32>
    tpu.vector_store %arg31[%c0_256, %c0_257], %393 {strides = array<i32>} : memref<8x68xf32, #tpu.memory_space<vmem>>, vector<8x68xf32>,
    %c0_258 = arith.constant 0 : index
    %c0_259 = arith.constant 0 : index
    %395 = vector.load %arg31[%c0_258, %c0_259] : memref<8x68xf32, #tpu.memory_space<vmem>>, vector<8x68xf32>
    %396 = arith.truncf %395 : vector<8x68xf32> to vector<8x68xbf16>
    %cst_260 = arith.constant 0.000000e+00 : f32
    %397 = vector.broadcast %cst_260 : f32 to vector<16x48xf32>
    %398 = vector.extract_strided_slice %396 {offsets = [0, 8], sizes = [8, 48], strides = [1, 1]} : vector<8x68xbf16> to vector<8x48xbf16>
    %c0_261 = arith.constant 0 : index
    %c0_262 = arith.constant 0 : index
    %c0_263 = arith.constant 0 : index
    %399 = vector.load %arg20[%c0_261, %c0_262, %c0_263] : memref<5x16x8xbf16, #tpu.memory_space<vmem>>, vector<1x16x8xbf16>
    %400 = vector.shape_cast %399 : vector<1x16x8xbf16> to vector<16x8xbf16>
    %cst_264 = arith.constant dense<0.000000e+00> : vector<16x48xf32>
    %401 = tpu.matmul %400, %398, %cst_264 {dimension_numbers = #tpu.dot_dimension_numbers<[1], [0], [0], [1], [0, 0, 1, 1], [], []>} : vector<16x8xbf16>, vector<8x48xbf16>, vector<16x48xf32> -> vector<16x48xf32>
    %402 = arith.addf %397, %401 : vector<16x48xf32>
    %403 = vector.extract_strided_slice %396 {offsets = [0, 9], sizes = [8, 48], strides = [1, 1]} : vector<8x68xbf16> to vector<8x48xbf16>
    %c1_265 = arith.constant 1 : index
    %c0_266 = arith.constant 0 : index
    %c0_267 = arith.constant 0 : index
    %404 = vector.load %arg20[%c1_265, %c0_266, %c0_267] : memref<5x16x8xbf16, #tpu.memory_space<vmem>>, vector<1x16x8xbf16>
    %405 = vector.shape_cast %404 : vector<1x16x8xbf16> to vector<16x8xbf16>
    %cst_268 = arith.constant dense<0.000000e+00> : vector<16x48xf32>
    %406 = tpu.matmul %405, %403, %cst_268 {dimension_numbers = #tpu.dot_dimension_numbers<[1], [0], [0], [1], [0, 0, 1, 1], [], []>} : vector<16x8xbf16>, vector<8x48xbf16>, vector<16x48xf32> -> vector<16x48xf32>
    %407 = arith.addf %402, %406 : vector<16x48xf32>
    %408 = vector.extract_strided_slice %396 {offsets = [0, 10], sizes = [8, 48], strides = [1, 1]} : vector<8x68xbf16> to vector<8x48xbf16>
    %c2_269 = arith.constant 2 : index
    %c0_270 = arith.constant 0 : index
    %c0_271 = arith.constant 0 : index
    %409 = vector.load %arg20[%c2_269, %c0_270, %c0_271] : memref<5x16x8xbf16, #tpu.memory_space<vmem>>, vector<1x16x8xbf16>
    %410 = vector.shape_cast %409 : vector<1x16x8xbf16> to vector<16x8xbf16>
    %cst_272 = arith.constant dense<0.000000e+00> : vector<16x48xf32>
    %411 = tpu.matmul %410, %408, %cst_272 {dimension_numbers = #tpu.dot_dimension_numbers<[1], [0], [0], [1], [0, 0, 1, 1], [], []>} : vector<16x8xbf16>, vector<8x48xbf16>, vector<16x48xf32> -> vector<16x48xf32>
    %412 = arith.addf %407, %411 : vector<16x48xf32>
    %413 = vector.extract_strided_slice %396 {offsets = [0, 11], sizes = [8, 48], strides = [1, 1]} : vector<8x68xbf16> to vector<8x48xbf16>
    %c3_273 = arith.constant 3 : index
    %c0_274 = arith.constant 0 : index
    %c0_275 = arith.constant 0 : index
    %414 = vector.load %arg20[%c3_273, %c0_274, %c0_275] : memref<5x16x8xbf16, #tpu.memory_space<vmem>>, vector<1x16x8xbf16>
    %415 = vector.shape_cast %414 : vector<1x16x8xbf16> to vector<16x8xbf16>
    %cst_276 = arith.constant dense<0.000000e+00> : vector<16x48xf32>
    %416 = tpu.matmul %415, %413, %cst_276 {dimension_numbers = #tpu.dot_dimension_numbers<[1], [0], [0], [1], [0, 0, 1, 1], [], []>} : vector<16x8xbf16>, vector<8x48xbf16>, vector<16x48xf32> -> vector<16x48xf32>
    %417 = arith.addf %412, %416 : vector<16x48xf32>
    %418 = vector.extract_strided_slice %396 {offsets = [0, 12], sizes = [8, 48], strides = [1, 1]} : vector<8x68xbf16> to vector<8x48xbf16>
    %c4_277 = arith.constant 4 : index
    %c0_278 = arith.constant 0 : index
    %c0_279 = arith.constant 0 : index
    %419 = vector.load %arg20[%c4_277, %c0_278, %c0_279] : memref<5x16x8xbf16, #tpu.memory_space<vmem>>, vector<1x16x8xbf16>
    %420 = vector.shape_cast %419 : vector<1x16x8xbf16> to vector<16x8xbf16>
    %cst_280 = arith.constant dense<0.000000e+00> : vector<16x48xf32>
    %421 = tpu.matmul %420, %418, %cst_280 {dimension_numbers = #tpu.dot_dimension_numbers<[1], [0], [0], [1], [0, 0, 1, 1], [], []>} : vector<16x8xbf16>, vector<8x48xbf16>, vector<16x48xf32> -> vector<16x48xf32>
    %422 = arith.addf %417, %421 : vector<16x48xf32>
    %c0_281 = arith.constant 0 : index
    %c0_282 = arith.constant 0 : index
    %423 = vector.load %arg21[%c0_281, %c0_282] : memref<16x1xf32, #tpu.memory_space<vmem>>, vector<16x1xf32>
    %424 = vector.broadcast %423 : vector<16x1xf32> to vector<16x48xf32>
    %425 = arith.addf %422, %424 : vector<16x48xf32>
    %cst_283 = arith.constant 0.000000e+00 : f32
    %426 = vector.broadcast %cst_283 : f32 to vector<16x48xf32>
    %427 = arith.maximumf %425, %426 : vector<16x48xf32>
    %c0_284 = arith.constant 0 : index
    %c0_285 = arith.constant 0 : index
    %428 = vector.load %arg24[%c0_284, %c0_285] : memref<1x48xf32, #tpu.memory_space<vmem>>, vector<1x48xf32>
    %429 = vector.broadcast %428 : vector<1x48xf32> to vector<16x48xf32>
    %430 = arith.mulf %427, %429 : vector<16x48xf32>
    %cst_286 = arith.constant 0.000000e+00 : f32
    %431 = vector.broadcast %cst_286 : f32 to vector<16x10xf32>
    %c0_287 = arith.constant 0 : index
    %c0_288 = arith.constant 0 : index
    %432 = vector.load %arg35[%c0_287, %c0_288] : memref<16x68xf32, #tpu.memory_space<vmem>>, vector<16x10xf32>
    tpu.vector_store %arg35[%c0_287, %c0_288], %431 {strides = array<i32>} : memref<16x68xf32, #tpu.memory_space<vmem>>, vector<16x10xf32>,
    %cst_289 = arith.constant 0.000000e+00 : f32
    %433 = vector.broadcast %cst_289 : f32 to vector<16x10xf32>
    %c0_290 = arith.constant 0 : index
    %c58 = arith.constant 58 : index
    %434 = vector.load %arg35[%c0_290, %c58] : memref<16x68xf32, #tpu.memory_space<vmem>>, vector<16x10xf32>
    tpu.vector_store %arg35[%c0_290, %c58], %433 {strides = array<i32>} : memref<16x68xf32, #tpu.memory_space<vmem>>, vector<16x10xf32>,
    %c0_291 = arith.constant 0 : index
    %c10_292 = arith.constant 10 : index
    %435 = vector.load %arg35[%c0_291, %c10_292] : memref<16x68xf32, #tpu.memory_space<vmem>>, vector<16x48xf32>
    tpu.vector_store %arg35[%c0_291, %c10_292], %430 {strides = array<i32>} : memref<16x68xf32, #tpu.memory_space<vmem>>, vector<16x48xf32>,
    %cst_293 = arith.constant 0.000000e+00 : f32
    %436 = vector.broadcast %cst_293 : f32 to vector<16x48xf32>
    %c0_294 = arith.constant 0 : index
    %c0_295 = arith.constant 0 : index
    %c0_296 = arith.constant 0 : index
    %437 = vector.load %arg22[%c0_294, %c0_295, %c0_296] : memref<9x16x1xf32, #tpu.memory_space<vmem>>, vector<1x16x1xf32>
    %438 = vector.shape_cast %437 : vector<1x16x1xf32> to vector<16x1xf32>
    %c0_297 = arith.constant 0 : index
    %c1_298 = arith.constant 1 : index
    %439 = vector.load %arg35[%c0_297, %c1_298] : memref<16x68xf32, #tpu.memory_space<vmem>>, vector<16x48xf32>
    %440 = vector.broadcast %438 : vector<16x1xf32> to vector<16x48xf32>
    %441 = arith.mulf %440, %439 : vector<16x48xf32>
    %442 = arith.addf %436, %441 : vector<16x48xf32>
    %c1_299 = arith.constant 1 : index
    %c0_300 = arith.constant 0 : index
    %c0_301 = arith.constant 0 : index
    %443 = vector.load %arg22[%c1_299, %c0_300, %c0_301] : memref<9x16x1xf32, #tpu.memory_space<vmem>>, vector<1x16x1xf32>
    %444 = vector.shape_cast %443 : vector<1x16x1xf32> to vector<16x1xf32>
    %c0_302 = arith.constant 0 : index
    %c2_303 = arith.constant 2 : index
    %445 = vector.load %arg35[%c0_302, %c2_303] : memref<16x68xf32, #tpu.memory_space<vmem>>, vector<16x48xf32>
    %446 = vector.broadcast %444 : vector<16x1xf32> to vector<16x48xf32>
    %447 = arith.mulf %446, %445 : vector<16x48xf32>
    %448 = arith.addf %442, %447 : vector<16x48xf32>
    %c2_304 = arith.constant 2 : index
    %c0_305 = arith.constant 0 : index
    %c0_306 = arith.constant 0 : index
    %449 = vector.load %arg22[%c2_304, %c0_305, %c0_306] : memref<9x16x1xf32, #tpu.memory_space<vmem>>, vector<1x16x1xf32>
    %450 = vector.shape_cast %449 : vector<1x16x1xf32> to vector<16x1xf32>
    %c0_307 = arith.constant 0 : index
    %c3_308 = arith.constant 3 : index
    %451 = vector.load %arg35[%c0_307, %c3_308] : memref<16x68xf32, #tpu.memory_space<vmem>>, vector<16x48xf32>
    %452 = vector.broadcast %450 : vector<16x1xf32> to vector<16x48xf32>
    %453 = arith.mulf %452, %451 : vector<16x48xf32>
    %454 = arith.addf %448, %453 : vector<16x48xf32>
    %c3_309 = arith.constant 3 : index
    %c0_310 = arith.constant 0 : index
    %c0_311 = arith.constant 0 : index
    %455 = vector.load %arg22[%c3_309, %c0_310, %c0_311] : memref<9x16x1xf32, #tpu.memory_space<vmem>>, vector<1x16x1xf32>
    %456 = vector.shape_cast %455 : vector<1x16x1xf32> to vector<16x1xf32>
    %c0_312 = arith.constant 0 : index
    %c9_313 = arith.constant 9 : index
    %457 = vector.load %arg35[%c0_312, %c9_313] : memref<16x68xf32, #tpu.memory_space<vmem>>, vector<16x48xf32>
    %458 = vector.broadcast %456 : vector<16x1xf32> to vector<16x48xf32>
    %459 = arith.mulf %458, %457 : vector<16x48xf32>
    %460 = arith.addf %454, %459 : vector<16x48xf32>
    %c4_314 = arith.constant 4 : index
    %c0_315 = arith.constant 0 : index
    %c0_316 = arith.constant 0 : index
    %461 = vector.load %arg22[%c4_314, %c0_315, %c0_316] : memref<9x16x1xf32, #tpu.memory_space<vmem>>, vector<1x16x1xf32>
    %462 = vector.shape_cast %461 : vector<1x16x1xf32> to vector<16x1xf32>
    %c0_317 = arith.constant 0 : index
    %c10_318 = arith.constant 10 : index
    %463 = vector.load %arg35[%c0_317, %c10_318] : memref<16x68xf32, #tpu.memory_space<vmem>>, vector<16x48xf32>
    %464 = vector.broadcast %462 : vector<16x1xf32> to vector<16x48xf32>
    %465 = arith.mulf %464, %463 : vector<16x48xf32>
    %466 = arith.addf %460, %465 : vector<16x48xf32>
    %c5_319 = arith.constant 5 : index
    %c0_320 = arith.constant 0 : index
    %c0_321 = arith.constant 0 : index
    %467 = vector.load %arg22[%c5_319, %c0_320, %c0_321] : memref<9x16x1xf32, #tpu.memory_space<vmem>>, vector<1x16x1xf32>
    %468 = vector.shape_cast %467 : vector<1x16x1xf32> to vector<16x1xf32>
    %c0_322 = arith.constant 0 : index
    %c11_323 = arith.constant 11 : index
    %469 = vector.load %arg35[%c0_322, %c11_323] : memref<16x68xf32, #tpu.memory_space<vmem>>, vector<16x48xf32>
    %470 = vector.broadcast %468 : vector<16x1xf32> to vector<16x48xf32>
    %471 = arith.mulf %470, %469 : vector<16x48xf32>
    %472 = arith.addf %466, %471 : vector<16x48xf32>
    %c6_324 = arith.constant 6 : index
    %c0_325 = arith.constant 0 : index
    %c0_326 = arith.constant 0 : index
    %473 = vector.load %arg22[%c6_324, %c0_325, %c0_326] : memref<9x16x1xf32, #tpu.memory_space<vmem>>, vector<1x16x1xf32>
    %474 = vector.shape_cast %473 : vector<1x16x1xf32> to vector<16x1xf32>
    %c0_327 = arith.constant 0 : index
    %c17 = arith.constant 17 : index
    %475 = vector.load %arg35[%c0_327, %c17] : memref<16x68xf32, #tpu.memory_space<vmem>>, vector<16x48xf32>
    %476 = vector.broadcast %474 : vector<16x1xf32> to vector<16x48xf32>
    %477 = arith.mulf %476, %475 : vector<16x48xf32>
    %478 = arith.addf %472, %477 : vector<16x48xf32>
    %c7_328 = arith.constant 7 : index
    %c0_329 = arith.constant 0 : index
    %c0_330 = arith.constant 0 : index
    %479 = vector.load %arg22[%c7_328, %c0_329, %c0_330] : memref<9x16x1xf32, #tpu.memory_space<vmem>>, vector<1x16x1xf32>
    %480 = vector.shape_cast %479 : vector<1x16x1xf32> to vector<16x1xf32>
    %c0_331 = arith.constant 0 : index
    %c18 = arith.constant 18 : index
    %481 = vector.load %arg35[%c0_331, %c18] : memref<16x68xf32, #tpu.memory_space<vmem>>, vector<16x48xf32>
    %482 = vector.broadcast %480 : vector<16x1xf32> to vector<16x48xf32>
    %483 = arith.mulf %482, %481 : vector<16x48xf32>
    %484 = arith.addf %478, %483 : vector<16x48xf32>
    %c8_332 = arith.constant 8 : index
    %c0_333 = arith.constant 0 : index
    %c0_334 = arith.constant 0 : index
    %485 = vector.load %arg22[%c8_332, %c0_333, %c0_334] : memref<9x16x1xf32, #tpu.memory_space<vmem>>, vector<1x16x1xf32>
    %486 = vector.shape_cast %485 : vector<1x16x1xf32> to vector<16x1xf32>
    %c0_335 = arith.constant 0 : index
    %c19 = arith.constant 19 : index
    %487 = vector.load %arg35[%c0_335, %c19] : memref<16x68xf32, #tpu.memory_space<vmem>>, vector<16x48xf32>
    %488 = vector.broadcast %486 : vector<16x1xf32> to vector<16x48xf32>
    %489 = arith.mulf %488, %487 : vector<16x48xf32>
    %490 = arith.addf %484, %489 : vector<16x48xf32>
    %c0_336 = arith.constant 0 : index
    %c0_337 = arith.constant 0 : index
    %491 = vector.load %arg23[%c0_336, %c0_337] : memref<16x1xf32, #tpu.memory_space<vmem>>, vector<16x1xf32>
    %492 = vector.broadcast %491 : vector<16x1xf32> to vector<16x48xf32>
    %493 = arith.addf %490, %492 : vector<16x48xf32>
    %494 = vector.extract_strided_slice %493 {offsets = [0, 0], sizes = [16, 47], strides = [1, 1]} : vector<16x48xf32> to vector<16x47xf32>
    %495 = vector.extract_strided_slice %493 {offsets = [0, 1], sizes = [16, 47], strides = [1, 1]} : vector<16x48xf32> to vector<16x47xf32>
    %496 = arith.maximumf %494, %495 : vector<16x47xf32>
    %c0_338 = arith.constant 0 : index
    %c0_339 = arith.constant 0 : index
    %497 = vector.load %arg25[%c0_338, %c0_339] : memref<47x1xf32, #tpu.memory_space<vmem>>, vector<47x1xf32>
    %cst_340 = arith.constant dense<0.000000e+00> : vector<16x1xf32>
    %498 = tpu.matmul %496, %497, %cst_340 {dimension_numbers = #tpu.dot_dimension_numbers<[1], [0], [0], [1], [0, 0, 1, 1], [], []>} : vector<16x47xf32>, vector<47x1xf32>, vector<16x1xf32> -> vector<16x1xf32>
    %c0_341 = arith.constant 0 : index
    %c0_342 = arith.constant 0 : index
    %499 = vector.load %arg26[%c0_341, %c0_342] : memref<4x16xf32, #tpu.memory_space<vmem>>, vector<4x16xf32>
    %cst_343 = arith.constant dense<0.000000e+00> : vector<4x1xf32>
    %500 = tpu.matmul %499, %498, %cst_343 {dimension_numbers = #tpu.dot_dimension_numbers<[1], [0], [0], [1], [0, 0, 1, 1], [], []>} : vector<4x16xf32>, vector<16x1xf32>, vector<4x1xf32> -> vector<4x1xf32>
    %c0_344 = arith.constant 0 : index
    %c0_345 = arith.constant 0 : index
    %501 = vector.load %arg27[%c0_344, %c0_345] : memref<4x1xf32, #tpu.memory_space<vmem>>, vector<4x1xf32>
    %502 = arith.addf %500, %501 : vector<4x1xf32>
    %c0_346 = arith.constant 0 : index
    %c0_347 = arith.constant 0 : index
    %c0_348 = arith.constant 0 : index
    %503 = vector.load %arg28[%c0_346, %c0_347, %c0_348] : memref<1x4x1xf32, #tpu.memory_space<vmem>>, vector<1x4x1xf32>
    %504 = vector.shape_cast %503 : vector<1x4x1xf32> to vector<4x1xf32>
    %505 = vector.shape_cast %502 : vector<4x1xf32> to vector<1x4x1xf32>
    tpu.vector_store %arg28[%c0_346, %c0_347, %c0_348], %505 {strides = array<i32>} : memref<1x4x1xf32, #tpu.memory_space<vmem>>, vector<1x4x1xf32>,
    return
  }
  func.func @transform_0(%arg0: i32) -> (i32, i32, i32) {
    %c0_i32 = arith.constant 0 : i32
    %c0_i32_0 = arith.constant 0 : i32
    %c0_i32_1 = arith.constant 0 : i32
    return %arg0, %c0_i32, %c0_i32_0 : i32, i32, i32
  }
  func.func @transform_1(%arg0: i32) -> (i32, i32, i32) {
    %c0_i32 = arith.constant 0 : i32
    %c0_i32_0 = arith.constant 0 : i32
    %c0_i32_1 = arith.constant 0 : i32
    %c0_i32_2 = arith.constant 0 : i32
    return %c0_i32, %c0_i32_0, %c0_i32_1 : i32, i32, i32
  }
  func.func @transform_2(%arg0: i32) -> (i32, i32) {
    %c0_i32 = arith.constant 0 : i32
    %c0_i32_0 = arith.constant 0 : i32
    %c0_i32_1 = arith.constant 0 : i32
    return %c0_i32, %c0_i32_0 : i32, i32
  }
  func.func @transform_3(%arg0: i32) -> (i32, i32, i32) {
    %c0_i32 = arith.constant 0 : i32
    %c0_i32_0 = arith.constant 0 : i32
    %c0_i32_1 = arith.constant 0 : i32
    %c0_i32_2 = arith.constant 0 : i32
    return %c0_i32, %c0_i32_0, %c0_i32_1 : i32, i32, i32
  }
  func.func @transform_4(%arg0: i32) -> (i32, i32) {
    %c0_i32 = arith.constant 0 : i32
    %c0_i32_0 = arith.constant 0 : i32
    %c0_i32_1 = arith.constant 0 : i32
    return %c0_i32, %c0_i32_0 : i32, i32
  }
  func.func @transform_5(%arg0: i32) -> (i32, i32) {
    %c0_i32 = arith.constant 0 : i32
    %c0_i32_0 = arith.constant 0 : i32
    %c0_i32_1 = arith.constant 0 : i32
    return %c0_i32, %c0_i32_0 : i32, i32
  }
  func.func @transform_6(%arg0: i32) -> (i32, i32) {
    %c0_i32 = arith.constant 0 : i32
    %c0_i32_0 = arith.constant 0 : i32
    %c0_i32_1 = arith.constant 0 : i32
    return %c0_i32, %c0_i32_0 : i32, i32
  }
  func.func @transform_7(%arg0: i32) -> (i32, i32, i32) {
    %c0_i32 = arith.constant 0 : i32
    %c0_i32_0 = arith.constant 0 : i32
    %c0_i32_1 = arith.constant 0 : i32
    %c0_i32_2 = arith.constant 0 : i32
    return %c0_i32, %c0_i32_0, %c0_i32_1 : i32, i32, i32
  }
  func.func @transform_8(%arg0: i32) -> (i32, i32) {
    %c0_i32 = arith.constant 0 : i32
    %c0_i32_0 = arith.constant 0 : i32
    %c0_i32_1 = arith.constant 0 : i32
    return %c0_i32, %c0_i32_0 : i32, i32
  }
  func.func @transform_9(%arg0: i32) -> (i32, i32, i32) {
    %c0_i32 = arith.constant 0 : i32
    %c0_i32_0 = arith.constant 0 : i32
    %c0_i32_1 = arith.constant 0 : i32
    %c0_i32_2 = arith.constant 0 : i32
    return %c0_i32, %c0_i32_0, %c0_i32_1 : i32, i32, i32
  }
  func.func @transform_10(%arg0: i32) -> (i32, i32) {
    %c0_i32 = arith.constant 0 : i32
    %c0_i32_0 = arith.constant 0 : i32
    %c0_i32_1 = arith.constant 0 : i32
    return %c0_i32, %c0_i32_0 : i32, i32
  }
  func.func @transform_11(%arg0: i32) -> (i32, i32) {
    %c0_i32 = arith.constant 0 : i32
    %c0_i32_0 = arith.constant 0 : i32
    %c0_i32_1 = arith.constant 0 : i32
    return %c0_i32, %c0_i32_0 : i32, i32
  }
  func.func @transform_12(%arg0: i32) -> (i32, i32) {
    %c0_i32 = arith.constant 0 : i32
    %c0_i32_0 = arith.constant 0 : i32
    %c0_i32_1 = arith.constant 0 : i32
    return %c0_i32, %c0_i32_0 : i32, i32
  }
  func.func @transform_13(%arg0: i32) -> (i32, i32, i32) {
    %c0_i32 = arith.constant 0 : i32
    %c0_i32_0 = arith.constant 0 : i32
    %c0_i32_1 = arith.constant 0 : i32
    %c0_i32_2 = arith.constant 0 : i32
    return %c0_i32, %c0_i32_0, %c0_i32_1 : i32, i32, i32
  }
  func.func @transform_14(%arg0: i32) -> (i32, i32) {
    %c0_i32 = arith.constant 0 : i32
    %c0_i32_0 = arith.constant 0 : i32
    %c0_i32_1 = arith.constant 0 : i32
    return %c0_i32, %c0_i32_0 : i32, i32
  }
  func.func @transform_15(%arg0: i32) -> (i32, i32, i32) {
    %c0_i32 = arith.constant 0 : i32
    %c0_i32_0 = arith.constant 0 : i32
    %c0_i32_1 = arith.constant 0 : i32
    %c0_i32_2 = arith.constant 0 : i32
    return %c0_i32, %c0_i32_0, %c0_i32_1 : i32, i32, i32
  }
  func.func @transform_16(%arg0: i32) -> (i32, i32) {
    %c0_i32 = arith.constant 0 : i32
    %c0_i32_0 = arith.constant 0 : i32
    %c0_i32_1 = arith.constant 0 : i32
    return %c0_i32, %c0_i32_0 : i32, i32
  }
  func.func @transform_17(%arg0: i32) -> (i32, i32) {
    %c0_i32 = arith.constant 0 : i32
    %c0_i32_0 = arith.constant 0 : i32
    %c0_i32_1 = arith.constant 0 : i32
    return %c0_i32, %c0_i32_0 : i32, i32
  }
  func.func @transform_18(%arg0: i32) -> (i32, i32) {
    %c0_i32 = arith.constant 0 : i32
    %c0_i32_0 = arith.constant 0 : i32
    %c0_i32_1 = arith.constant 0 : i32
    return %c0_i32, %c0_i32_0 : i32, i32
  }
  func.func @transform_19(%arg0: i32) -> (i32, i32, i32) {
    %c0_i32 = arith.constant 0 : i32
    %c0_i32_0 = arith.constant 0 : i32
    %c0_i32_1 = arith.constant 0 : i32
    %c0_i32_2 = arith.constant 0 : i32
    return %c0_i32, %c0_i32_0, %c0_i32_1 : i32, i32, i32
  }
  func.func @transform_20(%arg0: i32) -> (i32, i32) {
    %c0_i32 = arith.constant 0 : i32
    %c0_i32_0 = arith.constant 0 : i32
    %c0_i32_1 = arith.constant 0 : i32
    return %c0_i32, %c0_i32_0 : i32, i32
  }
  func.func @transform_21(%arg0: i32) -> (i32, i32, i32) {
    %c0_i32 = arith.constant 0 : i32
    %c0_i32_0 = arith.constant 0 : i32
    %c0_i32_1 = arith.constant 0 : i32
    %c0_i32_2 = arith.constant 0 : i32
    return %c0_i32, %c0_i32_0, %c0_i32_1 : i32, i32, i32
  }
  func.func @transform_22(%arg0: i32) -> (i32, i32) {
    %c0_i32 = arith.constant 0 : i32
    %c0_i32_0 = arith.constant 0 : i32
    %c0_i32_1 = arith.constant 0 : i32
    return %c0_i32, %c0_i32_0 : i32, i32
  }
  func.func @transform_23(%arg0: i32) -> (i32, i32) {
    %c0_i32 = arith.constant 0 : i32
    %c0_i32_0 = arith.constant 0 : i32
    %c0_i32_1 = arith.constant 0 : i32
    return %c0_i32, %c0_i32_0 : i32, i32
  }
  func.func @transform_24(%arg0: i32) -> (i32, i32) {
    %c0_i32 = arith.constant 0 : i32
    %c0_i32_0 = arith.constant 0 : i32
    %c0_i32_1 = arith.constant 0 : i32
    return %c0_i32, %c0_i32_0 : i32, i32
  }
  func.func @transform_25(%arg0: i32) -> (i32, i32) {
    %c0_i32 = arith.constant 0 : i32
    %c0_i32_0 = arith.constant 0 : i32
    %c0_i32_1 = arith.constant 0 : i32
    return %c0_i32, %c0_i32_0 : i32, i32
  }
  func.func @transform_26(%arg0: i32) -> (i32, i32) {
    %c0_i32 = arith.constant 0 : i32
    %c0_i32_0 = arith.constant 0 : i32
    %c0_i32_1 = arith.constant 0 : i32
    return %c0_i32, %c0_i32_0 : i32, i32
  }
  func.func @transform_27(%arg0: i32) -> (i32, i32, i32) {
    %c0_i32 = arith.constant 0 : i32
    %c0_i32_0 = arith.constant 0 : i32
    %c0_i32_1 = arith.constant 0 : i32
    return %arg0, %c0_i32, %c0_i32_0 : i32, i32, i32
  }
}

</mosaic_0001>

<llo_original>
// kernel: tpu_custom_call.1
$region0: #{tpu_custom_call.1}
  #allocation0 [shape = 'u32[]', space=smem, size = 0x4, offset = 0x4, fixed_abs, tag = 'smem constant byte address 0x4 - core index']
  #allocation1 [shape = 'u32[72,128]{1,0:T(1,128)}', space=vmem, size = 0x9000, scoped, tag = 'internal scratch']
  #allocation2 [shape = 'f32[8,164]{1,0:T(8,128)}', space=vmem, size = 0x2000, scoped, tag = 'scratch operand']
  #allocation3 [shape = 'f32[8,100]{1,0:T(8,128)}', space=vmem, size = 0x1000, scoped, tag = 'scratch operand']
  #allocation4 [shape = 'f32[8,68]{1,0:T(8,128)}', space=vmem, size = 0x1000, scoped, tag = 'scratch operand']
  #allocation5 [shape = 'f32[8,292]{1,0:T(8,128)}', space=vmem, size = 0x3000, scoped, tag = 'scratch operand']
  #allocation6 [shape = 'f32[8,164]{1,0:T(8,128)}', space=vmem, size = 0x2000, scoped, tag = 'scratch operand']
  #allocation7 [shape = 'f32[8,100]{1,0:T(8,128)}', space=vmem, size = 0x1000, scoped, tag = 'scratch operand']
  #allocation8 [shape = 'f32[16,68]{1,0:T(8,128)}', space=vmem, size = 0x2000, scoped, tag = 'scratch operand']
  %s0 = inlined_call_operand.vmem [shape: f32[2,1,292], index: 0, kind: input, shape index: {}]
  %s1 = inlined_call_operand.vmem [shape: f32[15,8,1], index: 1, kind: input, shape index: {}]
  %s2 = inlined_call_operand.vmem [shape: f32[8,1], index: 2, kind: input, shape index: {}]
  %s3 = inlined_call_operand.vmem [shape: f32[9,8,1], index: 3, kind: input, shape index: {}]
  %s4 = inlined_call_operand.vmem [shape: f32[8,1], index: 4, kind: input, shape index: {}]
  %s5 = inlined_call_operand.vmem [shape: f32[1,216], index: 5, kind: input, shape index: {}]
  %s6 = inlined_call_operand.vmem [shape: f32[215,164], index: 6, kind: input, shape index: {}]
  %s7 = inlined_call_operand.vmem [shape: bf16[5,8,8], index: 7, kind: input, shape index: {}]
  %s8 = inlined_call_operand.vmem [shape: f32[8,1], index: 8, kind: input, shape index: {}]
  %s9 = inlined_call_operand.vmem [shape: f32[9,8,1], index: 9, kind: input, shape index: {}]
  %s10 = inlined_call_operand.vmem [shape: f32[8,1], index: 10, kind: input, shape index: {}]
  %s11 = inlined_call_operand.vmem [shape: f32[1,120], index: 11, kind: input, shape index: {}]
  %s12 = inlined_call_operand.vmem [shape: f32[119,100], index: 12, kind: input, shape index: {}]
  %s13 = inlined_call_operand.vmem [shape: bf16[5,8,8], index: 13, kind: input, shape index: {}]
  %s14 = inlined_call_operand.vmem [shape: f32[8,1], index: 14, kind: input, shape index: {}]
  %s15 = inlined_call_operand.vmem [shape: f32[9,8,1], index: 15, kind: input, shape index: {}]
  %s16 = inlined_call_operand.vmem [shape: f32[8,1], index: 16, kind: input, shape index: {}]
  %s17 = inlined_call_operand.vmem [shape: f32[1,72], index: 17, kind: input, shape index: {}]
  %s18 = inlined_call_operand.vmem [shape: f32[71,68], index: 18, kind: input, shape index: {}]
  %s19 = inlined_call_operand.vmem [shape: bf16[5,16,8], index: 19, kind: input, shape index: {}]
  %s20 = inlined_call_operand.vmem [shape: f32[16,1], index: 20, kind: input, shape index: {}]
  %s21 = inlined_call_operand.vmem [shape: f32[9,16,1], index: 21, kind: input, shape index: {}]
  %s22 = inlined_call_operand.vmem [shape: f32[16,1], index: 22, kind: input, shape index: {}]
  %s23 = inlined_call_operand.vmem [shape: f32[1,48], index: 23, kind: input, shape index: {}]
  %s24 = inlined_call_operand.vmem [shape: f32[47,1], index: 24, kind: input, shape index: {}]
  %s25 = inlined_call_operand.vmem [shape: f32[4,16], index: 25, kind: input, shape index: {}]
  %s26 = inlined_call_operand.vmem [shape: f32[4,1], index: 26, kind: input, shape index: {}]
  %s27 = inlined_call_operand.vmem [shape: f32[2,4,1], index: 27, kind: output, shape index: {}]
  %s28 = sld [smem:[#allocation0]]
  $region141: #{tpu_custom_call.1} parent=0
    _
  %s30 = ssub.s32 1, %s28
  %s31 = scalar_select 0, %s30, %s28
  loop: start=0, step=1, limit=4
  $region2: #{tpu_custom_call.1} parent=0 // loop_pre_header
    _
  $region3: #{tpu_custom_call.1} parent=0 // loop_header
    %s33 = sphi 0, %s37
    %p34 = scmp.ge.s32.totalorder %s33, 4
    %s43 = sphi 0, %s45
    %s46 = sphi 0, %s43
    %s47 = sphi 0, %s46
    %s63 = sphi 0, %s47
    %s67 = sphi 0, %s67
    %s69 = sphi 0, %s67
    %s70 = sphi 0, %s69
    %s84 = sphi 0, %s70
    %s88 = sphi 0, %s88
    %s90 = sphi 0, %s88
    %s91 = sphi 0, %s90
    %s105 = sphi 0, %s91
    %s109 = sphi 0, %s109
    %s111 = sphi 0, %s109
    %s112 = sphi 0, %s111
    %s126 = sphi 0, %s112
    %s130 = sphi 0, %s130
    %s132 = sphi 0, %s130
    %s133 = sphi 0, %s132
    %s147 = sphi 0, %s133
    %s151 = sphi 0, %s151
    %s153 = sphi 0, %s151
    %s154 = sphi 0, %s153
    %s168 = sphi 0, %s154
    %s172 = sphi 0, %s172
    %s174 = sphi 0, %s172
    %s175 = sphi 0, %s174
    %s189 = sphi 0, %s175
    %s193 = sphi 0, %s193
    %s195 = sphi 0, %s193
    %s196 = sphi 0, %s195
    %s210 = sphi 0, %s196
    %s214 = sphi 0, %s214
    %s216 = sphi 0, %s214
    %s217 = sphi 0, %s216
    %s231 = sphi 0, %s217
    %s235 = sphi 0, %s235
    %s237 = sphi 0, %s235
    %s238 = sphi 0, %s237
    %s252 = sphi 0, %s238
    %s256 = sphi 0, %s256
    %s258 = sphi 0, %s256
    %s259 = sphi 0, %s258
    %s273 = sphi 0, %s259
    %s277 = sphi 0, %s277
    %s279 = sphi 0, %s277
    %s280 = sphi 0, %s279
    %s294 = sphi 0, %s280
    %s298 = sphi 0, %s298
    %s300 = sphi 0, %s298
    %s301 = sphi 0, %s300
    %s315 = sphi 0, %s301
    %s319 = sphi 0, %s319
    %s321 = sphi 0, %s319
    %s322 = sphi 0, %s321
    %s336 = sphi 0, %s322
    %s340 = sphi 0, %s340
    %s342 = sphi 0, %s340
    %s343 = sphi 0, %s342
    %s357 = sphi 0, %s343
    %s361 = sphi 0, %s361
    %s363 = sphi 0, %s361
    %s364 = sphi 0, %s363
    %s378 = sphi 0, %s364
    %s382 = sphi 0, %s382
    %s384 = sphi 0, %s382
    %s385 = sphi 0, %s384
    %s399 = sphi 0, %s385
    %s403 = sphi 0, %s403
    %s405 = sphi 0, %s403
    %s406 = sphi 0, %s405
    %s420 = sphi 0, %s406
    %s424 = sphi 0, %s424
    %s426 = sphi 0, %s424
    %s427 = sphi 0, %s426
    %s441 = sphi 0, %s427
    %s445 = sphi 0, %s445
    %s447 = sphi 0, %s445
    %s448 = sphi 0, %s447
    %s462 = sphi 0, %s448
    %s466 = sphi 0, %s466
    %s468 = sphi 0, %s466
    %s469 = sphi 0, %s468
    %s483 = sphi 0, %s469
    %s487 = sphi 0, %s487
    %s489 = sphi 0, %s487
    %s490 = sphi 0, %s489
    %s504 = sphi 0, %s490
    %s508 = sphi 0, %s508
    %s510 = sphi 0, %s508
    %s511 = sphi 0, %s510
    %s525 = sphi 0, %s511
    %s529 = sphi 0, %s529
    %s531 = sphi 0, %s529
    %s532 = sphi 0, %s531
    %s546 = sphi 0, %s532
    %s550 = sphi 0, %s550
    %s552 = sphi 0, %s550
    %s553 = sphi 0, %s552
    %s567 = sphi 0, %s553
    %s571 = sphi 0, %s571
    %s573 = sphi 0, %s571
    %s574 = sphi 0, %s573
    %s588 = sphi 0, %s574
    %s592 = sphi 0, %s592
    %s594 = sphi 0, %s592
    %s595 = sphi 0, %s594
    %s609 = sphi 0, %s595
    %s615 = sphi 0, %s617
    %s618 = sphi 0, %s615
    %s619 = sphi 0, %s618
    %s635 = sphi 0, %s619
  $region4: #{tpu_custom_call.1} parent=0 // loop_header_branch
    %36 = sbr.rel (%p34) target = $region8
  $region5: #{tpu_custom_call.1} parent=0 // loop_body
    %s38 = ssub.s32 %s33, 1
    %s39 = ssub.s32 %s33, 2
    %s40 = sadd.s32 %s33, 1
    %s41 = ssub.s32 %s33, %s40
    %p42 = scmp.eq.s32.totalorder %s41, 0
    %s44 = sadd.s32 %s43, 1
    %s45 = scalar_select %p42, %s43, %s44
    %p48 = pneg %p42
    %p49 = scmp.eq.s32.totalorder %s33, 1
    %p50 = por %p48, %p49
    %p51 = scmp.ne.s32.totalorder %s43, %s46
    %p52 = scmp.eq.s32.totalorder %s33, 0
    %p53 = por %p51, %p52
    %p54 = scmp.ne.s32.totalorder %s43, %s46
    %p55 = scmp.eq.s32.totalorder %s38, 1
    %p56 = por %p54, %p55
    %p57 = scmp.ne.s32.totalorder %s46, %s47
    %p58 = scmp.eq.s32.totalorder %s38, 0
    %p59 = por %p57, %p58
    %p60 = scmp.ne.s32.totalorder %s46, %s47
    %p61 = scmp.eq.s32.totalorder %s39, 1
    %p62 = por %p60, %p61
    %p64 = scmp.ne.s32.totalorder %s47, %s63
    %p65 = scmp.eq.s32.totalorder %s39, 0
    %p66 = por %p64, %p65
    %s68 = sadd.s32 %s67, 1
    %p71 = scmp.eq.s32.totalorder %s33, 1
    %p72 = scmp.ne.s32.totalorder %s67, %s69
    %p73 = scmp.eq.s32.totalorder %s33, 0
    %p74 = por %p72, %p73
    %p75 = scmp.ne.s32.totalorder %s67, %s69
    %p76 = scmp.eq.s32.totalorder %s38, 1
    %p77 = por %p75, %p76
    %p78 = scmp.ne.s32.totalorder %s69, %s70
    %p79 = scmp.eq.s32.totalorder %s38, 0
    %p80 = por %p78, %p79
    %p81 = scmp.ne.s32.totalorder %s69, %s70
    %p82 = scmp.eq.s32.totalorder %s39, 1
    %p83 = por %p81, %p82
    %p85 = scmp.ne.s32.totalorder %s70, %s84
    %p86 = scmp.eq.s32.totalorder %s39, 0
    %p87 = por %p85, %p86
    %s89 = sadd.s32 %s88, 1
    %p92 = scmp.eq.s32.totalorder %s33, 1
    %p93 = scmp.ne.s32.totalorder %s88, %s90
    %p94 = scmp.eq.s32.totalorder %s33, 0
    %p95 = por %p93, %p94
    %p96 = scmp.ne.s32.totalorder %s88, %s90
    %p97 = scmp.eq.s32.totalorder %s38, 1
    %p98 = por %p96, %p97
    %p99 = scmp.ne.s32.totalorder %s90, %s91
    %p100 = scmp.eq.s32.totalorder %s38, 0
    %p101 = por %p99, %p100
    %p102 = scmp.ne.s32.totalorder %s90, %s91
    %p103 = scmp.eq.s32.totalorder %s39, 1
    %p104 = por %p102, %p103
    %p106 = scmp.ne.s32.totalorder %s91, %s105
    %p107 = scmp.eq.s32.totalorder %s39, 0
    %p108 = por %p106, %p107
    %s110 = sadd.s32 %s109, 1
    %p113 = scmp.eq.s32.totalorder %s33, 1
    %p114 = scmp.ne.s32.totalorder %s109, %s111
    %p115 = scmp.eq.s32.totalorder %s33, 0
    %p116 = por %p114, %p115
    %p117 = scmp.ne.s32.totalorder %s109, %s111
    %p118 = scmp.eq.s32.totalorder %s38, 1
    %p119 = por %p117, %p118
    %p120 = scmp.ne.s32.totalorder %s111, %s112
    %p121 = scmp.eq.s32.totalorder %s38, 0
    %p122 = por %p120, %p121
    %p123 = scmp.ne.s32.totalorder %s111, %s112
    %p124 = scmp.eq.s32.totalorder %s39, 1
    %p125 = por %p123, %p124
    %p127 = scmp.ne.s32.totalorder %s112, %s126
    %p128 = scmp.eq.s32.totalorder %s39, 0
    %p129 = por %p127, %p128
    %s131 = sadd.s32 %s130, 1
    %p134 = scmp.eq.s32.totalorder %s33, 1
    %p135 = scmp.ne.s32.totalorder %s130, %s132
    %p136 = scmp.eq.s32.totalorder %s33, 0
    %p137 = por %p135, %p136
    %p138 = scmp.ne.s32.totalorder %s130, %s132
    %p139 = scmp.eq.s32.totalorder %s38, 1
    %p140 = por %p138, %p139
    %p141 = scmp.ne.s32.totalorder %s132, %s133
    %p142 = scmp.eq.s32.totalorder %s38, 0
    %p143 = por %p141, %p142
    %p144 = scmp.ne.s32.totalorder %s132, %s133
    %p145 = scmp.eq.s32.totalorder %s39, 1
    %p146 = por %p144, %p145
    %p148 = scmp.ne.s32.totalorder %s133, %s147
    %p149 = scmp.eq.s32.totalorder %s39, 0
    %p150 = por %p148, %p149
    %s152 = sadd.s32 %s151, 1
    %p155 = scmp.eq.s32.totalorder %s33, 1
    %p156 = scmp.ne.s32.totalorder %s151, %s153
    %p157 = scmp.eq.s32.totalorder %s33, 0
    %p158 = por %p156, %p157
    %p159 = scmp.ne.s32.totalorder %s151, %s153
    %p160 = scmp.eq.s32.totalorder %s38, 1
    %p161 = por %p159, %p160
    %p162 = scmp.ne.s32.totalorder %s153, %s154
    %p163 = scmp.eq.s32.totalorder %s38, 0
    %p164 = por %p162, %p163
    %p165 = scmp.ne.s32.totalorder %s153, %s154
    %p166 = scmp.eq.s32.totalorder %s39, 1
    %p167 = por %p165, %p166
    %p169 = scmp.ne.s32.totalorder %s154, %s168
    %p170 = scmp.eq.s32.totalorder %s39, 0
    %p171 = por %p169, %p170
    %s173 = sadd.s32 %s172, 1
    %p176 = scmp.eq.s32.totalorder %s33, 1
    %p177 = scmp.ne.s32.totalorder %s172, %s174
    %p178 = scmp.eq.s32.totalorder %s33, 0
    %p179 = por %p177, %p178
    %p180 = scmp.ne.s32.totalorder %s172, %s174
    %p181 = scmp.eq.s32.totalorder %s38, 1
    %p182 = por %p180, %p181
    %p183 = scmp.ne.s32.totalorder %s174, %s175
    %p184 = scmp.eq.s32.totalorder %s38, 0
    %p185 = por %p183, %p184
    %p186 = scmp.ne.s32.totalorder %s174, %s175
    %p187 = scmp.eq.s32.totalorder %s39, 1
    %p188 = por %p186, %p187
    %p190 = scmp.ne.s32.totalorder %s175, %s189
    %p191 = scmp.eq.s32.totalorder %s39, 0
    %p192 = por %p190, %p191
    %s194 = sadd.s32 %s193, 1
    %p197 = scmp.eq.s32.totalorder %s33, 1
    %p198 = scmp.ne.s32.totalorder %s193, %s195
    %p199 = scmp.eq.s32.totalorder %s33, 0
    %p200 = por %p198, %p199
    %p201 = scmp.ne.s32.totalorder %s193, %s195
    %p202 = scmp.eq.s32.totalorder %s38, 1
    %p203 = por %p201, %p202
    %p204 = scmp.ne.s32.totalorder %s195, %s196
    %p205 = scmp.eq.s32.totalorder %s38, 0
    %p206 = por %p204, %p205
    %p207 = scmp.ne.s32.totalorder %s195, %s196
    %p208 = scmp.eq.s32.totalorder %s39, 1
    %p209 = por %p207, %p208
    %p211 = scmp.ne.s32.totalorder %s196, %s210
    %p212 = scmp.eq.s32.totalorder %s39, 0
    %p213 = por %p211, %p212
    %s215 = sadd.s32 %s214, 1
    %p218 = scmp.eq.s32.totalorder %s33, 1
    %p219 = scmp.ne.s32.totalorder %s214, %s216
    %p220 = scmp.eq.s32.totalorder %s33, 0
    %p221 = por %p219, %p220
    %p222 = scmp.ne.s32.totalorder %s214, %s216
    %p223 = scmp.eq.s32.totalorder %s38, 1
    %p224 = por %p222, %p223
    %p225 = scmp.ne.s32.totalorder %s216, %s217
    %p226 = scmp.eq.s32.totalorder %s38, 0
    %p227 = por %p225, %p226
    %p228 = scmp.ne.s32.totalorder %s216, %s217
    %p229 = scmp.eq.s32.totalorder %s39, 1
    %p230 = por %p228, %p229
    %p232 = scmp.ne.s32.totalorder %s217, %s231
    %p233 = scmp.eq.s32.totalorder %s39, 0
    %p234 = por %p232, %p233
    %s236 = sadd.s32 %s235, 1
    %p239 = scmp.eq.s32.totalorder %s33, 1
    %p240 = scmp.ne.s32.totalorder %s235, %s237
    %p241 = scmp.eq.s32.totalorder %s33, 0
    %p242 = por %p240, %p241
    %p243 = scmp.ne.s32.totalorder %s235, %s237
    %p244 = scmp.eq.s32.totalorder %s38, 1
    %p245 = por %p243, %p244
    %p246 = scmp.ne.s32.totalorder %s237, %s238
    %p247 = scmp.eq.s32.totalorder %s38, 0
    %p248 = por %p246, %p247
    %p249 = scmp.ne.s32.totalorder %s237, %s238
    %p250 = scmp.eq.s32.totalorder %s39, 1
    %p251 = por %p249, %p250
    %p253 = scmp.ne.s32.totalorder %s238, %s252
    %p254 = scmp.eq.s32.totalorder %s39, 0
    %p255 = por %p253, %p254
    %s257 = sadd.s32 %s256, 1
    %p260 = scmp.eq.s32.totalorder %s33, 1
    %p261 = scmp.ne.s32.totalorder %s256, %s258
    %p262 = scmp.eq.s32.totalorder %s33, 0
    %p263 = por %p261, %p262
    %p264 = scmp.ne.s32.totalorder %s256, %s258
    %p265 = scmp.eq.s32.totalorder %s38, 1
    %p266 = por %p264, %p265
    %p267 = scmp.ne.s32.totalorder %s258, %s259
    %p268 = scmp.eq.s32.totalorder %s38, 0
    %p269 = por %p267, %p268
    %p270 = scmp.ne.s32.totalorder %s258, %s259
    %p271 = scmp.eq.s32.totalorder %s39, 1
    %p272 = por %p270, %p271
    %p274 = scmp.ne.s32.totalorder %s259, %s273
    %p275 = scmp.eq.s32.totalorder %s39, 0
    %p276 = por %p274, %p275
    %s278 = sadd.s32 %s277, 1
    %p281 = scmp.eq.s32.totalorder %s33, 1
    %p282 = scmp.ne.s32.totalorder %s277, %s279
    %p283 = scmp.eq.s32.totalorder %s33, 0
    %p284 = por %p282, %p283
    %p285 = scmp.ne.s32.totalorder %s277, %s279
    %p286 = scmp.eq.s32.totalorder %s38, 1
    %p287 = por %p285, %p286
    %p288 = scmp.ne.s32.totalorder %s279, %s280
    %p289 = scmp.eq.s32.totalorder %s38, 0
    %p290 = por %p288, %p289
    %p291 = scmp.ne.s32.totalorder %s279, %s280
    %p292 = scmp.eq.s32.totalorder %s39, 1
    %p293 = por %p291, %p292
    %p295 = scmp.ne.s32.totalorder %s280, %s294
    %p296 = scmp.eq.s32.totalorder %s39, 0
    %p297 = por %p295, %p296
    %s299 = sadd.s32 %s298, 1
    %p302 = scmp.eq.s32.totalorder %s33, 1
    %p303 = scmp.ne.s32.totalorder %s298, %s300
    %p304 = scmp.eq.s32.totalorder %s33, 0
    %p305 = por %p303, %p304
    %p306 = scmp.ne.s32.totalorder %s298, %s300
    %p307 = scmp.eq.s32.totalorder %s38, 1
    %p308 = por %p306, %p307
    %p309 = scmp.ne.s32.totalorder %s300, %s301
    %p310 = scmp.eq.s32.totalorder %s38, 0
    %p311 = por %p309, %p310
    %p312 = scmp.ne.s32.totalorder %s300, %s301
    %p313 = scmp.eq.s32.totalorder %s39, 1
    %p314 = por %p312, %p313
    %p316 = scmp.ne.s32.totalorder %s301, %s315
    %p317 = scmp.eq.s32.totalorder %s39, 0
    %p318 = por %p316, %p317
    %s320 = sadd.s32 %s319, 1
    %p323 = scmp.eq.s32.totalorder %s33, 1
    %p324 = scmp.ne.s32.totalorder %s319, %s321
    %p325 = scmp.eq.s32.totalorder %s33, 0
    %p326 = por %p324, %p325
    %p327 = scmp.ne.s32.totalorder %s319, %s321
    %p328 = scmp.eq.s32.totalorder %s38, 1
    %p329 = por %p327, %p328
    %p330 = scmp.ne.s32.totalorder %s321, %s322
    %p331 = scmp.eq.s32.totalorder %s38, 0
    %p332 = por %p330, %p331
    %p333 = scmp.ne.s32.totalorder %s321, %s322
    %p334 = scmp.eq.s32.totalorder %s39, 1
    %p335 = por %p333, %p334
    %p337 = scmp.ne.s32.totalorder %s322, %s336
    %p338 = scmp.eq.s32.totalorder %s39, 0
    %p339 = por %p337, %p338
    %s341 = sadd.s32 %s340, 1
    %p344 = scmp.eq.s32.totalorder %s33, 1
    %p345 = scmp.ne.s32.totalorder %s340, %s342
    %p346 = scmp.eq.s32.totalorder %s33, 0
    %p347 = por %p345, %p346
    %p348 = scmp.ne.s32.totalorder %s340, %s342
    %p349 = scmp.eq.s32.totalorder %s38, 1
    %p350 = por %p348, %p349
    %p351 = scmp.ne.s32.totalorder %s342, %s343
    %p352 = scmp.eq.s32.totalorder %s38, 0
    %p353 = por %p351, %p352
    %p354 = scmp.ne.s32.totalorder %s342, %s343
    %p355 = scmp.eq.s32.totalorder %s39, 1
    %p356 = por %p354, %p355
    %p358 = scmp.ne.s32.totalorder %s343, %s357
    %p359 = scmp.eq.s32.totalorder %s39, 0
    %p360 = por %p358, %p359
    %s362 = sadd.s32 %s361, 1
    %p365 = scmp.eq.s32.totalorder %s33, 1
    %p366 = scmp.ne.s32.totalorder %s361, %s363
    %p367 = scmp.eq.s32.totalorder %s33, 0
    %p368 = por %p366, %p367
    %p369 = scmp.ne.s32.totalorder %s361, %s363
    %p370 = scmp.eq.s32.totalorder %s38, 1
    %p371 = por %p369, %p370
    %p372 = scmp.ne.s32.totalorder %s363, %s364
    %p373 = scmp.eq.s32.totalorder %s38, 0
    %p374 = por %p372, %p373
    %p375 = scmp.ne.s32.totalorder %s363, %s364
    %p376 = scmp.eq.s32.totalorder %s39, 1
    %p377 = por %p375, %p376
    %p379 = scmp.ne.s32.totalorder %s364, %s378
    %p380 = scmp.eq.s32.totalorder %s39, 0
    %p381 = por %p379, %p380
    %s383 = sadd.s32 %s382, 1
    %p386 = scmp.eq.s32.totalorder %s33, 1
    %p387 = scmp.ne.s32.totalorder %s382, %s384
    %p388 = scmp.eq.s32.totalorder %s33, 0
    %p389 = por %p387, %p388
    %p390 = scmp.ne.s32.totalorder %s382, %s384
    %p391 = scmp.eq.s32.totalorder %s38, 1
    %p392 = por %p390, %p391
    %p393 = scmp.ne.s32.totalorder %s384, %s385
    %p394 = scmp.eq.s32.totalorder %s38, 0
    %p395 = por %p393, %p394
    %p396 = scmp.ne.s32.totalorder %s384, %s385
    %p397 = scmp.eq.s32.totalorder %s39, 1
    %p398 = por %p396, %p397
    %p400 = scmp.ne.s32.totalorder %s385, %s399
    %p401 = scmp.eq.s32.totalorder %s39, 0
    %p402 = por %p400, %p401
    %s404 = sadd.s32 %s403, 1
    %p407 = scmp.eq.s32.totalorder %s33, 1
    %p408 = scmp.ne.s32.totalorder %s403, %s405
    %p409 = scmp.eq.s32.totalorder %s33, 0
    %p410 = por %p408, %p409
    %p411 = scmp.ne.s32.totalorder %s403, %s405
    %p412 = scmp.eq.s32.totalorder %s38, 1
    %p413 = por %p411, %p412
    %p414 = scmp.ne.s32.totalorder %s405, %s406
    %p415 = scmp.eq.s32.totalorder %s38, 0
    %p416 = por %p414, %p415
    %p417 = scmp.ne.s32.totalorder %s405, %s406
    %p418 = scmp.eq.s32.totalorder %s39, 1
    %p419 = por %p417, %p418
    %p421 = scmp.ne.s32.totalorder %s406, %s420
    %p422 = scmp.eq.s32.totalorder %s39, 0
    %p423 = por %p421, %p422
    %s425 = sadd.s32 %s424, 1
    %p428 = scmp.eq.s32.totalorder %s33, 1
    %p429 = scmp.ne.s32.totalorder %s424, %s426
    %p430 = scmp.eq.s32.totalorder %s33, 0
    %p431 = por %p429, %p430
    %p432 = scmp.ne.s32.totalorder %s424, %s426
    %p433 = scmp.eq.s32.totalorder %s38, 1
    %p434 = por %p432, %p433
    %p435 = scmp.ne.s32.totalorder %s426, %s427
    %p436 = scmp.eq.s32.totalorder %s38, 0
    %p437 = por %p435, %p436
    %p438 = scmp.ne.s32.totalorder %s426, %s427
    %p439 = scmp.eq.s32.totalorder %s39, 1
    %p440 = por %p438, %p439
    %p442 = scmp.ne.s32.totalorder %s427, %s441
    %p443 = scmp.eq.s32.totalorder %s39, 0
    %p444 = por %p442, %p443
    %s446 = sadd.s32 %s445, 1
    %p449 = scmp.eq.s32.totalorder %s33, 1
    %p450 = scmp.ne.s32.totalorder %s445, %s447
    %p451 = scmp.eq.s32.totalorder %s33, 0
    %p452 = por %p450, %p451
    %p453 = scmp.ne.s32.totalorder %s445, %s447
    %p454 = scmp.eq.s32.totalorder %s38, 1
    %p455 = por %p453, %p454
    %p456 = scmp.ne.s32.totalorder %s447, %s448
    %p457 = scmp.eq.s32.totalorder %s38, 0
    %p458 = por %p456, %p457
    %p459 = scmp.ne.s32.totalorder %s447, %s448
    %p460 = scmp.eq.s32.totalorder %s39, 1
    %p461 = por %p459, %p460
    %p463 = scmp.ne.s32.totalorder %s448, %s462
    %p464 = scmp.eq.s32.totalorder %s39, 0
    %p465 = por %p463, %p464
    %s467 = sadd.s32 %s466, 1
    %p470 = scmp.eq.s32.totalorder %s33, 1
    %p471 = scmp.ne.s32.totalorder %s466, %s468
    %p472 = scmp.eq.s32.totalorder %s33, 0
    %p473 = por %p471, %p472
    %p474 = scmp.ne.s32.totalorder %s466, %s468
    %p475 = scmp.eq.s32.totalorder %s38, 1
    %p476 = por %p474, %p475
    %p477 = scmp.ne.s32.totalorder %s468, %s469
    %p478 = scmp.eq.s32.totalorder %s38, 0
    %p479 = por %p477, %p478
    %p480 = scmp.ne.s32.totalorder %s468, %s469
    %p481 = scmp.eq.s32.totalorder %s39, 1
    %p482 = por %p480, %p481
    %p484 = scmp.ne.s32.totalorder %s469, %s483
    %p485 = scmp.eq.s32.totalorder %s39, 0
    %p486 = por %p484, %p485
    %s488 = sadd.s32 %s487, 1
    %p491 = scmp.eq.s32.totalorder %s33, 1
    %p492 = scmp.ne.s32.totalorder %s487, %s489
    %p493 = scmp.eq.s32.totalorder %s33, 0
    %p494 = por %p492, %p493
    %p495 = scmp.ne.s32.totalorder %s487, %s489
    %p496 = scmp.eq.s32.totalorder %s38, 1
    %p497 = por %p495, %p496
    %p498 = scmp.ne.s32.totalorder %s489, %s490
    %p499 = scmp.eq.s32.totalorder %s38, 0
    %p500 = por %p498, %p499
    %p501 = scmp.ne.s32.totalorder %s489, %s490
    %p502 = scmp.eq.s32.totalorder %s39, 1
    %p503 = por %p501, %p502
    %p505 = scmp.ne.s32.totalorder %s490, %s504
    %p506 = scmp.eq.s32.totalorder %s39, 0
    %p507 = por %p505, %p506
    %s509 = sadd.s32 %s508, 1
    %p512 = scmp.eq.s32.totalorder %s33, 1
    %p513 = scmp.ne.s32.totalorder %s508, %s510
    %p514 = scmp.eq.s32.totalorder %s33, 0
    %p515 = por %p513, %p514
    %p516 = scmp.ne.s32.totalorder %s508, %s510
    %p517 = scmp.eq.s32.totalorder %s38, 1
    %p518 = por %p516, %p517
    %p519 = scmp.ne.s32.totalorder %s510, %s511
    %p520 = scmp.eq.s32.totalorder %s38, 0
    %p521 = por %p519, %p520
    %p522 = scmp.ne.s32.totalorder %s510, %s511
    %p523 = scmp.eq.s32.totalorder %s39, 1
    %p524 = por %p522, %p523
    %p526 = scmp.ne.s32.totalorder %s511, %s525
    %p527 = scmp.eq.s32.totalorder %s39, 0
    %p528 = por %p526, %p527
    %s530 = sadd.s32 %s529, 1
    %p533 = scmp.eq.s32.totalorder %s33, 1
    %p534 = scmp.ne.s32.totalorder %s529, %s531
    %p535 = scmp.eq.s32.totalorder %s33, 0
    %p536 = por %p534, %p535
    %p537 = scmp.ne.s32.totalorder %s529, %s531
    %p538 = scmp.eq.s32.totalorder %s38, 1
    %p539 = por %p537, %p538
    %p540 = scmp.ne.s32.totalorder %s531, %s532
    %p541 = scmp.eq.s32.totalorder %s38, 0
    %p542 = por %p540, %p541
    %p543 = scmp.ne.s32.totalorder %s531, %s532
    %p544 = scmp.eq.s32.totalorder %s39, 1
    %p545 = por %p543, %p544
    %p547 = scmp.ne.s32.totalorder %s532, %s546
    %p548 = scmp.eq.s32.totalorder %s39, 0
    %p549 = por %p547, %p548
    %s551 = sadd.s32 %s550, 1
    %p554 = scmp.eq.s32.totalorder %s33, 1
    %p555 = scmp.ne.s32.totalorder %s550, %s552
    %p556 = scmp.eq.s32.totalorder %s33, 0
    %p557 = por %p555, %p556
    %p558 = scmp.ne.s32.totalorder %s550, %s552
    %p559 = scmp.eq.s32.totalorder %s38, 1
    %p560 = por %p558, %p559
    %p561 = scmp.ne.s32.totalorder %s552, %s553
    %p562 = scmp.eq.s32.totalorder %s38, 0
    %p563 = por %p561, %p562
    %p564 = scmp.ne.s32.totalorder %s552, %s553
    %p565 = scmp.eq.s32.totalorder %s39, 1
    %p566 = por %p564, %p565
    %p568 = scmp.ne.s32.totalorder %s553, %s567
    %p569 = scmp.eq.s32.totalorder %s39, 0
    %p570 = por %p568, %p569
    %s572 = sadd.s32 %s571, 1
    %p575 = scmp.eq.s32.totalorder %s33, 1
    %p576 = scmp.ne.s32.totalorder %s571, %s573
    %p577 = scmp.eq.s32.totalorder %s33, 0
    %p578 = por %p576, %p577
    %p579 = scmp.ne.s32.totalorder %s571, %s573
    %p580 = scmp.eq.s32.totalorder %s38, 1
    %p581 = por %p579, %p580
    %p582 = scmp.ne.s32.totalorder %s573, %s574
    %p583 = scmp.eq.s32.totalorder %s38, 0
    %p584 = por %p582, %p583
    %p585 = scmp.ne.s32.totalorder %s573, %s574
    %p586 = scmp.eq.s32.totalorder %s39, 1
    %p587 = por %p585, %p586
    %p589 = scmp.ne.s32.totalorder %s574, %s588
    %p590 = scmp.eq.s32.totalorder %s39, 0
    %p591 = por %p589, %p590
    %s593 = sadd.s32 %s592, 1
    %p596 = scmp.eq.s32.totalorder %s33, 1
    %p597 = scmp.ne.s32.totalorder %s592, %s594
    %p598 = scmp.eq.s32.totalorder %s33, 0
    %p599 = por %p597, %p598
    %p600 = scmp.ne.s32.totalorder %s592, %s594
    %p601 = scmp.eq.s32.totalorder %s38, 1
    %p602 = por %p600, %p601
    %p603 = scmp.ne.s32.totalorder %s594, %s595
    %p604 = scmp.eq.s32.totalorder %s38, 0
    %p605 = por %p603, %p604
    %p606 = scmp.ne.s32.totalorder %s594, %s595
    %p607 = scmp.eq.s32.totalorder %s39, 1
    %p608 = por %p606, %p607
    %p610 = scmp.ne.s32.totalorder %s595, %s609
    %p611 = scmp.eq.s32.totalorder %s39, 0
    %p612 = por %p610, %p611
    %s613 = ssub.s32 %s33, %s40
    %p614 = scmp.eq.s32.totalorder %s613, 0
    %s616 = sadd.s32 %s615, 1
    %s617 = scalar_select %p614, %s615, %s616
    %p620 = pneg %p614
    %p621 = scmp.eq.s32.totalorder %s33, 1
    %p622 = por %p620, %p621
    %p623 = scmp.ne.s32.totalorder %s615, %s618
    %p624 = scmp.eq.s32.totalorder %s33, 0
    %p625 = por %p623, %p624
    %p626 = scmp.ne.s32.totalorder %s615, %s618
    %p627 = scmp.eq.s32.totalorder %s38, 1
    %p628 = por %p626, %p627
    %p629 = scmp.ne.s32.totalorder %s618, %s619
    %p630 = scmp.eq.s32.totalorder %s38, 0
    %p631 = por %p629, %p630
    %p632 = scmp.ne.s32.totalorder %s618, %s619
    %p633 = scmp.eq.s32.totalorder %s39, 1
    %p634 = por %p632, %p633
    %p636 = scmp.ne.s32.totalorder %s619, %s635
    %p637 = scmp.eq.s32.totalorder %s39, 0
    %p638 = por %p636, %p637
    %p639 = scmp.le.s32.totalorder 1, %s33
    %p640 = scmp.lt.s32.totalorder %s33, 3
    %p641 = pnand %p639, %p640
    %p642 = pneg %p641
    // Predicated region
    $region9: #{tpu_custom_call.1} parent=5 // pred_check
      _
    $region10: #{tpu_custom_call.1} parent=5 // pred_check_branch
      %644 = sbr.rel (%p641) target = $region12
    $region11: #{tpu_custom_call.1} parent=5 // pred_region
      %s645 = ssub.s32 %s33, 1
      // Predicated region
      $region13: #{tpu_custom_call.1} parent=11 // pred_check
        %p646 = pneg %p80
      $region14: #{tpu_custom_call.1} parent=11 // pred_check_branch
        %648 = sbr.rel (%p646) target = $region16
      $region15: #{tpu_custom_call.1} parent=11 // pred_region
        _
      $region16: #{tpu_custom_call.1} parent=11 // pred_fallthru
        _
      // Predicated region
      $region17: #{tpu_custom_call.1} parent=11 // pred_check
        %p649 = pneg %p101
      $region18: #{tpu_custom_call.1} parent=11 // pred_check_branch
        %651 = sbr.rel (%p649) target = $region20
      $region19: #{tpu_custom_call.1} parent=11 // pred_region
        _
      $region20: #{tpu_custom_call.1} parent=11 // pred_fallthru
        _
      // Predicated region
      $region21: #{tpu_custom_call.1} parent=11 // pred_check
        %p652 = pneg %p122
      $region22: #{tpu_custom_call.1} parent=11 // pred_check_branch
        %654 = sbr.rel (%p652) target = $region24
      $region23: #{tpu_custom_call.1} parent=11 // pred_region
        _
      $region24: #{tpu_custom_call.1} parent=11 // pred_fallthru
        _
      // Predicated region
      $region25: #{tpu_custom_call.1} parent=11 // pred_check
        %p655 = pneg %p143
      $region26: #{tpu_custom_call.1} parent=11 // pred_check_branch
        %657 = sbr.rel (%p655) target = $region28
      $region27: #{tpu_custom_call.1} parent=11 // pred_region
        _
      $region28: #{tpu_custom_call.1} parent=11 // pred_fallthru
        _
      // Predicated region
      $region29: #{tpu_custom_call.1} parent=11 // pred_check
        %p658 = pneg %p164
      $region30: #{tpu_custom_call.1} parent=11 // pred_check_branch
        %660 = sbr.rel (%p658) target = $region32
      $region31: #{tpu_custom_call.1} parent=11 // pred_region
        _
      $region32: #{tpu_custom_call.1} parent=11 // pred_fallthru
        _
      // Predicated region
      $region33: #{tpu_custom_call.1} parent=11 // pred_check
        %p661 = pneg %p185
      $region34: #{tpu_custom_call.1} parent=11 // pred_check_branch
        %663 = sbr.rel (%p661) target = $region36
      $region35: #{tpu_custom_call.1} parent=11 // pred_region
        _
      $region36: #{tpu_custom_call.1} parent=11 // pred_fallthru
        _
      // Predicated region
      $region37: #{tpu_custom_call.1} parent=11 // pred_check
        %p664 = pneg %p206
      $region38: #{tpu_custom_call.1} parent=11 // pred_check_branch
        %666 = sbr.rel (%p664) target = $region40
      $region39: #{tpu_custom_call.1} parent=11 // pred_region
        _
      $region40: #{tpu_custom_call.1} parent=11 // pred_fallthru
        _
      // Predicated region
      $region41: #{tpu_custom_call.1} parent=11 // pred_check
        %p667 = pneg %p227
      $region42: #{tpu_custom_call.1} parent=11 // pred_check_branch
        %669 = sbr.rel (%p667) target = $region44
      $region43: #{tpu_custom_call.1} parent=11 // pred_region
        _
      $region44: #{tpu_custom_call.1} parent=11 // pred_fallthru
        _
      // Predicated region
      $region45: #{tpu_custom_call.1} parent=11 // pred_check
        %p670 = pneg %p248
      $region46: #{tpu_custom_call.1} parent=11 // pred_check_branch
        %672 = sbr.rel (%p670) target = $region48
      $region47: #{tpu_custom_call.1} parent=11 // pred_region
        _
      $region48: #{tpu_custom_call.1} parent=11 // pred_fallthru
        _
      // Predicated region
      $region49: #{tpu_custom_call.1} parent=11 // pred_check
        %p673 = pneg %p269
      $region50: #{tpu_custom_call.1} parent=11 // pred_check_branch
        %675 = sbr.rel (%p673) target = $region52
      $region51: #{tpu_custom_call.1} parent=11 // pred_region
        _
      $region52: #{tpu_custom_call.1} parent=11 // pred_fallthru
        _
      // Predicated region
      $region53: #{tpu_custom_call.1} parent=11 // pred_check
        %p676 = pneg %p290
      $region54: #{tpu_custom_call.1} parent=11 // pred_check_branch
        %678 = sbr.rel (%p676) target = $region56
      $region55: #{tpu_custom_call.1} parent=11 // pred_region
        _
      $region56: #{tpu_custom_call.1} parent=11 // pred_fallthru
        _
      // Predicated region
      $region57: #{tpu_custom_call.1} parent=11 // pred_check
        %p679 = pneg %p311
      $region58: #{tpu_custom_call.1} parent=11 // pred_check_branch
        %681 = sbr.rel (%p679) target = $region60
      $region59: #{tpu_custom_call.1} parent=11 // pred_region
        _
      $region60: #{tpu_custom_call.1} parent=11 // pred_fallthru
        _
      // Predicated region
      $region61: #{tpu_custom_call.1} parent=11 // pred_check
        %p682 = pneg %p332
      $region62: #{tpu_custom_call.1} parent=11 // pred_check_branch
        %684 = sbr.rel (%p682) target = $region64
      $region63: #{tpu_custom_call.1} parent=11 // pred_region
        _
      $region64: #{tpu_custom_call.1} parent=11 // pred_fallthru
        _
      // Predicated region
      $region65: #{tpu_custom_call.1} parent=11 // pred_check
        %p685 = pneg %p353
      $region66: #{tpu_custom_call.1} parent=11 // pred_check_branch
        %687 = sbr.rel (%p685) target = $region68
      $region67: #{tpu_custom_call.1} parent=11 // pred_region
        _
      $region68: #{tpu_custom_call.1} parent=11 // pred_fallthru
        _
      // Predicated region
      $region69: #{tpu_custom_call.1} parent=11 // pred_check
        %p688 = pneg %p374
      $region70: #{tpu_custom_call.1} parent=11 // pred_check_branch
        %690 = sbr.rel (%p688) target = $region72
      $region71: #{tpu_custom_call.1} parent=11 // pred_region
        _
      $region72: #{tpu_custom_call.1} parent=11 // pred_fallthru
        _
      // Predicated region
      $region73: #{tpu_custom_call.1} parent=11 // pred_check
        %p691 = pneg %p395
      $region74: #{tpu_custom_call.1} parent=11 // pred_check_branch
        %693 = sbr.rel (%p691) target = $region76
      $region75: #{tpu_custom_call.1} parent=11 // pred_region
        _
      $region76: #{tpu_custom_call.1} parent=11 // pred_fallthru
        _
      // Predicated region
      $region77: #{tpu_custom_call.1} parent=11 // pred_check
        %p694 = pneg %p416
      $region78: #{tpu_custom_call.1} parent=11 // pred_check_branch
        %696 = sbr.rel (%p694) target = $region80
      $region79: #{tpu_custom_call.1} parent=11 // pred_region
        _
      $region80: #{tpu_custom_call.1} parent=11 // pred_fallthru
        _
      // Predicated region
      $region81: #{tpu_custom_call.1} parent=11 // pred_check
        %p697 = pneg %p437
      $region82: #{tpu_custom_call.1} parent=11 // pred_check_branch
        %699 = sbr.rel (%p697) target = $region84
      $region83: #{tpu_custom_call.1} parent=11 // pred_region
        _
      $region84: #{tpu_custom_call.1} parent=11 // pred_fallthru
        _
      // Predicated region
      $region85: #{tpu_custom_call.1} parent=11 // pred_check
        %p700 = pneg %p458
      $region86: #{tpu_custom_call.1} parent=11 // pred_check_branch
        %702 = sbr.rel (%p700) target = $region88
      $region87: #{tpu_custom_call.1} parent=11 // pred_region
        _
      $region88: #{tpu_custom_call.1} parent=11 // pred_fallthru
        _
      // Predicated region
      $region89: #{tpu_custom_call.1} parent=11 // pred_check
        %p703 = pneg %p479
      $region90: #{tpu_custom_call.1} parent=11 // pred_check_branch
        %705 = sbr.rel (%p703) target = $region92
      $region91: #{tpu_custom_call.1} parent=11 // pred_region
        _
      $region92: #{tpu_custom_call.1} parent=11 // pred_fallthru
        _
      // Predicated region
      $region93: #{tpu_custom_call.1} parent=11 // pred_check
        %p706 = pneg %p500
      $region94: #{tpu_custom_call.1} parent=11 // pred_check_branch
        %708 = sbr.rel (%p706) target = $region96
      $region95: #{tpu_custom_call.1} parent=11 // pred_region
        _
      $region96: #{tpu_custom_call.1} parent=11 // pred_fallthru
        _
      // Predicated region
      $region97: #{tpu_custom_call.1} parent=11 // pred_check
        %p709 = pneg %p521
      $region98: #{tpu_custom_call.1} parent=11 // pred_check_branch
        %711 = sbr.rel (%p709) target = $region100
      $region99: #{tpu_custom_call.1} parent=11 // pred_region
        _
      $region100: #{tpu_custom_call.1} parent=11 // pred_fallthru
        _
      // Predicated region
      $region101: #{tpu_custom_call.1} parent=11 // pred_check
        %p712 = pneg %p542
      $region102: #{tpu_custom_call.1} parent=11 // pred_check_branch
        %714 = sbr.rel (%p712) target = $region104
      $region103: #{tpu_custom_call.1} parent=11 // pred_region
        _
      $region104: #{tpu_custom_call.1} parent=11 // pred_fallthru
        _
      // Predicated region
      $region105: #{tpu_custom_call.1} parent=11 // pred_check
        %p715 = pneg %p563
      $region106: #{tpu_custom_call.1} parent=11 // pred_check_branch
        %717 = sbr.rel (%p715) target = $region108
      $region107: #{tpu_custom_call.1} parent=11 // pred_region
        _
      $region108: #{tpu_custom_call.1} parent=11 // pred_fallthru
        _
      // Predicated region
      $region109: #{tpu_custom_call.1} parent=11 // pred_check
        %p718 = pneg %p584
      $region110: #{tpu_custom_call.1} parent=11 // pred_check_branch
        %720 = sbr.rel (%p718) target = $region112
      $region111: #{tpu_custom_call.1} parent=11 // pred_region
        _
      $region112: #{tpu_custom_call.1} parent=11 // pred_fallthru
        _
      // Predicated region
      $region113: #{tpu_custom_call.1} parent=11 // pred_check
        %p721 = pneg %p605
      $region114: #{tpu_custom_call.1} parent=11 // pred_check_branch
        %723 = sbr.rel (%p721) target = $region116
      $region115: #{tpu_custom_call.1} parent=11 // pred_region
        _
      $region116: #{tpu_custom_call.1} parent=11 // pred_fallthru
        _
    $region12: #{tpu_custom_call.1} parent=5 // pred_fallthru
      _
    %p724 = scmp.lt.s32.totalorder %s33, 2
    // Predicated region
    $region117: #{tpu_custom_call.1} parent=5 // pred_check
      %p725 = pneg %p724
    $region118: #{tpu_custom_call.1} parent=5 // pred_check_branch
      %727 = sbr.rel (%p725) target = $region120
    $region119: #{tpu_custom_call.1} parent=5 // pred_region
      // Predicated region
      $region121: #{tpu_custom_call.1} parent=119 // pred_check
        %p728 = pneg %p53
      $region122: #{tpu_custom_call.1} parent=119 // pred_check_branch
        %730 = sbr.rel (%p728) target = $region124
      $region123: #{tpu_custom_call.1} parent=119 // pred_region
        %p731 = scmp.lt.s32.totalorder %s33, 1
        %s732 = scalar_select %p731, %s33, 1
        %s733 = smul.addr %s732, 3
        %s734 = scalar_lea.vmem %s0, %s733
      $region124: #{tpu_custom_call.1} parent=119 // pred_fallthru
        _
    $region120: #{tpu_custom_call.1} parent=5 // pred_fallthru
      _
    %p735 = scmp.le.s32.totalorder 1, %s33
    %p736 = scmp.lt.s32.totalorder %s33, 3
    %p737 = pnand %p735, %p736
    %p738 = pneg %p737
    // Predicated region
    $region125: #{tpu_custom_call.1} parent=5 // pred_check
      _
    $region126: #{tpu_custom_call.1} parent=5 // pred_check_branch
      %740 = sbr.rel (%p737) target = $region128
    $region127: #{tpu_custom_call.1} parent=5 // pred_region
      %s741 = ssub.s32 %s33, 1
      %p742 = scmp.lt.s32.totalorder %s38, 1
      %s743 = scalar_select %p742, %s38, 1
      %s744 = smul.addr %s743, 3
      %s745 = scalar_lea.vmem %s0, %s744
      %p746 = pneg %p59
      %p747 = pneg %p56
      %p748 = pneg %p80
      %p749 = pneg %p77
      %p750 = pneg %p101
      %p751 = pneg %p98
      %p752 = pneg %p122
      %p753 = pneg %p119
      %p754 = pneg %p143
      %p755 = pneg %p140
      %p756 = pneg %p164
      %p757 = pneg %p161
      %p758 = pneg %p185
      %p759 = pneg %p182
      %p760 = pneg %p206
      %p761 = pneg %p203
      %p762 = pneg %p227
      %p763 = pneg %p224
      %p764 = pneg %p248
      %p765 = pneg %p245
      %p766 = pneg %p269
      %p767 = pneg %p266
      %p768 = pneg %p290
      %p769 = pneg %p287
      %p770 = pneg %p311
      %p771 = pneg %p308
      %p772 = pneg %p332
      %p773 = pneg %p329
      %p774 = pneg %p353
      %p775 = pneg %p350
      %p776 = pneg %p374
      %p777 = pneg %p371
      %p778 = pneg %p395
      %p779 = pneg %p392
      %p780 = pneg %p416
      %p781 = pneg %p413
      %p782 = pneg %p437
      %p783 = pneg %p434
      %p784 = pneg %p458
      %p785 = pneg %p455
      %p786 = pneg %p479
      %p787 = pneg %p476
      %p788 = pneg %p500
      %p789 = pneg %p497
      %p790 = pneg %p521
      %p791 = pneg %p518
      %p792 = pneg %p542
      %p793 = pneg %p539
      %p794 = pneg %p563
      %p795 = pneg %p560
      %p796 = pneg %p584
      %p797 = pneg %p581
      %p798 = pneg %p605
      %p799 = pneg %p602
      %p800 = pneg %p631
      %p801 = pneg %p628
      %p802 = scmp.lt.s32.totalorder %s38, 1
      %s803 = scalar_select %p802, %s38, 1
      %s804 = smul.addr %s803, 4
      %s805 = scalar_lea.vmem %s27, %s804
      %p806 = scmp.lt.s32.totalorder %s38, 1
      %s807 = scalar_select %p806, %s38, 1
      %s808 = smul.addr %s807, 3
      %s809 = scalar_lea.vmem %s0, %s808
      %p810 = scmp.lt.s32.totalorder %s38, 1
      %s811 = scalar_select %p810, %s38, 1
      %s812 = smul.addr %s811, 4
      %s813 = scalar_lea.vmem %s27, %s812
      %v815 = vld [vmem:[%s809] sm:$0x7]
      %v816 = vld [vmem:[%s1] sm:$0xff]
      %818 = vset.pattern.permute.xlu0 0
      %819 = vperm.xlu0 %818, %v816
      %v820 = vpop.permute.xlu0 %819
      %v823 = vperm.slane %v815, 0
      %v824 = vperm.slane %v815, 1
      %v827 = vmul.f32 %v820, %v823
      %v828 = vmul.f32 %v820, %v824
      %v829 = vadd.f32 %v827, 0.0
      %v830 = vadd.f32 %v828, 0.0
      %s831 = scalar_lea.vmem %s1, 8
      %v832 = vld [vmem:[%s831] sm:$0xff]
      %834 = vset.pattern.permute.xlu0 0
      %835 = vperm.xlu0 %834, %v832
      %v836 = vpop.permute.xlu0 %835
      %v838 = vmul.f32 %v836, %v823
      %v839 = vmul.f32 %v836, %v824
      %842 = vrot.lane.b32.xlu0 %v838, 127
      %v843 = vpop.permute.xlu0 %842
      %844 = vrot.lane.b32.xlu0 %v839, 127
      %v845 = vpop.permute.xlu0 %844
      %vm846 = vcmask 1039360
      %v847 = vsel %vm846, %v843, %v845
      %v850 = vadd.f32 %v829, %v847
      %v851 = vadd.f32 %v830, %v845
      %s852 = scalar_lea.vmem %s1, 16
      %v853 = vld [vmem:[%s852] sm:$0xff]
      %855 = vset.pattern.permute.xlu0 0
      %856 = vperm.xlu0 %855, %v853
      %v857 = vpop.permute.xlu0 %856
      %v859 = vmul.f32 %v857, %v823
      %v860 = vmul.f32 %v857, %v824
      %863 = vrot.lane.b32.xlu0 %v859, 126
      %v864 = vpop.permute.xlu0 %863
      %865 = vrot.lane.b32.xlu0 %v860, 126
      %v866 = vpop.permute.xlu0 %865
      %vm867 = vcmask 1031168
      %v868 = vsel %vm867, %v864, %v866
      %v871 = vadd.f32 %v850, %v868
      %v872 = vadd.f32 %v851, %v866
      %s873 = scalar_lea.vmem %s1, 24
      %v874 = vld [vmem:[%s873] sm:$0xff]
      %876 = vset.pattern.permute.xlu0 0
      %877 = vperm.xlu0 %876, %v874
      %v878 = vpop.permute.xlu0 %877
      %v880 = vmul.f32 %v878, %v823
      %v881 = vmul.f32 %v878, %v824
      %884 = vrot.lane.b32.xlu0 %v880, 125
      %v885 = vpop.permute.xlu0 %884
      %886 = vrot.lane.b32.xlu0 %v881, 125
      %v887 = vpop.permute.xlu0 %886
      %vm888 = vcmask 1022976
      %v889 = vsel %vm888, %v885, %v887
      %v892 = vadd.f32 %v871, %v889
      %v893 = vadd.f32 %v872, %v887
      %s894 = scalar_lea.vmem %s1, 32
      %v895 = vld [vmem:[%s894] sm:$0xff]
      %897 = vset.pattern.permute.xlu0 0
      %898 = vperm.xlu0 %897, %v895
      %v899 = vpop.permute.xlu0 %898
      %v901 = vmul.f32 %v899, %v823
      %v902 = vmul.f32 %v899, %v824
      %905 = vrot.lane.b32.xlu0 %v901, 124
      %v906 = vpop.permute.xlu0 %905
      %907 = vrot.lane.b32.xlu0 %v902, 124
      %v908 = vpop.permute.xlu0 %907
      %vm909 = vcmask 1014784
      %v910 = vsel %vm909, %v906, %v908
      %v913 = vadd.f32 %v892, %v910
      %v914 = vadd.f32 %v893, %v908
      %s915 = scalar_lea.vmem %s1, 40
      %v916 = vld [vmem:[%s915] sm:$0xff]
      %918 = vset.pattern.permute.xlu0 0
      %919 = vperm.xlu0 %918, %v916
      %v920 = vpop.permute.xlu0 %919
      %v922 = vmul.f32 %v920, %v823
      %v923 = vmul.f32 %v920, %v824
      %926 = vrot.lane.b32.xlu0 %v922, 92
      %v927 = vpop.permute.xlu0 %926
      %928 = vrot.lane.b32.xlu0 %v923, 92
      %v929 = vpop.permute.xlu0 %928
      %vm930 = vcmask 752640
      %v931 = vsel %vm930, %v927, %v929
      %v934 = vadd.f32 %v913, %v931
      %v935 = vadd.f32 %v914, %v929
      %s936 = scalar_lea.vmem %s1, 48
      %v937 = vld [vmem:[%s936] sm:$0xff]
      %939 = vset.pattern.permute.xlu0 0
      %940 = vperm.xlu0 %939, %v937
      %v941 = vpop.permute.xlu0 %940
      %v943 = vmul.f32 %v941, %v823
      %v944 = vmul.f32 %v941, %v824
      %947 = vrot.lane.b32.xlu0 %v943, 91
      %v948 = vpop.permute.xlu0 %947
      %949 = vrot.lane.b32.xlu0 %v944, 91
      %v950 = vpop.permute.xlu0 %949
      %vm951 = vcmask 744448
      %v952 = vsel %vm951, %v948, %v950
      %v955 = vadd.f32 %v934, %v952
      %v956 = vadd.f32 %v935, %v950
      %s957 = scalar_lea.vmem %s1, 56
      %v958 = vld [vmem:[%s957] sm:$0xff]
      %960 = vset.pattern.permute.xlu0 0
      %961 = vperm.xlu0 %960, %v958
      %v962 = vpop.permute.xlu0 %961
      %v964 = vmul.f32 %v962, %v823
      %v965 = vmul.f32 %v962, %v824
      %968 = vrot.lane.b32.xlu0 %v964, 90
      %v969 = vpop.permute.xlu0 %968
      %970 = vrot.lane.b32.xlu0 %v965, 90
      %v971 = vpop.permute.xlu0 %970
      %vm972 = vcmask 736256
      %v973 = vsel %vm972, %v969, %v971
      %v976 = vadd.f32 %v955, %v973
      %v977 = vadd.f32 %v956, %v971
      %s978 = scalar_lea.vmem %s1, 64
      %v979 = vld [vmem:[%s978] sm:$0xff]
      %981 = vset.pattern.permute.xlu0 0
      %982 = vperm.xlu0 %981, %v979
      %v983 = vpop.permute.xlu0 %982
      %v985 = vmul.f32 %v983, %v823
      %v986 = vmul.f32 %v983, %v824
      %989 = vrot.lane.b32.xlu0 %v985, 89
      %v990 = vpop.permute.xlu0 %989
      %991 = vrot.lane.b32.xlu0 %v986, 89
      %v992 = vpop.permute.xlu0 %991
      %vm993 = vcmask 728064
      %v994 = vsel %vm993, %v990, %v992
      %v997 = vadd.f32 %v976, %v994
      %v998 = vadd.f32 %v977, %v992
      %s999 = scalar_lea.vmem %s1, 72
      %v1000 = vld [vmem:[%s999] sm:$0xff]
      %1002 = vset.pattern.permute.xlu0 0
      %1003 = vperm.xlu0 %1002, %v1000
      %v1004 = vpop.permute.xlu0 %1003
      %v1006 = vmul.f32 %v1004, %v823
      %v1007 = vmul.f32 %v1004, %v824
      %1010 = vrot.lane.b32.xlu0 %v1006, 88
      %v1011 = vpop.permute.xlu0 %1010
      %1012 = vrot.lane.b32.xlu0 %v1007, 88
      %v1013 = vpop.permute.xlu0 %1012
      %vm1014 = vcmask 719872
      %v1015 = vsel %vm1014, %v1011, %v1013
      %v1018 = vadd.f32 %v997, %v1015
      %v1019 = vadd.f32 %v998, %v1013
      %s1020 = scalar_lea.vmem %s1, 80
      %v1021 = vld [vmem:[%s1020] sm:$0xff]
      %1023 = vset.pattern.permute.xlu0 0
      %1024 = vperm.xlu0 %1023, %v1021
      %v1025 = vpop.permute.xlu0 %1024
      %v1027 = vperm.slane %v815, 2
      %v1029 = vmul.f32 %v1025, %v823
      %v1030 = vmul.f32 %v1025, %v824
      %v1031 = vmul.f32 %v1025, %v1027
      %1035 = vrot.lane.b32.xlu0 %v1029, 56
      %v1036 = vpop.permute.xlu0 %1035
      %1037 = vrot.lane.b32.xlu0 %v1030, 56
      %v1038 = vpop.permute.xlu0 %1037
      %1039 = vrot.lane.b32.xlu0 %v1031, 56
      %v1040 = vpop.permute.xlu0 %1039
      %vm1041 = vcmask 457728
      %v1042 = vsel %vm1041, %v1036, %v1038
      %v1043 = vsel %vm1041, %v1038, %v1040
      %v1046 = vadd.f32 %v1018, %v1042
      %v1047 = vadd.f32 %v1019, %v1043
      %s1048 = scalar_lea.vmem %s1, 88
      %v1049 = vld [vmem:[%s1048] sm:$0xff]
      %1051 = vset.pattern.permute.xlu0 0
      %1052 = vperm.xlu0 %1051, %v1049
      %v1053 = vpop.permute.xlu0 %1052
      %v1055 = vmul.f32 %v1053, %v823
      %v1056 = vmul.f32 %v1053, %v824
      %v1057 = vmul.f32 %v1053, %v1027
      %1061 = vrot.lane.b32.xlu0 %v1055, 55
      %v1062 = vpop.permute.xlu0 %1061
      %1063 = vrot.lane.b32.xlu0 %v1056, 55
      %v1064 = vpop.permute.xlu0 %1063
      %1065 = vrot.lane.b32.xlu0 %v1057, 55
      %v1066 = vpop.permute.xlu0 %1065
      %vm1067 = vcmask 449536
      %v1068 = vsel %vm1067, %v1062, %v1064
      %v1069 = vsel %vm1067, %v1064, %v1066
      %v1072 = vadd.f32 %v1046, %v1068
      %v1073 = vadd.f32 %v1047, %v1069
      %s1074 = scalar_lea.vmem %s1, 96
      %v1075 = vld [vmem:[%s1074] sm:$0xff]
      %1077 = vset.pattern.permute.xlu0 0
      %1078 = vperm.xlu0 %1077, %v1075
      %v1079 = vpop.permute.xlu0 %1078
      %v1081 = vmul.f32 %v1079, %v823
      %v1082 = vmul.f32 %v1079, %v824
      %v1083 = vmul.f32 %v1079, %v1027
      %1087 = vrot.lane.b32.xlu0 %v1081, 54
      %v1088 = vpop.permute.xlu0 %1087
      %1089 = vrot.lane.b32.xlu0 %v1082, 54
      %v1090 = vpop.permute.xlu0 %1089
      %1091 = vrot.lane.b32.xlu0 %v1083, 54
      %v1092 = vpop.permute.xlu0 %1091
      %vm1093 = vcmask 441344
      %v1094 = vsel %vm1093, %v1088, %v1090
      %v1095 = vsel %vm1093, %v1090, %v1092
      %v1098 = vadd.f32 %v1072, %v1094
      %v1099 = vadd.f32 %v1073, %v1095
      %s1100 = scalar_lea.vmem %s1, 104
      %v1101 = vld [vmem:[%s1100] sm:$0xff]
      %1103 = vset.pattern.permute.xlu0 0
      %1104 = vperm.xlu0 %1103, %v1101
      %v1105 = vpop.permute.xlu0 %1104
      %v1107 = vmul.f32 %v1105, %v823
      %v1108 = vmul.f32 %v1105, %v824
      %v1109 = vmul.f32 %v1105, %v1027
      %1113 = vrot.lane.b32.xlu0 %v1107, 53
      %v1114 = vpop.permute.xlu0 %1113
      %1115 = vrot.lane.b32.xlu0 %v1108, 53
      %v1116 = vpop.permute.xlu0 %1115
      %1117 = vrot.lane.b32.xlu0 %v1109, 53
      %v1118 = vpop.permute.xlu0 %1117
      %vm1119 = vcmask 433152
      %v1120 = vsel %vm1119, %v1114, %v1116
      %v1121 = vsel %vm1119, %v1116, %v1118
      %v1124 = vadd.f32 %v1098, %v1120
      %v1125 = vadd.f32 %v1099, %v1121
      %s1126 = scalar_lea.vmem %s1, 112
      %v1127 = vld [vmem:[%s1126] sm:$0xff]
      %1129 = vset.pattern.permute.xlu0 0
      %1130 = vperm.xlu0 %1129, %v1127
      %v1131 = vpop.permute.xlu0 %1130
      %v1133 = vmul.f32 %v1131, %v823
      %v1134 = vmul.f32 %v1131, %v824
      %v1135 = vmul.f32 %v1131, %v1027
      %1139 = vrot.lane.b32.xlu0 %v1133, 52
      %v1140 = vpop.permute.xlu0 %1139
      %1141 = vrot.lane.b32.xlu0 %v1134, 52
      %v1142 = vpop.permute.xlu0 %1141
      %1143 = vrot.lane.b32.xlu0 %v1135, 52
      %v1144 = vpop.permute.xlu0 %1143
      %vm1145 = vcmask 424960
      %v1146 = vsel %vm1145, %v1140, %v1142
      %v1147 = vsel %vm1145, %v1142, %v1144
      %v1150 = vadd.f32 %v1124, %v1146
      %v1151 = vadd.f32 %v1125, %v1147
      %v1152 = vld [vmem:[%s2] sm:$0xff]
      %1154 = vset.pattern.permute.xlu0 0
      %1155 = vperm.xlu0 %1154, %v1152
      %v1156 = vpop.permute.xlu0 %1155
      %v1158 = vadd.f32 %v1150, %v1156
      %v1159 = vadd.f32 %v1151, %v1156
      %v1160 = vmax.f32 %v1158, 0.0
      %v1161 = vmax.f32 %v1159, 0.0
      %v1162 = vld [vmem:[%s5] sm:$0x3]
      %v1164 = vperm.slane %v1162, 0
      %v1165 = vperm.slane %v1162, 1
      %v1168 = vmul.f32 %v1160, %v1164
      %v1169 = vmul.f32 %v1161, %v1165
      %vm1170 = vcmask 310272
      %1171 = vst.msk [vmem:[#allocation5] sm:$0xff] %vm1170, 0.0
      %vm1172 = vcmask 1048560
      %1173 = vst.msk [vmem:[#allocation5 + $0x8] sm:$0xff] %vm1172, 0.0
      %vm1174 = vcmask 293888
      %1175 = vst.msk [vmem:[#allocation5 + $0x10] sm:$0xff] %vm1174, 0.0
      %1178 = vrot.lane.b32.xlu0 %v1168, 38
      %v1179 = vpop.permute.xlu0 %1178
      %1180 = vrot.lane.b32.xlu0 %v1169, 38
      %v1181 = vpop.permute.xlu0 %1180
      %v1182 = vsel %vm1170, %v1179, %v1181
      %vm1185 = vcmask 1047856
      %1186 = vst.msk [vmem:[#allocation5] sm:$0xff] %vm1185, %v1179
      %1187 = vst.msk [vmem:[#allocation5 + $0x8] sm:$0xff] %vm867, %v1182
      %v1188 = vld [vmem:[%s3] sm:$0xff]
      %v1189 = vld [vmem:[#allocation5] sm:$0xff]
      %v1190 = vld [vmem:[#allocation5 + $0x8] sm:$0xff]
      %1192 = vset.pattern.permute.xlu0 0
      %1193 = vperm.xlu0 %1192, %v1188
      %v1194 = vpop.permute.xlu0 %1193
      %v1196 = vmul.f32 %v1194, %v1189
      %v1197 = vmul.f32 %v1194, %v1190
      %v1198 = vadd.f32 %v1196, 0.0
      %v1199 = vadd.f32 %v1197, 0.0
      %s1200 = scalar_lea.vmem %s3, 8
      %v1201 = vld [vmem:[%s1200] sm:$0xff]
      %1203 = vset.pattern.permute.xlu0 0
      %1204 = vperm.xlu0 %1203, %v1201
      %v1205 = vpop.permute.xlu0 %1204
      %v1207 = vmul.f32 %v1205, %v1189
      %v1208 = vmul.f32 %v1205, %v1190
      %1211 = vrot.lane.b32.xlu0 %v1207, 127
      %v1212 = vpop.permute.xlu0 %1211
      %1213 = vrot.lane.b32.xlu0 %v1208, 127
      %v1214 = vpop.permute.xlu0 %1213
      %v1215 = vsel %vm846, %v1212, %v1214
      %v1218 = vadd.f32 %v1198, %v1215
      %v1219 = vadd.f32 %v1199, %v1214
      %s1220 = scalar_lea.vmem %s3, 16
      %v1221 = vld [vmem:[%s1220] sm:$0xff]
      %1223 = vset.pattern.permute.xlu0 0
      %1224 = vperm.xlu0 %1223, %v1221
      %v1225 = vpop.permute.xlu0 %1224
      %v1227 = vmul.f32 %v1225, %v1189
      %v1228 = vmul.f32 %v1225, %v1190
      %1231 = vrot.lane.b32.xlu0 %v1227, 126
      %v1232 = vpop.permute.xlu0 %1231
      %1233 = vrot.lane.b32.xlu0 %v1228, 126
      %v1234 = vpop.permute.xlu0 %1233
      %v1235 = vsel %vm867, %v1232, %v1234
      %v1238 = vadd.f32 %v1218, %v1235
      %v1239 = vadd.f32 %v1219, %v1234
      %s1240 = scalar_lea.vmem %s3, 24
      %v1241 = vld [vmem:[%s1240] sm:$0xff]
      %1243 = vset.pattern.permute.xlu0 0
      %1244 = vperm.xlu0 %1243, %v1241
      %v1245 = vpop.permute.xlu0 %1244
      %v1247 = vmul.f32 %v1245, %v1189
      %v1248 = vmul.f32 %v1245, %v1190
      %1251 = vrot.lane.b32.xlu0 %v1247, 92
      %v1252 = vpop.permute.xlu0 %1251
      %1253 = vrot.lane.b32.xlu0 %v1248, 92
      %v1254 = vpop.permute.xlu0 %1253
      %v1255 = vsel %vm930, %v1252, %v1254
      %v1258 = vadd.f32 %v1238, %v1255
      %v1259 = vadd.f32 %v1239, %v1254
      %s1260 = scalar_lea.vmem %s3, 32
      %v1261 = vld [vmem:[%s1260] sm:$0xff]
      %1263 = vset.pattern.permute.xlu0 0
      %1264 = vperm.xlu0 %1263, %v1261
      %v1265 = vpop.permute.xlu0 %1264
      %v1267 = vmul.f32 %v1265, %v1189
      %v1268 = vmul.f32 %v1265, %v1190
      %1271 = vrot.lane.b32.xlu0 %v1267, 91
      %v1272 = vpop.permute.xlu0 %1271
      %1273 = vrot.lane.b32.xlu0 %v1268, 91
      %v1274 = vpop.permute.xlu0 %1273
      %v1275 = vsel %vm951, %v1272, %v1274
      %v1278 = vadd.f32 %v1258, %v1275
      %v1279 = vadd.f32 %v1259, %v1274
      %s1280 = scalar_lea.vmem %s3, 40
      %v1281 = vld [vmem:[%s1280] sm:$0xff]
      %1283 = vset.pattern.permute.xlu0 0
      %1284 = vperm.xlu0 %1283, %v1281
      %v1285 = vpop.permute.xlu0 %1284
      %v1287 = vmul.f32 %v1285, %v1189
      %v1288 = vmul.f32 %v1285, %v1190
      %1291 = vrot.lane.b32.xlu0 %v1287, 90
      %v1292 = vpop.permute.xlu0 %1291
      %1293 = vrot.lane.b32.xlu0 %v1288, 90
      %v1294 = vpop.permute.xlu0 %1293
      %v1295 = vsel %vm972, %v1292, %v1294
      %v1298 = vadd.f32 %v1278, %v1295
      %v1299 = vadd.f32 %v1279, %v1294
      %s1300 = scalar_lea.vmem %s3, 48
      %v1301 = vld [vmem:[%s1300] sm:$0xff]
      %v1302 = vld [vmem:[#allocation5] sm:$0xff]
      %v1303 = vld [vmem:[#allocation5 + $0x8] sm:$0xff]
      %v1304 = vld [vmem:[#allocation5 + $0x10] sm:$0xff]
      %1306 = vset.pattern.permute.xlu0 0
      %1307 = vperm.xlu0 %1306, %v1301
      %v1308 = vpop.permute.xlu0 %1307
      %v1310 = vmul.f32 %v1308, %v1302
      %v1311 = vmul.f32 %v1308, %v1303
      %v1312 = vmul.f32 %v1308, %v1304
      %1316 = vrot.lane.b32.xlu0 %v1310, 56
      %v1317 = vpop.permute.xlu0 %1316
      %1318 = vrot.lane.b32.xlu0 %v1311, 56
      %v1319 = vpop.permute.xlu0 %1318
      %1320 = vrot.lane.b32.xlu0 %v1312, 56
      %v1321 = vpop.permute.xlu0 %1320
      %v1322 = vsel %vm1041, %v1317, %v1319
      %v1323 = vsel %vm1041, %v1319, %v1321
      %v1326 = vadd.f32 %v1298, %v1322
      %v1327 = vadd.f32 %v1299, %v1323
      %s1328 = scalar_lea.vmem %s3, 56
      %v1329 = vld [vmem:[%s1328] sm:$0xff]
      %1331 = vset.pattern.permute.xlu0 0
      %1332 = vperm.xlu0 %1331, %v1329
      %v1333 = vpop.permute.xlu0 %1332
      %v1335 = vmul.f32 %v1333, %v1302
      %v1336 = vmul.f32 %v1333, %v1303
      %v1337 = vmul.f32 %v1333, %v1304
      %1341 = vrot.lane.b32.xlu0 %v1335, 55
      %v1342 = vpop.permute.xlu0 %1341
      %1343 = vrot.lane.b32.xlu0 %v1336, 55
      %v1344 = vpop.permute.xlu0 %1343
      %1345 = vrot.lane.b32.xlu0 %v1337, 55
      %v1346 = vpop.permute.xlu0 %1345
      %v1347 = vsel %vm1067, %v1342, %v1344
      %v1348 = vsel %vm1067, %v1344, %v1346
      %v1351 = vadd.f32 %v1326, %v1347
      %v1352 = vadd.f32 %v1327, %v1348
      %s1353 = scalar_lea.vmem %s3, 64
      %v1354 = vld [vmem:[%s1353] sm:$0xff]
      %1356 = vset.pattern.permute.xlu0 0
      %1357 = vperm.xlu0 %1356, %v1354
      %v1358 = vpop.permute.xlu0 %1357
      %v1360 = vmul.f32 %v1358, %v1302
      %v1361 = vmul.f32 %v1358, %v1303
      %v1362 = vmul.f32 %v1358, %v1304
      %1366 = vrot.lane.b32.xlu0 %v1360, 54
      %v1367 = vpop.permute.xlu0 %1366
      %1368 = vrot.lane.b32.xlu0 %v1361, 54
      %v1369 = vpop.permute.xlu0 %1368
      %1370 = vrot.lane.b32.xlu0 %v1362, 54
      %v1371 = vpop.permute.xlu0 %1370
      %v1372 = vsel %vm1093, %v1367, %v1369
      %v1373 = vsel %vm1093, %v1369, %v1371
      %v1376 = vadd.f32 %v1351, %v1372
      %v1377 = vadd.f32 %v1352, %v1373
      %v1378 = vld [vmem:[%s4] sm:$0xff]
      %1380 = vset.pattern.permute.xlu0 0
      %1381 = vperm.xlu0 %1380, %v1378
      %v1382 = vpop.permute.xlu0 %1381
      %v1384 = vadd.f32 %v1376, %v1382
      %v1385 = vadd.f32 %v1377, %v1382
      %1388 = vrot.lane.b32.xlu0 %v1384, 127
      %v1389 = vpop.permute.xlu0 %1388
      %1390 = vrot.lane.b32.xlu0 %v1385, 127
      %v1391 = vpop.permute.xlu0 %1390
      %v1392 = vsel %vm846, %v1389, %v1391
      %v1395 = vmax.f32 %v1384, %v1392
      %v1396 = vmax.f32 %v1385, %v1391
      %v1397 = vld [vmem:[%s6] sm:$0xff]
      %v1398 = vld [vmem:[%s6 + $0x8] sm:$0xff]
      %v1399 = vld [vmem:[%s6 + $0x10] sm:$0xff]
      %v1400 = vld [vmem:[%s6 + $0x18] sm:$0xff]
      %v1401 = vld [vmem:[%s6 + $0x20] sm:$0xff]
      %v1402 = vld [vmem:[%s6 + $0x28] sm:$0xff]
      %v1403 = vld [vmem:[%s6 + $0x30] sm:$0xff]
      %v1404 = vld [vmem:[%s6 + $0x38] sm:$0xff]
      %v1405 = vld [vmem:[%s6 + $0x40] sm:$0xff]
      %v1406 = vld [vmem:[%s6 + $0x48] sm:$0xff]
      %v1407 = vld [vmem:[%s6 + $0x50] sm:$0xff]
      %v1408 = vld [vmem:[%s6 + $0x58] sm:$0xff]
      %v1409 = vld [vmem:[%s6 + $0x60] sm:$0xff]
      %v1410 = vld [vmem:[%s6 + $0x68] sm:$0xff]
      %v1411 = vld [vmem:[%s6 + $0x70] sm:$0xff]
      %v1412 = vld [vmem:[%s6 + $0x78] sm:$0xff]
      %v1413 = vld [vmem:[%s6 + $0x80] sm:$0xff]
      %v1414 = vld [vmem:[%s6 + $0x88] sm:$0xff]
      %v1415 = vld [vmem:[%s6 + $0x90] sm:$0xff]
      %v1416 = vld [vmem:[%s6 + $0x98] sm:$0xff]
      %v1417 = vld [vmem:[%s6 + $0xa0] sm:$0xff]
      %v1418 = vld [vmem:[%s6 + $0xa8] sm:$0xff]
      %v1419 = vld [vmem:[%s6 + $0xb0] sm:$0xff]
      %v1420 = vld [vmem:[%s6 + $0xb8] sm:$0xff]
      %v1421 = vld [vmem:[%s6 + $0xc0] sm:$0xff]
      %v1422 = vld [vmem:[%s6 + $0xc8] sm:$0xff]
      %v1423 = vld [vmem:[%s6 + $0xd0] sm:$0xff]
      %v1424 = vld [vmem:[%s6 + $0xd8] sm:$0xff]
      %v1425 = vld [vmem:[%s6 + $0xe0] sm:$0xff]
      %v1426 = vld [vmem:[%s6 + $0xe8] sm:$0xff]
      %v1427 = vld [vmem:[%s6 + $0xf0] sm:$0xff]
      %v1428 = vld [vmem:[%s6 + $0xf8] sm:$0xff]
      %v1429 = vld [vmem:[%s6 + $0x100] sm:$0xff]
      %v1430 = vld [vmem:[%s6 + $0x108] sm:$0xff]
      %v1431 = vld [vmem:[%s6 + $0x110] sm:$0xff]
      %v1432 = vld [vmem:[%s6 + $0x118] sm:$0xff]
      %v1433 = vld [vmem:[%s6 + $0x120] sm:$0xff]
      %v1434 = vld [vmem:[%s6 + $0x128] sm:$0xff]
      %v1435 = vld [vmem:[%s6 + $0x130] sm:$0xff]
      %v1436 = vld [vmem:[%s6 + $0x138] sm:$0xff]
      %v1437 = vld [vmem:[%s6 + $0x140] sm:$0xff]
      %v1438 = vld [vmem:[%s6 + $0x148] sm:$0xff]
      %v1439 = vld [vmem:[%s6 + $0x150] sm:$0xff]
      %v1440 = vld [vmem:[%s6 + $0x158] sm:$0xff]
      %v1441 = vld [vmem:[%s6 + $0x160] sm:$0xff]
      %v1442 = vld [vmem:[%s6 + $0x168] sm:$0xff]
      %v1443 = vld [vmem:[%s6 + $0x170] sm:$0xff]
      %v1444 = vld [vmem:[%s6 + $0x178] sm:$0xff]
      %v1445 = vld [vmem:[%s6 + $0x180] sm:$0xff]
      %v1446 = vld [vmem:[%s6 + $0x188] sm:$0xff]
      %v1447 = vld [vmem:[%s6 + $0x190] sm:$0xff]
      %v1448 = vld [vmem:[%s6 + $0x198] sm:$0xff]
      %v1449 = vld [vmem:[%s6 + $0x1a0] sm:$0x7f]
      %v1450 = vld [vmem:[%s6 + $0x1a8] sm:$0x7f]
      %1453 = vrot.lane.b32.xlu0 %v1395, 127
      %v1454 = vpop.permute.xlu0 %1453
      %1455 = vrot.lane.b32.xlu0 %v1396, 127
      %v1456 = vpop.permute.xlu0 %1455
      %v1457 = vsel %vm846, %v1454, %v1456
      %vm1459 = vcmask 711680
      %v1460 = vsel %vm1459, %v1456, 0
      %vm1462 = vcmask 1046528
      %v1464 = vsel %vm1462, %v1449, 0
      %v1467 = vsel %vm1462, %v1450, 0
      %1469 = vmatpush.msra.mxu0 %v1427
      %1470 = vmatpush.msra.mxu0 %v1425
      %1471 = vmatpush.msra.mxu0 %v1423
      %1472 = vmatpush.msra.mxu0 %v1421
      %1473 = vmatpush.msra.mxu0 %v1419
      %1474 = vmatpush.msra.mxu0 %v1417
      %1475 = vmatpush.msra.mxu0 %v1415
      %1476 = vmatpush.msra.mxu0 %v1413
      %1477 = vmatpush.msra.mxu0 %v1411
      %1478 = vmatpush.msra.mxu0 %v1409
      %1479 = vmatpush.msra.mxu0 %v1407
      %1480 = vmatpush.msra.mxu0 %v1405
      %1481 = vmatpush.msra.mxu0 %v1403
      %1482 = vmatpush.msra.mxu0 %v1401
      %1483 = vmatpush.msra.mxu0 %v1399
      %1484 = vmatpush.msra.mxu0 %v1397
      %1485 = vmatmul.f32.gmra.mxu0 %v1457
      %v1486 = vpop.f32.mrf.mxu0
      %v1487 = vadd.f32 0.0, %v1486
      %1488 = vdwg.mxu0
      %1489 = vmatpush.msra.mxu0 0.0
      %1490 = vmatpush.msra.mxu0 0.0
      %1491 = vmatpush.msra.mxu0 0.0
      %1492 = vmatpush.msra.mxu0 0.0
      %1493 = vmatpush.msra.mxu0 0.0
      %1494 = vmatpush.msra.mxu0 %v1464
      %1495 = vmatpush.msra.mxu0 %v1447
      %1496 = vmatpush.msra.mxu0 %v1445
      %1497 = vmatpush.msra.mxu0 %v1443
      %1498 = vmatpush.msra.mxu0 %v1441
      %1499 = vmatpush.msra.mxu0 %v1439
      %1500 = vmatpush.msra.mxu0 %v1437
      %1501 = vmatpush.msra.mxu0 %v1435
      %1502 = vmatpush.msra.mxu0 %v1433
      %1503 = vmatpush.msra.mxu0 %v1431
      %1504 = vmatpush.msra.mxu0 %v1429
      %1505 = vmatmul.f32.gmra.mxu0 %v1460
      %v1506 = vpop.f32.mrf.mxu0
      %v1507 = vadd.f32 %v1487, %v1506
      %1508 = vdwg.mxu0
      %1509 = vmatpush.msra.mxu0 %v1428
      %1510 = vmatpush.msra.mxu0 %v1426
      %1511 = vmatpush.msra.mxu0 %v1424
      %1512 = vmatpush.msra.mxu0 %v1422
      %1513 = vmatpush.msra.mxu0 %v1420
      %1514 = vmatpush.msra.mxu0 %v1418
      %1515 = vmatpush.msra.mxu0 %v1416
      %1516 = vmatpush.msra.mxu0 %v1414
      %1517 = vmatpush.msra.mxu0 %v1412
      %1518 = vmatpush.msra.mxu0 %v1410
      %1519 = vmatpush.msra.mxu0 %v1408
      %1520 = vmatpush.msra.mxu0 %v1406
      %1521 = vmatpush.msra.mxu0 %v1404
      %1522 = vmatpush.msra.mxu0 %v1402
      %1523 = vmatpush.msra.mxu0 %v1400
      %1524 = vmatpush.msra.mxu0 %v1398
      %1525 = vmatmul.f32.gmra.mxu0 %v1457
      %v1526 = vpop.f32.mrf.mxu0
      %v1527 = vadd.f32 0.0, %v1526
      %1528 = vdwg.mxu0
      %1529 = vmatpush.msra.mxu0 0.0
      %1530 = vmatpush.msra.mxu0 0.0
      %1531 = vmatpush.msra.mxu0 0.0
      %1532 = vmatpush.msra.mxu0 0.0
      %1533 = vmatpush.msra.mxu0 0.0
      %1534 = vmatpush.msra.mxu0 %v1467
      %1535 = vmatpush.msra.mxu0 %v1448
      %1536 = vmatpush.msra.mxu0 %v1446
      %1537 = vmatpush.msra.mxu0 %v1444
      %1538 = vmatpush.msra.mxu0 %v1442
      %1539 = vmatpush.msra.mxu0 %v1440
      %1540 = vmatpush.msra.mxu0 %v1438
      %1541 = vmatpush.msra.mxu0 %v1436
      %1542 = vmatpush.msra.mxu0 %v1434
      %1543 = vmatpush.msra.mxu0 %v1432
      %1544 = vmatpush.msra.mxu0 %v1430
      %1545 = vmatmul.f32.gmra.mxu0 %v1460
      %v1546 = vpop.f32.mrf.mxu0
      %v1547 = vadd.f32 %v1527, %v1546
      %1548 = vdwg.mxu0
      %1549 = vst [vmem:[#allocation2] sm:$0xff] %v1507
      %1550 = vst.msk [vmem:[#allocation2 + $0x8] sm:$0xff] %vm1174, %v1547
      %v1551 = vld [vmem:[#allocation2] sm:$0xff]
      %v1552 = vld [vmem:[#allocation2 + $0x8] sm:$0xff]
      %v1553 = vpack.c.bf16 %v1552, %v1551
      %v1554 = vld [vmem:[%s7] sm:$0xf]
      %s1555 = scalar_lea.vmem %s7, 4
      %v1556 = vld [vmem:[%s1555] sm:$0xf]
      %v1558 = vunpack.c.l.b16 %v1553
      %v1559 = vunpack.c.h.b16 %v1553
      %v1560 = vpack.c.b16 %v1558, %v1558
      %v1561 = vpack.c.b16 %v1559, %v1559
      %1562 = vrot.lane.b32.xlu0 %v1560, 107
      %v1563 = vpop.permute.xlu0 %1562
      %1564 = vrot.lane.b32.xlu0 %v1561, 107
      %v1565 = vpop.permute.xlu0 %1564
      %vm1566 = vcmask 875520
      %v1567 = vsel %vm1566, %v1563, %v1565
      %vm1568 = vcmask 64512
      %v1570 = vsel %vm1568, %v1556, 0
      %vm1572 = vcmask 1043456
      %v1574 = vsel %vm1572, %v1567, 0
      %1576 = vmatpush.bf16.msra.mxu0 0
      %1577 = vmatpush.bf16.msra.mxu0 0
      %1578 = vmatpush.bf16.msra.mxu0 0
      %1579 = vmatpush.bf16.msra.mxu0 0
      %1580 = vmatpush.bf16.msra.mxu0 0
      %1581 = vmatpush.bf16.msra.mxu0 0
      %1582 = vmatpush.bf16.msra.mxu0 0
      %1583 = vmatpush.bf16.msra.mxu0 %v1574
      %1584 = vmatmul.bf16.gmra.mxu0 %v1570
      %v1585 = vpop.f32.mrf.mxu0
      %v1586 = vadd.f32 0.0, %v1585
      %v1587 = vpop.f32.mrf.mxu0
      %1588 = vdwg.mxu0
      %1589 = vrot.lane.b32.xlu0 %v1560, 108
      %v1590 = vpop.permute.xlu0 %1589
      %1591 = vrot.lane.b32.xlu0 %v1561, 108
      %v1592 = vpop.permute.xlu0 %1591
      %vm1593 = vcmask 883712
      %v1594 = vsel %vm1593, %v1590, %v1592
      %v1596 = vsel %vm1568, %v1554, 0
      %v1599 = vsel %vm1572, %v1594, 0
      %1601 = vmatpush.bf16.msra.mxu0 0
      %1602 = vmatpush.bf16.msra.mxu0 0
      %1603 = vmatpush.bf16.msra.mxu0 0
      %1604 = vmatpush.bf16.msra.mxu0 0
      %1605 = vmatpush.bf16.msra.mxu0 0
      %1606 = vmatpush.bf16.msra.mxu0 0
      %1607 = vmatpush.bf16.msra.mxu0 0
      %1608 = vmatpush.bf16.msra.mxu0 %v1599
      %1609 = vmatmul.bf16.gmra.mxu0 %v1596
      %v1610 = vpop.f32.mrf.mxu0
      %v1611 = vadd.f32 %v1586, %v1610
      %v1612 = vpop.f32.mrf.mxu0
      %1613 = vdwg.mxu0
      %s1614 = scalar_lea.vmem %s7, 8
      %v1615 = vld [vmem:[%s1614] sm:$0xf]
      %1616 = vrot.lane.b32.xlu0 %v1560, 106
      %v1617 = vpop.permute.xlu0 %1616
      %1618 = vrot.lane.b32.xlu0 %v1561, 106
      %v1619 = vpop.permute.xlu0 %1618
      %vm1620 = vcmask 867328
      %v1621 = vsel %vm1620, %v1617, %v1619
      %v1623 = vsel %vm1568, %v1615, 0
      %v1626 = vsel %vm1572, %v1621, 0
      %1628 = vmatpush.bf16.msra.mxu0 0
      %1629 = vmatpush.bf16.msra.mxu0 0
      %1630 = vmatpush.bf16.msra.mxu0 0
      %1631 = vmatpush.bf16.msra.mxu0 0
      %1632 = vmatpush.bf16.msra.mxu0 0
      %1633 = vmatpush.bf16.msra.mxu0 0
      %1634 = vmatpush.bf16.msra.mxu0 0
      %1635 = vmatpush.bf16.msra.mxu0 %v1626
      %1636 = vmatmul.bf16.gmra.mxu0 %v1623
      %v1637 = vpop.f32.mrf.mxu0
      %v1638 = vadd.f32 0.0, %v1637
      %v1639 = vpop.f32.mrf.mxu0
      %1640 = vdwg.mxu0
      %v1641 = vadd.f32 %v1611, %v1638
      %s1642 = scalar_lea.vmem %s7, 12
      %v1643 = vld [vmem:[%s1642] sm:$0xf]
      %1644 = vrot.lane.b32.xlu0 %v1560, 105
      %v1645 = vpop.permute.xlu0 %1644
      %1646 = vrot.lane.b32.xlu0 %v1561, 105
      %v1647 = vpop.permute.xlu0 %1646
      %vm1648 = vcmask 859136
      %v1649 = vsel %vm1648, %v1645, %v1647
      %v1651 = vsel %vm1568, %v1643, 0
      %v1654 = vsel %vm1572, %v1649, 0
      %1656 = vmatpush.bf16.msra.mxu0 0
      %1657 = vmatpush.bf16.msra.mxu0 0
      %1658 = vmatpush.bf16.msra.mxu0 0
      %1659 = vmatpush.bf16.msra.mxu0 0
      %1660 = vmatpush.bf16.msra.mxu0 0
      %1661 = vmatpush.bf16.msra.mxu0 0
      %1662 = vmatpush.bf16.msra.mxu0 0
      %1663 = vmatpush.bf16.msra.mxu0 %v1654
      %1664 = vmatmul.bf16.gmra.mxu0 %v1651
      %v1665 = vpop.f32.mrf.mxu0
      %v1666 = vadd.f32 0.0, %v1665
      %v1667 = vpop.f32.mrf.mxu0
      %1668 = vdwg.mxu0
      %v1669 = vadd.f32 %v1641, %v1666
      %s1670 = scalar_lea.vmem %s7, 16
      %v1671 = vld [vmem:[%s1670] sm:$0xf]
      %1672 = vrot.lane.b32.xlu0 %v1560, 104
      %v1673 = vpop.permute.xlu0 %1672
      %1674 = vrot.lane.b32.xlu0 %v1561, 104
      %v1675 = vpop.permute.xlu0 %1674
      %vm1676 = vcmask 850944
      %v1677 = vsel %vm1676, %v1673, %v1675
      %v1679 = vsel %vm1568, %v1671, 0
      %v1682 = vsel %vm1572, %v1677, 0
      %1684 = vmatpush.bf16.msra.mxu0 0
      %1685 = vmatpush.bf16.msra.mxu0 0
      %1686 = vmatpush.bf16.msra.mxu0 0
      %1687 = vmatpush.bf16.msra.mxu0 0
      %1688 = vmatpush.bf16.msra.mxu0 0
      %1689 = vmatpush.bf16.msra.mxu0 0
      %1690 = vmatpush.bf16.msra.mxu0 0
      %1691 = vmatpush.bf16.msra.mxu0 %v1682
      %1692 = vmatmul.bf16.gmra.mxu0 %v1679
      %v1693 = vpop.f32.mrf.mxu0
      %v1694 = vadd.f32 0.0, %v1693
      %v1695 = vpop.f32.mrf.mxu0
      %1696 = vdwg.mxu0
      %v1697 = vadd.f32 %v1669, %v1694
      %v1698 = vld [vmem:[%s8] sm:$0xff]
      %1700 = vset.pattern.permute.xlu0 0
      %1701 = vperm.xlu0 %1700, %v1698
      %v1702 = vpop.permute.xlu0 %1701
      %v1704 = vadd.f32 %v1697, %v1702
      %v1705 = vmax.f32 %v1704, 0.0
      %v1706 = vld [vmem:[%s11] sm:$0x1]
      %v1708 = vperm.slane %v1706, 0
      %v1710 = vmul.f32 %v1705, %v1708
      %vm1711 = vcmask 179200
      %1712 = vst.msk [vmem:[#allocation6] sm:$0xff] %vm1711, 0.0
      %vm1713 = vcmask 294000
      %1714 = vst.msk [vmem:[#allocation6 + $0x8] sm:$0xff] %vm1713, 0.0
      %1716 = vrot.lane.b32.xlu0 %v1710, 22
      %v1717 = vpop.permute.xlu0 %1716
      %vm1719 = vcmask 1047728
      %1720 = vst.msk [vmem:[#allocation6] sm:$0xff] %vm1719, %v1717
      %vm1721 = vcmask 113664
      %1722 = vst.msk [vmem:[#allocation6 + $0x8] sm:$0xff] %vm1721, %v1717
      %v1723 = vld [vmem:[%s9] sm:$0xff]
      %v1724 = vld [vmem:[#allocation6] sm:$0xff]
      %1726 = vset.pattern.permute.xlu0 0
      %1727 = vperm.xlu0 %1726, %v1723
      %v1728 = vpop.permute.xlu0 %1727
      %v1730 = vmul.f32 %v1728, %v1724
      %v1731 = vadd.f32 %v1730, 0.0
      %s1732 = scalar_lea.vmem %s9, 8
      %v1733 = vld [vmem:[%s1732] sm:$0xff]
      %1735 = vset.pattern.permute.xlu0 0
      %1736 = vperm.xlu0 %1735, %v1733
      %v1737 = vpop.permute.xlu0 %1736
      %v1739 = vmul.f32 %v1737, %v1724
      %1741 = vrot.lane.b32.xlu0 %v1739, 127
      %v1742 = vpop.permute.xlu0 %1741
      %v1744 = vadd.f32 %v1731, %v1742
      %s1745 = scalar_lea.vmem %s9, 16
      %v1746 = vld [vmem:[%s1745] sm:$0xff]
      %1748 = vset.pattern.permute.xlu0 0
      %1749 = vperm.xlu0 %1748, %v1746
      %v1750 = vpop.permute.xlu0 %1749
      %v1752 = vmul.f32 %v1750, %v1724
      %1754 = vrot.lane.b32.xlu0 %v1752, 126
      %v1755 = vpop.permute.xlu0 %1754
      %v1757 = vadd.f32 %v1744, %v1755
      %s1758 = scalar_lea.vmem %s9, 24
      %v1759 = vld [vmem:[%s1758] sm:$0xff]
      %v1760 = vld [vmem:[#allocation6] sm:$0xff]
      %v1761 = vld [vmem:[#allocation6 + $0x8] sm:$0xff]
      %1763 = vset.pattern.permute.xlu0 0
      %1764 = vperm.xlu0 %1763, %v1759
      %v1765 = vpop.permute.xlu0 %1764
      %v1767 = vmul.f32 %v1765, %v1760
      %v1768 = vmul.f32 %v1765, %v1761
      %1771 = vrot.lane.b32.xlu0 %v1767, 108
      %v1772 = vpop.permute.xlu0 %1771
      %1773 = vrot.lane.b32.xlu0 %v1768, 108
      %v1774 = vpop.permute.xlu0 %1773
      %vm1775 = vcmask 883712
      %v1776 = vsel %vm1775, %v1772, %v1774
      %v1778 = vadd.f32 %v1757, %v1776
      %s1779 = scalar_lea.vmem %s9, 32
      %v1780 = vld [vmem:[%s1779] sm:$0xff]
      %1782 = vset.pattern.permute.xlu0 0
      %1783 = vperm.xlu0 %1782, %v1780
      %v1784 = vpop.permute.xlu0 %1783
      %v1786 = vmul.f32 %v1784, %v1760
      %v1787 = vmul.f32 %v1784, %v1761
      %1790 = vrot.lane.b32.xlu0 %v1786, 107
      %v1791 = vpop.permute.xlu0 %1790
      %1792 = vrot.lane.b32.xlu0 %v1787, 107
      %v1793 = vpop.permute.xlu0 %1792
      %vm1794 = vcmask 875520
      %v1795 = vsel %vm1794, %v1791, %v1793
      %v1797 = vadd.f32 %v1778, %v1795
      %s1798 = scalar_lea.vmem %s9, 40
      %v1799 = vld [vmem:[%s1798] sm:$0xff]
      %1801 = vset.pattern.permute.xlu0 0
      %1802 = vperm.xlu0 %1801, %v1799
      %v1803 = vpop.permute.xlu0 %1802
      %v1805 = vmul.f32 %v1803, %v1760
      %v1806 = vmul.f32 %v1803, %v1761
      %1809 = vrot.lane.b32.xlu0 %v1805, 106
      %v1810 = vpop.permute.xlu0 %1809
      %1811 = vrot.lane.b32.xlu0 %v1806, 106
      %v1812 = vpop.permute.xlu0 %1811
      %vm1813 = vcmask 867328
      %v1814 = vsel %vm1813, %v1810, %v1812
      %v1816 = vadd.f32 %v1797, %v1814
      %s1817 = scalar_lea.vmem %s9, 48
      %v1818 = vld [vmem:[%s1817] sm:$0xff]
      %1820 = vset.pattern.permute.xlu0 0
      %1821 = vperm.xlu0 %1820, %v1818
      %v1822 = vpop.permute.xlu0 %1821
      %v1824 = vmul.f32 %v1822, %v1760
      %v1825 = vmul.f32 %v1822, %v1761
      %1828 = vrot.lane.b32.xlu0 %v1824, 88
      %v1829 = vpop.permute.xlu0 %1828
      %1830 = vrot.lane.b32.xlu0 %v1825, 88
      %v1831 = vpop.permute.xlu0 %1830
      %v1832 = vsel %vm1014, %v1829, %v1831
      %v1834 = vadd.f32 %v1816, %v1832
      %s1835 = scalar_lea.vmem %s9, 56
      %v1836 = vld [vmem:[%s1835] sm:$0xff]
      %1838 = vset.pattern.permute.xlu0 0
      %1839 = vperm.xlu0 %1838, %v1836
      %v1840 = vpop.permute.xlu0 %1839
      %v1842 = vmul.f32 %v1840, %v1760
      %v1843 = vmul.f32 %v1840, %v1761
      %1846 = vrot.lane.b32.xlu0 %v1842, 87
      %v1847 = vpop.permute.xlu0 %1846
      %1848 = vrot.lane.b32.xlu0 %v1843, 87
      %v1849 = vpop.permute.xlu0 %1848
      %v1850 = vsel %vm1459, %v1847, %v1849
      %v1852 = vadd.f32 %v1834, %v1850
      %s1853 = scalar_lea.vmem %s9, 64
      %v1854 = vld [vmem:[%s1853] sm:$0xff]
      %1856 = vset.pattern.permute.xlu0 0
      %1857 = vperm.xlu0 %1856, %v1854
      %v1858 = vpop.permute.xlu0 %1857
      %v1860 = vmul.f32 %v1858, %v1760
      %v1861 = vmul.f32 %v1858, %v1761
      %1864 = vrot.lane.b32.xlu0 %v1860, 86
      %v1865 = vpop.permute.xlu0 %1864
      %1866 = vrot.lane.b32.xlu0 %v1861, 86
      %v1867 = vpop.permute.xlu0 %1866
      %vm1868 = vcmask 703488
      %v1869 = vsel %vm1868, %v1865, %v1867
      %v1871 = vadd.f32 %v1852, %v1869
      %v1872 = vld [vmem:[%s10] sm:$0xff]
      %1874 = vset.pattern.permute.xlu0 0
      %1875 = vperm.xlu0 %1874, %v1872
      %v1876 = vpop.permute.xlu0 %1875
      %v1878 = vadd.f32 %v1871, %v1876
      %1880 = vrot.lane.b32.xlu0 %v1878, 127
      %v1881 = vpop.permute.xlu0 %1880
      %v1883 = vmax.f32 %v1878, %v1881
      %v1884 = vld [vmem:[%s12] sm:$0xff]
      %v1885 = vld [vmem:[%s12 + $0x8] sm:$0xff]
      %v1886 = vld [vmem:[%s12 + $0x10] sm:$0xff]
      %v1887 = vld [vmem:[%s12 + $0x18] sm:$0xff]
      %v1888 = vld [vmem:[%s12 + $0x20] sm:$0xff]
      %v1889 = vld [vmem:[%s12 + $0x28] sm:$0xff]
      %v1890 = vld [vmem:[%s12 + $0x30] sm:$0xff]
      %v1891 = vld [vmem:[%s12 + $0x38] sm:$0xff]
      %v1892 = vld [vmem:[%s12 + $0x40] sm:$0xff]
      %v1893 = vld [vmem:[%s12 + $0x48] sm:$0xff]
      %v1894 = vld [vmem:[%s12 + $0x50] sm:$0xff]
      %v1895 = vld [vmem:[%s12 + $0x58] sm:$0xff]
      %v1896 = vld [vmem:[%s12 + $0x60] sm:$0xff]
      %v1897 = vld [vmem:[%s12 + $0x68] sm:$0xff]
      %v1898 = vld [vmem:[%s12 + $0x70] sm:$0x7f]
      %1900 = vrot.lane.b32.xlu0 %v1883, 127
      %v1901 = vpop.permute.xlu0 %1900
      %vm1902 = vcmask 973824
      %v1903 = vsel %vm1902, %v1901, 0
      %v1906 = vsel %vm1462, %v1898, 0
      %1908 = vmatpush.msra.mxu0 0.0
      %1909 = vmatpush.msra.mxu0 %v1906
      %1910 = vmatpush.msra.mxu0 %v1897
      %1911 = vmatpush.msra.mxu0 %v1896
      %1912 = vmatpush.msra.mxu0 %v1895
      %1913 = vmatpush.msra.mxu0 %v1894
      %1914 = vmatpush.msra.mxu0 %v1893
      %1915 = vmatpush.msra.mxu0 %v1892
      %1916 = vmatpush.msra.mxu0 %v1891
      %1917 = vmatpush.msra.mxu0 %v1890
      %1918 = vmatpush.msra.mxu0 %v1889
      %1919 = vmatpush.msra.mxu0 %v1888
      %1920 = vmatpush.msra.mxu0 %v1887
      %1921 = vmatpush.msra.mxu0 %v1886
      %1922 = vmatpush.msra.mxu0 %v1885
      %1923 = vmatpush.msra.mxu0 %v1884
      %1924 = vmatmul.f32.gmra.mxu0 %v1903
      %v1925 = vpop.f32.mrf.mxu0
      %v1926 = vadd.f32 0.0, %v1925
      %1927 = vdwg.mxu0
      %vm1928 = vcmask 818176
      %1929 = vst.msk [vmem:[#allocation3] sm:$0xff] %vm1928, %v1926
      %v1930 = vld [vmem:[#allocation3] sm:$0xff]
      %v1931 = vpack.c.bf16 %v1930, %v1930
      %v1932 = vld [vmem:[%s13] sm:$0xf]
      %s1933 = scalar_lea.vmem %s13, 4
      %v1934 = vld [vmem:[%s1933] sm:$0xf]
      %v1936 = vunpack.c.l.b16 %v1931
      %v1937 = vpack.c.b16 %v1936, %v1936
      %1938 = vrot.lane.b32.xlu0 %v1937, 115
      %v1939 = vpop.permute.xlu0 %1938
      %v1941 = vsel %vm1568, %v1934, 0
      %v1944 = vsel %vm1572, %v1939, 0
      %1946 = vmatpush.bf16.msra.mxu0 0
      %1947 = vmatpush.bf16.msra.mxu0 0
      %1948 = vmatpush.bf16.msra.mxu0 0
      %1949 = vmatpush.bf16.msra.mxu0 0
      %1950 = vmatpush.bf16.msra.mxu0 0
      %1951 = vmatpush.bf16.msra.mxu0 0
      %1952 = vmatpush.bf16.msra.mxu0 0
      %1953 = vmatpush.bf16.msra.mxu0 %v1944
      %1954 = vmatmul.bf16.gmra.mxu0 %v1941
      %v1955 = vpop.f32.mrf.mxu0
      %v1956 = vadd.f32 0.0, %v1955
      %v1957 = vpop.f32.mrf.mxu0
      %1958 = vdwg.mxu0
      %1959 = vrot.lane.b32.xlu0 %v1937, 116
      %v1960 = vpop.permute.xlu0 %1959
      %v1962 = vsel %vm1568, %v1932, 0
      %v1965 = vsel %vm1572, %v1960, 0
      %1967 = vmatpush.bf16.msra.mxu0 0
      %1968 = vmatpush.bf16.msra.mxu0 0
      %1969 = vmatpush.bf16.msra.mxu0 0
      %1970 = vmatpush.bf16.msra.mxu0 0
      %1971 = vmatpush.bf16.msra.mxu0 0
      %1972 = vmatpush.bf16.msra.mxu0 0
      %1973 = vmatpush.bf16.msra.mxu0 0
      %1974 = vmatpush.bf16.msra.mxu0 %v1965
      %1975 = vmatmul.bf16.gmra.mxu0 %v1962
      %v1976 = vpop.f32.mrf.mxu0
      %v1977 = vadd.f32 %v1956, %v1976
      %v1978 = vpop.f32.mrf.mxu0
      %1979 = vdwg.mxu0
      %s1980 = scalar_lea.vmem %s13, 8
      %v1981 = vld [vmem:[%s1980] sm:$0xf]
      %1982 = vrot.lane.b32.xlu0 %v1937, 114
      %v1983 = vpop.permute.xlu0 %1982
      %v1985 = vsel %vm1568, %v1981, 0
      %v1988 = vsel %vm1572, %v1983, 0
      %1990 = vmatpush.bf16.msra.mxu0 0
      %1991 = vmatpush.bf16.msra.mxu0 0
      %1992 = vmatpush.bf16.msra.mxu0 0
      %1993 = vmatpush.bf16.msra.mxu0 0
      %1994 = vmatpush.bf16.msra.mxu0 0
      %1995 = vmatpush.bf16.msra.mxu0 0
      %1996 = vmatpush.bf16.msra.mxu0 0
      %1997 = vmatpush.bf16.msra.mxu0 %v1988
      %1998 = vmatmul.bf16.gmra.mxu0 %v1985
      %v1999 = vpop.f32.mrf.mxu0
      %v2000 = vadd.f32 0.0, %v1999
      %v2001 = vpop.f32.mrf.mxu0
      %2002 = vdwg.mxu0
      %v2003 = vadd.f32 %v1977, %v2000
      %s2004 = scalar_lea.vmem %s13, 12
      %v2005 = vld [vmem:[%s2004] sm:$0xf]
      %2006 = vrot.lane.b32.xlu0 %v1937, 113
      %v2007 = vpop.permute.xlu0 %2006
      %v2009 = vsel %vm1568, %v2005, 0
      %v2012 = vsel %vm1572, %v2007, 0
      %2014 = vmatpush.bf16.msra.mxu0 0
      %2015 = vmatpush.bf16.msra.mxu0 0
      %2016 = vmatpush.bf16.msra.mxu0 0
      %2017 = vmatpush.bf16.msra.mxu0 0
      %2018 = vmatpush.bf16.msra.mxu0 0
      %2019 = vmatpush.bf16.msra.mxu0 0
      %2020 = vmatpush.bf16.msra.mxu0 0
      %2021 = vmatpush.bf16.msra.mxu0 %v2012
      %2022 = vmatmul.bf16.gmra.mxu0 %v2009
      %v2023 = vpop.f32.mrf.mxu0
      %v2024 = vadd.f32 0.0, %v2023
      %v2025 = vpop.f32.mrf.mxu0
      %2026 = vdwg.mxu0
      %v2027 = vadd.f32 %v2003, %v2024
      %s2028 = scalar_lea.vmem %s13, 16
      %v2029 = vld [vmem:[%s2028] sm:$0xf]
      %2030 = vrot.lane.b32.xlu0 %v1937, 112
      %v2031 = vpop.permute.xlu0 %2030
      %v2033 = vsel %vm1568, %v2029, 0
      %v2036 = vsel %vm1572, %v2031, 0
      %2038 = vmatpush.bf16.msra.mxu0 0
      %2039 = vmatpush.bf16.msra.mxu0 0
      %2040 = vmatpush.bf16.msra.mxu0 0
      %2041 = vmatpush.bf16.msra.mxu0 0
      %2042 = vmatpush.bf16.msra.mxu0 0
      %2043 = vmatpush.bf16.msra.mxu0 0
      %2044 = vmatpush.bf16.msra.mxu0 0
      %2045 = vmatpush.bf16.msra.mxu0 %v2036
      %2046 = vmatmul.bf16.gmra.mxu0 %v2033
      %v2047 = vpop.f32.mrf.mxu0
      %v2048 = vadd.f32 0.0, %v2047
      %v2049 = vpop.f32.mrf.mxu0
      %2050 = vdwg.mxu0
      %v2051 = vadd.f32 %v2027, %v2048
      %v2052 = vld [vmem:[%s14] sm:$0xff]
      %2054 = vset.pattern.permute.xlu0 0
      %2055 = vperm.xlu0 %2054, %v2052
      %v2056 = vpop.permute.xlu0 %2055
      %v2058 = vadd.f32 %v2051, %v2056
      %v2059 = vmax.f32 %v2058, 0.0
      %v2060 = vld [vmem:[%s17] sm:$0x1]
      %v2062 = vperm.slane %v2060, 0
      %v2064 = vmul.f32 %v2059, %v2062
      %2065 = vst.msk [vmem:[#allocation7] sm:$0xff] %vm1721, 0.0
      %vm2066 = vcmask 818864
      %2067 = vst.msk [vmem:[#allocation7] sm:$0xff] %vm2066, 0.0
      %2069 = vrot.lane.b32.xlu0 %v2064, 14
      %v2070 = vpop.permute.xlu0 %2069
      %vm2072 = vcmask 703600
      %2073 = vst.msk [vmem:[#allocation7] sm:$0xff] %vm2072, %v2070
      %v2074 = vld [vmem:[%s15] sm:$0xff]
      %v2075 = vld [vmem:[#allocation7] sm:$0xff]
      %2077 = vset.pattern.permute.xlu0 0
      %2078 = vperm.xlu0 %2077, %v2074
      %v2079 = vpop.permute.xlu0 %2078
      %v2081 = vmul.f32 %v2079, %v2075
      %v2082 = vadd.f32 %v2081, 0.0
      %s2083 = scalar_lea.vmem %s15, 8
      %v2084 = vld [vmem:[%s2083] sm:$0xff]
      %2086 = vset.pattern.permute.xlu0 0
      %2087 = vperm.xlu0 %2086, %v2084
      %v2088 = vpop.permute.xlu0 %2087
      %v2090 = vmul.f32 %v2088, %v2075
      %2092 = vrot.lane.b32.xlu0 %v2090, 127
      %v2093 = vpop.permute.xlu0 %2092
      %v2095 = vadd.f32 %v2082, %v2093
      %s2096 = scalar_lea.vmem %s15, 16
      %v2097 = vld [vmem:[%s2096] sm:$0xff]
      %2099 = vset.pattern.permute.xlu0 0
      %2100 = vperm.xlu0 %2099, %v2097
      %v2101 = vpop.permute.xlu0 %2100
      %v2103 = vmul.f32 %v2101, %v2075
      %2105 = vrot.lane.b32.xlu0 %v2103, 126
      %v2106 = vpop.permute.xlu0 %2105
      %v2108 = vadd.f32 %v2095, %v2106
      %s2109 = scalar_lea.vmem %s15, 24
      %v2110 = vld [vmem:[%s2109] sm:$0xff]
      %2112 = vset.pattern.permute.xlu0 0
      %2113 = vperm.xlu0 %2112, %v2110
      %v2114 = vpop.permute.xlu0 %2113
      %v2116 = vmul.f32 %v2114, %v2075
      %2118 = vrot.lane.b32.xlu0 %v2116, 116
      %v2119 = vpop.permute.xlu0 %2118
      %v2121 = vadd.f32 %v2108, %v2119
      %s2122 = scalar_lea.vmem %s15, 32
      %v2123 = vld [vmem:[%s2122] sm:$0xff]
      %2125 = vset.pattern.permute.xlu0 0
      %2126 = vperm.xlu0 %2125, %v2123
      %v2127 = vpop.permute.xlu0 %2126
      %v2129 = vmul.f32 %v2127, %v2075
      %2131 = vrot.lane.b32.xlu0 %v2129, 115
      %v2132 = vpop.permute.xlu0 %2131
      %v2134 = vadd.f32 %v2121, %v2132
      %s2135 = scalar_lea.vmem %s15, 40
      %v2136 = vld [vmem:[%s2135] sm:$0xff]
      %2138 = vset.pattern.permute.xlu0 0
      %2139 = vperm.xlu0 %2138, %v2136
      %v2140 = vpop.permute.xlu0 %2139
      %v2142 = vmul.f32 %v2140, %v2075
      %2144 = vrot.lane.b32.xlu0 %v2142, 114
      %v2145 = vpop.permute.xlu0 %2144
      %v2147 = vadd.f32 %v2134, %v2145
      %s2148 = scalar_lea.vmem %s15, 48
      %v2149 = vld [vmem:[%s2148] sm:$0xff]
      %2151 = vset.pattern.permute.xlu0 0
      %2152 = vperm.xlu0 %2151, %v2149
      %v2153 = vpop.permute.xlu0 %2152
      %v2155 = vmul.f32 %v2153, %v2075
      %2157 = vrot.lane.b32.xlu0 %v2155, 104
      %v2158 = vpop.permute.xlu0 %2157
      %v2160 = vadd.f32 %v2147, %v2158
      %s2161 = scalar_lea.vmem %s15, 56
      %v2162 = vld [vmem:[%s2161] sm:$0xff]
      %2164 = vset.pattern.permute.xlu0 0
      %2165 = vperm.xlu0 %2164, %v2162
      %v2166 = vpop.permute.xlu0 %2165
      %v2168 = vmul.f32 %v2166, %v2075
      %2170 = vrot.lane.b32.xlu0 %v2168, 103
      %v2171 = vpop.permute.xlu0 %2170
      %v2173 = vadd.f32 %v2160, %v2171
      %s2174 = scalar_lea.vmem %s15, 64
      %v2175 = vld [vmem:[%s2174] sm:$0xff]
      %2177 = vset.pattern.permute.xlu0 0
      %2178 = vperm.xlu0 %2177, %v2175
      %v2179 = vpop.permute.xlu0 %2178
      %v2181 = vmul.f32 %v2179, %v2075
      %2183 = vrot.lane.b32.xlu0 %v2181, 102
      %v2184 = vpop.permute.xlu0 %2183
      %v2186 = vadd.f32 %v2173, %v2184
      %v2187 = vld [vmem:[%s16] sm:$0xff]
      %2189 = vset.pattern.permute.xlu0 0
      %2190 = vperm.xlu0 %2189, %v2187
      %v2191 = vpop.permute.xlu0 %2190
      %v2193 = vadd.f32 %v2186, %v2191
      %2195 = vrot.lane.b32.xlu0 %v2193, 127
      %v2196 = vpop.permute.xlu0 %2195
      %v2198 = vmax.f32 %v2193, %v2196
      %v2199 = vld [vmem:[%s18] sm:$0xff]
      %v2200 = vld [vmem:[%s18 + $0x8] sm:$0xff]
      %v2201 = vld [vmem:[%s18 + $0x10] sm:$0xff]
      %v2202 = vld [vmem:[%s18 + $0x18] sm:$0xff]
      %v2203 = vld [vmem:[%s18 + $0x20] sm:$0xff]
      %v2204 = vld [vmem:[%s18 + $0x28] sm:$0xff]
      %v2205 = vld [vmem:[%s18 + $0x30] sm:$0xff]
      %v2206 = vld [vmem:[%s18 + $0x38] sm:$0xff]
      %v2207 = vld [vmem:[%s18 + $0x40] sm:$0x7f]
      %2209 = vrot.lane.b32.xlu0 %v2198, 127
      %v2210 = vpop.permute.xlu0 %2209
      %vm2211 = vcmask 580608
      %v2212 = vsel %vm2211, %v2210, 0
      %v2215 = vsel %vm1462, %v2207, 0
      %2217 = vmatpush.msra.mxu0 0.0
      %2218 = vmatpush.msra.mxu0 0.0
      %2219 = vmatpush.msra.mxu0 0.0
      %2220 = vmatpush.msra.mxu0 0.0
      %2221 = vmatpush.msra.mxu0 0.0
      %2222 = vmatpush.msra.mxu0 0.0
      %2223 = vmatpush.msra.mxu0 0.0
      %2224 = vmatpush.msra.mxu0 %v2215
      %2225 = vmatpush.msra.mxu0 %v2206
      %2226 = vmatpush.msra.mxu0 %v2205
      %2227 = vmatpush.msra.mxu0 %v2204
      %2228 = vmatpush.msra.mxu0 %v2203
      %2229 = vmatpush.msra.mxu0 %v2202
      %2230 = vmatpush.msra.mxu0 %v2201
      %2231 = vmatpush.msra.mxu0 %v2200
      %2232 = vmatpush.msra.mxu0 %v2199
      %2233 = vmatmul.f32.gmra.mxu0 %v2212
      %v2234 = vpop.f32.mrf.mxu0
      %v2235 = vadd.f32 0.0, %v2234
      %2236 = vdwg.mxu0
      %vm2237 = vcmask 556032
      %2238 = vst.msk [vmem:[#allocation4] sm:$0xff] %vm2237, %v2235
      %v2239 = vld [vmem:[#allocation4] sm:$0xff]
      %v2240 = vpack.c.bf16 %v2239, %v2239
      %v2241 = vld [vmem:[%s19] sm:$0xf]
      %v2242 = vld [vmem:[%s19 + $0x4] sm:$0xf]
      %s2243 = scalar_lea.vmem %s19, 8
      %v2244 = vld [vmem:[%s2243] sm:$0xf]
      %v2245 = vld [vmem:[%s2243 + $0x4] sm:$0xf]
      %v2248 = vunpack.c.l.b16 %v2244
      %v2249 = vunpack.c.l.b16 %v2245
      %v2250 = vpack.c.b16 %v2249, %v2248
      %v2252 = vunpack.c.l.b16 %v2240
      %v2253 = vpack.c.b16 %v2252, %v2252
      %2254 = vrot.lane.b32.xlu0 %v2253, 119
      %v2255 = vpop.permute.xlu0 %2254
      %v2257 = vsel %vm1568, %v2250, 0
      %v2260 = vsel %vm1572, %v2255, 0
      %2262 = vmatpush.bf16.msra.mxu0 0
      %2263 = vmatpush.bf16.msra.mxu0 0
      %2264 = vmatpush.bf16.msra.mxu0 0
      %2265 = vmatpush.bf16.msra.mxu0 0
      %2266 = vmatpush.bf16.msra.mxu0 0
      %2267 = vmatpush.bf16.msra.mxu0 0
      %2268 = vmatpush.bf16.msra.mxu0 0
      %2269 = vmatpush.bf16.msra.mxu0 %v2260
      %2270 = vmatmul.bf16.gmra.mxu0 %v2257
      %v2271 = vpop.f32.mrf.mxu0
      %v2272 = vadd.f32 0.0, %v2271
      %v2273 = vpop.f32.mrf.mxu0
      %v2274 = vadd.f32 0.0, %v2273
      %2275 = vdwg.mxu0
      %v2278 = vunpack.c.l.b16 %v2241
      %v2279 = vunpack.c.l.b16 %v2242
      %v2280 = vpack.c.b16 %v2279, %v2278
      %2281 = vrot.lane.b32.xlu0 %v2253, 120
      %v2282 = vpop.permute.xlu0 %2281
      %v2284 = vsel %vm1568, %v2280, 0
      %v2287 = vsel %vm1572, %v2282, 0
      %2289 = vmatpush.bf16.msra.mxu0 0
      %2290 = vmatpush.bf16.msra.mxu0 0
      %2291 = vmatpush.bf16.msra.mxu0 0
      %2292 = vmatpush.bf16.msra.mxu0 0
      %2293 = vmatpush.bf16.msra.mxu0 0
      %2294 = vmatpush.bf16.msra.mxu0 0
      %2295 = vmatpush.bf16.msra.mxu0 0
      %2296 = vmatpush.bf16.msra.mxu0 %v2287
      %2297 = vmatmul.bf16.gmra.mxu0 %v2284
      %v2298 = vpop.f32.mrf.mxu0
      %v2299 = vadd.f32 %v2272, %v2298
      %v2300 = vpop.f32.mrf.mxu0
      %v2301 = vadd.f32 %v2274, %v2300
      %2302 = vdwg.mxu0
      %s2303 = scalar_lea.vmem %s19, 16
      %v2304 = vld [vmem:[%s2303] sm:$0xf]
      %v2305 = vld [vmem:[%s2303 + $0x4] sm:$0xf]
      %v2308 = vunpack.c.l.b16 %v2304
      %v2309 = vunpack.c.l.b16 %v2305
      %v2310 = vpack.c.b16 %v2309, %v2308
      %2311 = vrot.lane.b32.xlu0 %v2253, 118
      %v2312 = vpop.permute.xlu0 %2311
      %v2314 = vsel %vm1568, %v2310, 0
      %v2317 = vsel %vm1572, %v2312, 0
      %2319 = vmatpush.bf16.msra.mxu0 0
      %2320 = vmatpush.bf16.msra.mxu0 0
      %2321 = vmatpush.bf16.msra.mxu0 0
      %2322 = vmatpush.bf16.msra.mxu0 0
      %2323 = vmatpush.bf16.msra.mxu0 0
      %2324 = vmatpush.bf16.msra.mxu0 0
      %2325 = vmatpush.bf16.msra.mxu0 0
      %2326 = vmatpush.bf16.msra.mxu0 %v2317
      %2327 = vmatmul.bf16.gmra.mxu0 %v2314
      %v2328 = vpop.f32.mrf.mxu0
      %v2329 = vadd.f32 0.0, %v2328
      %v2330 = vpop.f32.mrf.mxu0
      %v2331 = vadd.f32 0.0, %v2330
      %2332 = vdwg.mxu0
      %v2333 = vadd.f32 %v2299, %v2329
      %v2334 = vadd.f32 %v2301, %v2331
      %s2335 = scalar_lea.vmem %s19, 24
      %v2336 = vld [vmem:[%s2335] sm:$0xf]
      %v2337 = vld [vmem:[%s2335 + $0x4] sm:$0xf]
      %v2340 = vunpack.c.l.b16 %v2336
      %v2341 = vunpack.c.l.b16 %v2337
      %v2342 = vpack.c.b16 %v2341, %v2340
      %2343 = vrot.lane.b32.xlu0 %v2253, 117
      %v2344 = vpop.permute.xlu0 %2343
      %v2346 = vsel %vm1568, %v2342, 0
      %v2349 = vsel %vm1572, %v2344, 0
      %2351 = vmatpush.bf16.msra.mxu0 0
      %2352 = vmatpush.bf16.msra.mxu0 0
      %2353 = vmatpush.bf16.msra.mxu0 0
      %2354 = vmatpush.bf16.msra.mxu0 0
      %2355 = vmatpush.bf16.msra.mxu0 0
      %2356 = vmatpush.bf16.msra.mxu0 0
      %2357 = vmatpush.bf16.msra.mxu0 0
      %2358 = vmatpush.bf16.msra.mxu0 %v2349
      %2359 = vmatmul.bf16.gmra.mxu0 %v2346
      %v2360 = vpop.f32.mrf.mxu0
      %v2361 = vadd.f32 0.0, %v2360
      %v2362 = vpop.f32.mrf.mxu0
      %v2363 = vadd.f32 0.0, %v2362
      %2364 = vdwg.mxu0
      %v2365 = vadd.f32 %v2333, %v2361
      %v2366 = vadd.f32 %v2334, %v2363
      %s2367 = scalar_lea.vmem %s19, 32
      %v2368 = vld [vmem:[%s2367] sm:$0xf]
      %v2369 = vld [vmem:[%s2367 + $0x4] sm:$0xf]
      %v2372 = vunpack.c.l.b16 %v2368
      %v2373 = vunpack.c.l.b16 %v2369
      %v2374 = vpack.c.b16 %v2373, %v2372
      %2375 = vrot.lane.b32.xlu0 %v2253, 116
      %v2376 = vpop.permute.xlu0 %2375
      %v2378 = vsel %vm1568, %v2374, 0
      %v2381 = vsel %vm1572, %v2376, 0
      %2383 = vmatpush.bf16.msra.mxu0 0
      %2384 = vmatpush.bf16.msra.mxu0 0
      %2385 = vmatpush.bf16.msra.mxu0 0
      %2386 = vmatpush.bf16.msra.mxu0 0
      %2387 = vmatpush.bf16.msra.mxu0 0
      %2388 = vmatpush.bf16.msra.mxu0 0
      %2389 = vmatpush.bf16.msra.mxu0 0
      %2390 = vmatpush.bf16.msra.mxu0 %v2381
      %2391 = vmatmul.bf16.gmra.mxu0 %v2378
      %v2392 = vpop.f32.mrf.mxu0
      %v2393 = vadd.f32 0.0, %v2392
      %v2394 = vpop.f32.mrf.mxu0
      %v2395 = vadd.f32 0.0, %v2394
      %2396 = vdwg.mxu0
      %v2397 = vadd.f32 %v2365, %v2393
      %v2398 = vadd.f32 %v2366, %v2395
      %v2399 = vld [vmem:[%s20] sm:$0xff]
      %v2400 = vld [vmem:[%s20 + $0x8] sm:$0xff]
      %2402 = vset.pattern.permute.xlu0 0
      %2403 = vperm.xlu0 %2402, %v2399
      %v2404 = vpop.permute.xlu0 %2403
      %2407 = vset.pattern.permute.xlu0 0
      %2408 = vperm.xlu0 %2407, %v2400
      %v2409 = vpop.permute.xlu0 %2408
      %v2411 = vadd.f32 %v2397, %v2404
      %v2412 = vadd.f32 %v2398, %v2409
      %v2413 = vmax.f32 %v2411, 0.0
      %v2414 = vmax.f32 %v2412, 0.0
      %v2415 = vld [vmem:[%s23] sm:$0x1]
      %v2417 = vperm.slane %v2415, 0
      %v2419 = vmul.f32 %v2413, %v2417
      %v2420 = vmul.f32 %v2414, %v2417
      %vm2421 = vcmask 80896
      %2422 = vst.msk [vmem:[#allocation8] sm:$0xff] %vm2421, 0.0
      %2423 = vst.msk [vmem:[#allocation8 + $0x8] sm:$0xff] %vm2421, 0.0
      %vm2424 = vcmask 556496
      %2425 = vst.msk [vmem:[#allocation8] sm:$0xff] %vm2424, 0.0
      %2426 = vst.msk [vmem:[#allocation8 + $0x8] sm:$0xff] %vm2424, 0.0
      %2429 = vrot.lane.b32.xlu0 %v2419, 10
      %v2430 = vpop.permute.xlu0 %2429
      %2431 = vrot.lane.b32.xlu0 %v2420, 10
      %v2432 = vpop.permute.xlu0 %2431
      %vm2435 = vcmask 474192
      %2436 = vst.msk [vmem:[#allocation8] sm:$0xff] %vm2435, %v2430
      %2437 = vst.msk [vmem:[#allocation8 + $0x8] sm:$0xff] %vm2435, %v2432
      %v2438 = vld [vmem:[%s21] sm:$0xff]
      %v2439 = vld [vmem:[%s21 + $0x8] sm:$0xff]
      %v2440 = vld [vmem:[#allocation8] sm:$0xff]
      %v2441 = vld [vmem:[#allocation8 + $0x8] sm:$0xff]
      %2443 = vset.pattern.permute.xlu0 0
      %2444 = vperm.xlu0 %2443, %v2438
      %v2445 = vpop.permute.xlu0 %2444
      %2448 = vset.pattern.permute.xlu0 0
      %2449 = vperm.xlu0 %2448, %v2439
      %v2450 = vpop.permute.xlu0 %2449
      %v2452 = vmul.f32 %v2445, %v2440
      %v2453 = vmul.f32 %v2450, %v2441
      %v2454 = vadd.f32 %v2452, 0.0
      %v2455 = vadd.f32 %v2453, 0.0
      %s2456 = scalar_lea.vmem %s21, 16
      %v2457 = vld [vmem:[%s2456] sm:$0xff]
      %v2458 = vld [vmem:[%s2456 + $0x8] sm:$0xff]
      %2460 = vset.pattern.permute.xlu0 0
      %2461 = vperm.xlu0 %2460, %v2457
      %v2462 = vpop.permute.xlu0 %2461
      %2465 = vset.pattern.permute.xlu0 0
      %2466 = vperm.xlu0 %2465, %v2458
      %v2467 = vpop.permute.xlu0 %2466
      %v2469 = vmul.f32 %v2462, %v2440
      %v2470 = vmul.f32 %v2467, %v2441
      %2473 = vrot.lane.b32.xlu0 %v2469, 127
      %v2474 = vpop.permute.xlu0 %2473
      %2475 = vrot.lane.b32.xlu0 %v2470, 127
      %v2476 = vpop.permute.xlu0 %2475
      %v2479 = vadd.f32 %v2454, %v2474
      %v2480 = vadd.f32 %v2455, %v2476
      %s2481 = scalar_lea.vmem %s21, 32
      %v2482 = vld [vmem:[%s2481] sm:$0xff]
      %v2483 = vld [vmem:[%s2481 + $0x8] sm:$0xff]
      %2485 = vset.pattern.permute.xlu0 0
      %2486 = vperm.xlu0 %2485, %v2482
      %v2487 = vpop.permute.xlu0 %2486
      %2490 = vset.pattern.permute.xlu0 0
      %2491 = vperm.xlu0 %2490, %v2483
      %v2492 = vpop.permute.xlu0 %2491
      %v2494 = vmul.f32 %v2487, %v2440
      %v2495 = vmul.f32 %v2492, %v2441
      %2498 = vrot.lane.b32.xlu0 %v2494, 126
      %v2499 = vpop.permute.xlu0 %2498
      %2500 = vrot.lane.b32.xlu0 %v2495, 126
      %v2501 = vpop.permute.xlu0 %2500
      %v2504 = vadd.f32 %v2479, %v2499
      %v2505 = vadd.f32 %v2480, %v2501
      %s2506 = scalar_lea.vmem %s21, 48
      %v2507 = vld [vmem:[%s2506] sm:$0xff]
      %v2508 = vld [vmem:[%s2506 + $0x8] sm:$0xff]
      %2510 = vset.pattern.permute.xlu0 0
      %2511 = vperm.xlu0 %2510, %v2507
      %v2512 = vpop.permute.xlu0 %2511
      %2515 = vset.pattern.permute.xlu0 0
      %2516 = vperm.xlu0 %2515, %v2508
      %v2517 = vpop.permute.xlu0 %2516
      %v2519 = vmul.f32 %v2512, %v2440
      %v2520 = vmul.f32 %v2517, %v2441
      %2523 = vrot.lane.b32.xlu0 %v2519, 120
      %v2524 = vpop.permute.xlu0 %2523
      %2525 = vrot.lane.b32.xlu0 %v2520, 120
      %v2526 = vpop.permute.xlu0 %2525
      %v2529 = vadd.f32 %v2504, %v2524
      %v2530 = vadd.f32 %v2505, %v2526
      %s2531 = scalar_lea.vmem %s21, 64
      %v2532 = vld [vmem:[%s2531] sm:$0xff]
      %v2533 = vld [vmem:[%s2531 + $0x8] sm:$0xff]
      %2535 = vset.pattern.permute.xlu0 0
      %2536 = vperm.xlu0 %2535, %v2532
      %v2537 = vpop.permute.xlu0 %2536
      %2540 = vset.pattern.permute.xlu0 0
      %2541 = vperm.xlu0 %2540, %v2533
      %v2542 = vpop.permute.xlu0 %2541
      %v2544 = vmul.f32 %v2537, %v2440
      %v2545 = vmul.f32 %v2542, %v2441
      %2548 = vrot.lane.b32.xlu0 %v2544, 119
      %v2549 = vpop.permute.xlu0 %2548
      %2550 = vrot.lane.b32.xlu0 %v2545, 119
      %v2551 = vpop.permute.xlu0 %2550
      %v2554 = vadd.f32 %v2529, %v2549
      %v2555 = vadd.f32 %v2530, %v2551
      %s2556 = scalar_lea.vmem %s21, 80
      %v2557 = vld [vmem:[%s2556] sm:$0xff]
      %v2558 = vld [vmem:[%s2556 + $0x8] sm:$0xff]
      %2560 = vset.pattern.permute.xlu0 0
      %2561 = vperm.xlu0 %2560, %v2557
      %v2562 = vpop.permute.xlu0 %2561
      %2565 = vset.pattern.permute.xlu0 0
      %2566 = vperm.xlu0 %2565, %v2558
      %v2567 = vpop.permute.xlu0 %2566
      %v2569 = vmul.f32 %v2562, %v2440
      %v2570 = vmul.f32 %v2567, %v2441
      %2573 = vrot.lane.b32.xlu0 %v2569, 118
      %v2574 = vpop.permute.xlu0 %2573
      %2575 = vrot.lane.b32.xlu0 %v2570, 118
      %v2576 = vpop.permute.xlu0 %2575
      %v2579 = vadd.f32 %v2554, %v2574
      %v2580 = vadd.f32 %v2555, %v2576
      %s2581 = scalar_lea.vmem %s21, 96
      %v2582 = vld [vmem:[%s2581] sm:$0xff]
      %v2583 = vld [vmem:[%s2581 + $0x8] sm:$0xff]
      %2585 = vset.pattern.permute.xlu0 0
      %2586 = vperm.xlu0 %2585, %v2582
      %v2587 = vpop.permute.xlu0 %2586
      %2590 = vset.pattern.permute.xlu0 0
      %2591 = vperm.xlu0 %2590, %v2583
      %v2592 = vpop.permute.xlu0 %2591
      %v2594 = vmul.f32 %v2587, %v2440
      %v2595 = vmul.f32 %v2592, %v2441
      %2598 = vrot.lane.b32.xlu0 %v2594, 112
      %v2599 = vpop.permute.xlu0 %2598
      %2600 = vrot.lane.b32.xlu0 %v2595, 112
      %v2601 = vpop.permute.xlu0 %2600
      %v2604 = vadd.f32 %v2579, %v2599
      %v2605 = vadd.f32 %v2580, %v2601
      %s2606 = scalar_lea.vmem %s21, 112
      %v2607 = vld [vmem:[%s2606] sm:$0xff]
      %v2608 = vld [vmem:[%s2606 + $0x8] sm:$0xff]
      %2610 = vset.pattern.permute.xlu0 0
      %2611 = vperm.xlu0 %2610, %v2607
      %v2612 = vpop.permute.xlu0 %2611
      %2615 = vset.pattern.permute.xlu0 0
      %2616 = vperm.xlu0 %2615, %v2608
      %v2617 = vpop.permute.xlu0 %2616
      %v2619 = vmul.f32 %v2612, %v2440
      %v2620 = vmul.f32 %v2617, %v2441
      %2623 = vrot.lane.b32.xlu0 %v2619, 111
      %v2624 = vpop.permute.xlu0 %2623
      %2625 = vrot.lane.b32.xlu0 %v2620, 111
      %v2626 = vpop.permute.xlu0 %2625
      %v2629 = vadd.f32 %v2604, %v2624
      %v2630 = vadd.f32 %v2605, %v2626
      %s2631 = scalar_lea.vmem %s21, 128
      %v2632 = vld [vmem:[%s2631] sm:$0xff]
      %v2633 = vld [vmem:[%s2631 + $0x8] sm:$0xff]
      %2635 = vset.pattern.permute.xlu0 0
      %2636 = vperm.xlu0 %2635, %v2632
      %v2637 = vpop.permute.xlu0 %2636
      %2640 = vset.pattern.permute.xlu0 0
      %2641 = vperm.xlu0 %2640, %v2633
      %v2642 = vpop.permute.xlu0 %2641
      %v2644 = vmul.f32 %v2637, %v2440
      %v2645 = vmul.f32 %v2642, %v2441
      %2648 = vrot.lane.b32.xlu0 %v2644, 110
      %v2649 = vpop.permute.xlu0 %2648
      %2650 = vrot.lane.b32.xlu0 %v2645, 110
      %v2651 = vpop.permute.xlu0 %2650
      %v2654 = vadd.f32 %v2629, %v2649
      %v2655 = vadd.f32 %v2630, %v2651
      %v2656 = vld [vmem:[%s22] sm:$0xff]
      %v2657 = vld [vmem:[%s22 + $0x8] sm:$0xff]
      %2659 = vset.pattern.permute.xlu0 0
      %2660 = vperm.xlu0 %2659, %v2656
      %v2661 = vpop.permute.xlu0 %2660
      %2664 = vset.pattern.permute.xlu0 0
      %2665 = vperm.xlu0 %2664, %v2657
      %v2666 = vpop.permute.xlu0 %2665
      %v2668 = vadd.f32 %v2654, %v2661
      %v2669 = vadd.f32 %v2655, %v2666
      %2672 = vrot.lane.b32.xlu0 %v2668, 127
      %v2673 = vpop.permute.xlu0 %2672
      %2674 = vrot.lane.b32.xlu0 %v2669, 127
      %v2675 = vpop.permute.xlu0 %2674
      %v2678 = vmax.f32 %v2668, %v2673
      %v2679 = vmax.f32 %v2669, %v2675
      %v2680 = vld [vmem:[%s24] sm:$0xff]
      %v2681 = vld [vmem:[%s24 + $0x8] sm:$0xff]
      %v2682 = vld [vmem:[%s24 + $0x10] sm:$0xff]
      %v2683 = vld [vmem:[%s24 + $0x18] sm:$0xff]
      %v2684 = vld [vmem:[%s24 + $0x20] sm:$0xff]
      %v2685 = vld [vmem:[%s24 + $0x28] sm:$0x7f]
      %2688 = vrot.lane.b32.xlu0 %v2678, 127
      %v2689 = vpop.permute.xlu0 %2688
      %2690 = vrot.lane.b32.xlu0 %v2679, 127
      %v2691 = vpop.permute.xlu0 %2690
      %vm2692 = vcmask 384000
      %v2693 = vsel %vm2692, %v2689, 0
      %v2695 = vsel %vm2692, %v2691, 0
      %v2698 = vsel %vm1462, %v2685, 0
      %2700 = vmatpush.msra.mxu0 0.0
      %2701 = vmatpush.msra.mxu0 0.0
      %2702 = vmatpush.msra.mxu0 0.0
      %2703 = vmatpush.msra.mxu0 0.0
      %2704 = vmatpush.msra.mxu0 0.0
      %2705 = vmatpush.msra.mxu0 0.0
      %2706 = vmatpush.msra.mxu0 0.0
      %2707 = vmatpush.msra.mxu0 0.0
      %2708 = vmatpush.msra.mxu0 0.0
      %2709 = vmatpush.msra.mxu0 0.0
      %2710 = vmatpush.msra.mxu0 %v2698
      %2711 = vmatpush.msra.mxu0 %v2684
      %2712 = vmatpush.msra.mxu0 %v2683
      %2713 = vmatpush.msra.mxu0 %v2682
      %2714 = vmatpush.msra.mxu0 %v2681
      %2715 = vmatpush.msra.mxu0 %v2680
      %2716 = vmatmul.f32.gmra.mxu0 %v2693
      %v2717 = vpop.f32.mrf.mxu0
      %v2718 = vadd.f32 0.0, %v2717
      %2719 = vmatmul.f32.gmra.mxu0 %v2695
      %v2720 = vpop.f32.mrf.mxu0
      %v2721 = vadd.f32 0.0, %v2720
      %2722 = vdwg.mxu0
      %v2723 = vld [vmem:[%s25] sm:$0xf]
      %v2724 = vld [vmem:[%s26] sm:$0xf]
      %vm2725 = vcmask 130048
      %v2727 = vsel %vm2725, %v2723, 0
      %2729 = vmatpush.msra.mxu0 0.0
      %2730 = vmatpush.msra.mxu0 0.0
      %2731 = vmatpush.msra.mxu0 0.0
      %2732 = vmatpush.msra.mxu0 0.0
      %2733 = vmatpush.msra.mxu0 0.0
      %2734 = vmatpush.msra.mxu0 0.0
      %2735 = vmatpush.msra.mxu0 0.0
      %2736 = vmatpush.msra.mxu0 0.0
      %2737 = vmatpush.msra.mxu0 0.0
      %2738 = vmatpush.msra.mxu0 0.0
      %2739 = vmatpush.msra.mxu0 0.0
      %2740 = vmatpush.msra.mxu0 0.0
      %2741 = vmatpush.msra.mxu0 0.0
      %2742 = vmatpush.msra.mxu0 0.0
      %2743 = vmatpush.msra.mxu0 %v2721
      %2744 = vmatpush.msra.mxu0 %v2718
      %2745 = vmatmul.f32.gmra.mxu0 %v2727
      %v2746 = vpop.f32.mrf.mxu0
      %v2747 = vadd.f32 %v2724, %v2746
      %2748 = vdwg.mxu0
      %vm2749 = vcmask 3072
      %2750 = vst.msk [vmem:[%s813] sm:$0xf] %vm2749, %v2747
      %p2751 = scmp.lt.s32.totalorder %s38, 1
      %s2752 = scalar_select %p2751, %s38, 1
      %s2753 = smul.addr %s2752, 4
      %s2754 = scalar_lea.vmem %s27, %s2753
      // Predicated region
      $region129: #{tpu_custom_call.1} parent=127 // pred_check
        %p2755 = pneg %p628
      $region130: #{tpu_custom_call.1} parent=127 // pred_check_branch
        %2757 = sbr.rel (%p2755) target = $region132
      $region131: #{tpu_custom_call.1} parent=127 // pred_region
        _
      $region132: #{tpu_custom_call.1} parent=127 // pred_fallthru
        _
    $region128: #{tpu_custom_call.1} parent=5 // pred_fallthru
      _
    %p2758 = scmp.le.s32.totalorder 2, %s33
    // Predicated region
    $region133: #{tpu_custom_call.1} parent=5 // pred_check
      %p2759 = pneg %p2758
    $region134: #{tpu_custom_call.1} parent=5 // pred_check_branch
      %2761 = sbr.rel (%p2759) target = $region136
    $region135: #{tpu_custom_call.1} parent=5 // pred_region
      %s2762 = ssub.s32 %s33, 2
      // Predicated region
      $region137: #{tpu_custom_call.1} parent=135 // pred_check
        %p2763 = pneg %p634
      $region138: #{tpu_custom_call.1} parent=135 // pred_check_branch
        %2765 = sbr.rel (%p2763) target = $region140
      $region139: #{tpu_custom_call.1} parent=135 // pred_region
        %p2766 = scmp.lt.s32.totalorder %s39, 1
        %s2767 = scalar_select %p2766, %s39, 1
        %s2768 = smul.addr %s2767, 4
        %s2769 = scalar_lea.vmem %s27, %s2768
      $region140: #{tpu_custom_call.1} parent=135 // pred_fallthru
        _
    $region136: #{tpu_custom_call.1} parent=5 // pred_fallthru
      _
  $region6: #{tpu_custom_call.1} parent=0 // loop_footer
    %s37 = sadd.s32 1, %s33
  $region7: #{tpu_custom_call.1} parent=0 // loop_footer_branch
    %32 = sbr.rel target = $region3
  $region8: #{tpu_custom_call.1} parent=0 // loop_exit
    _

</llo_original>
